<compile_context>
chip_gen: v7x
topology: tpu7x:2x2x1
jax: 0.10.0
libtpu: 0.0.40
codegen_flags: <defaults>
</compile_context>

<pallas_src>
import functools

import jax
import jax.numpy as jnp
from jax.experimental import pallas as pl
from jax.experimental.pallas import tpu as pltpu


def _embeddings_kernel(iid_ref, tid_ref, pid_ref, seed_ref,   # scalar prefetch (SMEM)
                       *refs,
                       tok_tile, hidden, eps, dropout_p):
    """Fused (gathered-row sum) + LayerNorm + dropout for one token tile."""
    K = tok_tile
    word_rows = refs[0:K]            # K x (1, 1, H) gathered word-embedding rows
    pos_rows = refs[K:2 * K]         # K x (1, 1, H) gathered position rows
    type_rows = refs[2 * K:3 * K]    # K x (1, 1, H) gathered token-type rows
    gamma_ref = refs[3 * K]          # (1, H)
    beta_ref = refs[3 * K + 1]       # (1, H)
    out_ref = refs[3 * K + 2]        # (1, K, H)

    # embeddings = word + token_type + position for each token -> (K, H)
    x = jnp.concatenate(
        [word_rows[j][0] + pos_rows[j][0] + type_rows[j][0] for j in range(K)],
        axis=0)

    # LayerNorm over hidden dim (biased variance, eps inside rsqrt, affine).
    mean = jnp.mean(x, axis=-1, keepdims=True)
    xc = x - mean
    var = jnp.mean(xc * xc, axis=-1, keepdims=True)
    y = xc * jax.lax.rsqrt(var + eps)
    y = y * gamma_ref[...] + beta_ref[...]

    if dropout_p > 0.0:
        # Stateless counter-based hash -> Bernoulli keep mask.  Integer-only
        # math on the VPU; keep-test directly on the bits (no float convert).
        b = pl.program_id(0)
        t = pl.program_id(1)
        base = (b * pl.num_programs(1) + t) * K
        row = jax.lax.broadcasted_iota(jnp.int32, (K, hidden), 0)
        col = jax.lax.broadcasted_iota(jnp.int32, (K, hidden), 1)
        h = (base + row) * hidden + col + seed_ref[0] * jnp.int32(668265295)
        h = (h ^ (h >> 15)) * jnp.int32(374761393)
        h = (h ^ (h >> 13)) * jnp.int32(668265295)
        h = h ^ (h >> 16)
        r = h & jnp.int32(0x7FFFFFFF)                       # uniform in [0, 2^31)
        threshold = min(int(dropout_p * 2147483648.0 + 0.5), 2147483647)
        keep = r >= jnp.int32(threshold)
        y = jnp.where(keep, y * jnp.float32(1.0 / (1.0 - dropout_p)),
                      jnp.float32(0.0))

    out_ref[0] = y.astype(out_ref.dtype)


def long_bert_embeddings(input_ids, token_type_ids, position_ids,
                         word_table, position_table, token_type_table,
                         ln_weight, ln_bias, *,
                         dropout_p=0.1, eps=1e-12, seed=0, tok_tile=8):
    """input_ids/token_type_ids/position_ids: (B, S) int. Tables: (rows, H)."""
    B, S = input_ids.shape
    H = word_table.shape[1]
    K = int(tok_tile)
    assert S % K == 0, "seq_len must be a multiple of tok_tile"

    if token_type_ids is None:          # torch branch: token_type_embeddings = 0
        token_type_ids = jnp.zeros_like(input_ids)
        token_type_table = jnp.zeros((1, H), word_table.dtype)

    # Tables reshaped to (rows, 1, H) so each gathered (1, 1, H) window has its
    # last two block dims equal to the full array dims (TPU-tiling friendly).
    word3 = word_table.reshape(word_table.shape[0], 1, H)
    pos3 = position_table.reshape(position_table.shape[0], 1, H)
    type3 = token_type_table.reshape(token_type_table.shape[0], 1, H)
    gamma = jnp.asarray(ln_weight, jnp.float32).reshape(1, H)
    beta = jnp.asarray(ln_bias, jnp.float32).reshape(1, H)

    iid = input_ids.astype(jnp.int32)
    tid = token_type_ids.astype(jnp.int32)
    pid = position_ids.astype(jnp.int32)
    seed_arr = jnp.asarray([seed], jnp.int32)

    def row_spec(which, j):
        # which: 0 -> input_ids, 1 -> token_type_ids, 2 -> position_ids
        def index_map(b, t, iid_ref, tid_ref, pid_ref, seed_ref):
            ids = (iid_ref, tid_ref, pid_ref)[which]
            return (ids[b, t * K + j], 0, 0)
        return pl.BlockSpec((1, 1, H), index_map)

    in_specs = ([row_spec(0, j) for j in range(K)]       # word rows
                + [row_spec(2, j) for j in range(K)]     # position rows
                + [row_spec(1, j) for j in range(K)]     # token-type rows
                + [pl.BlockSpec((1, H), lambda b, t, *_: (0, 0)),   # gamma
                   pl.BlockSpec((1, H), lambda b, t, *_: (0, 0))])  # beta

    kernel = functools.partial(_embeddings_kernel, tok_tile=K, hidden=H,
                               eps=float(eps), dropout_p=float(dropout_p))

    return pl.pallas_call(
        kernel,
        out_shape=jax.ShapeDtypeStruct((B, S, H), jnp.float32),
        grid_spec=pltpu.PrefetchScalarGridSpec(
            num_scalar_prefetch=4,
            grid=(B, S // K),
            in_specs=in_specs,
            out_specs=pl.BlockSpec((1, K, H), lambda b, t, *_: (b, t, 0)),
        ),
        compiler_params=pltpu.CompilerParams(
            dimension_semantics=("parallel", "parallel")),
    )(iid, tid, pid, seed_arr,
      *([word3] * K), *([pos3] * K), *([type3] * K), gamma, beta)


def _reference(iid, tid, pid, word_table, position_table, token_type_table,
               ln_weight, ln_bias, eps=1e-12):
    """Pure-JAX reference (dropout disabled)."""
    x = word_table[iid] + token_type_table[tid] + position_table[pid]
    mean = jnp.mean(x, axis=-1, keepdims=True)
    var = jnp.mean((x - mean) ** 2, axis=-1, keepdims=True)
    return (x - mean) * jax.lax.rsqrt(var + eps) * ln_weight + ln_bias


if __name__ == "__main__":
    B, S, H = 2, 16, 32
    vocab, max_pos = 64, 32
    dropout_p = 0.1

    root = jax.random.PRNGKey(0)
    kw, kp, kt, kg, kb, ki, ks = jax.random.split(root, 7)

    word_table = 0.02 * jax.random.normal(kw, (vocab, H), jnp.float32)
    position_table = 0.02 * jax.random.normal(kp, (max_pos, H), jnp.float32)
    token_type_table = 0.02 * jax.random.normal(kt, (2, H), jnp.float32)
    ln_weight = 1.0 + 0.1 * jax.random.normal(kg, (H,), jnp.float32)
    ln_bias = 0.1 * jax.random.normal(kb, (H,), jnp.float32)

    input_ids = jax.random.randint(ki, (B, S), 0, vocab, dtype=jnp.int32)
    token_type_ids = jax.random.randint(ks, (B, S), 0, 2, dtype=jnp.int32)
    position_ids = jnp.broadcast_to(jnp.arange(S, dtype=jnp.int32), (B, S))

    # Eval path (dropout off) — compare against pure-JAX reference.
    out_eval = long_bert_embeddings(input_ids, token_type_ids, position_ids,
                                    word_table, position_table,
                                    token_type_table, ln_weight, ln_bias,
                                    dropout_p=0.0)
    out_eval = jax.block_until_ready(out_eval)
    ref = _reference(input_ids, token_type_ids, position_ids, word_table,
                     position_table, token_type_table, ln_weight, ln_bias)
    assert out_eval.shape == (B, S, H)
    max_err = float(jnp.max(jnp.abs(out_eval - ref)))
    assert max_err < 1e-3, f"kernel/reference mismatch: {max_err}"

    # Training path (dropout on).
    out_train = long_bert_embeddings(input_ids, token_type_ids, position_ids,
                                     word_table, position_table,
                                     token_type_table, ln_weight, ln_bias,
                                     dropout_p=dropout_p, seed=0)
    out_train = jax.block_until_ready(out_train)
    assert out_train.shape == (B, S, H)

    print("KERNEL_OK")
</pallas_src>

<mosaic_0001>
module attributes {stable_mosaic.version = 11 : i64} {
  func.func @_embeddings_kernel(%arg0: i32, %arg1: i32, %arg2: memref<2x16xi32, #tpu.memory_space<smem>>, %arg3: memref<2x16xi32, #tpu.memory_space<smem>>, %arg4: memref<2x16xi32, #tpu.memory_space<smem>>, %arg5: memref<1xi32, #tpu.memory_space<smem>>, %arg6: memref<1x1x32xf32, #tpu.memory_space<vmem>>, %arg7: memref<1x1x32xf32, #tpu.memory_space<vmem>>, %arg8: memref<1x1x32xf32, #tpu.memory_space<vmem>>, %arg9: memref<1x1x32xf32, #tpu.memory_space<vmem>>, %arg10: memref<1x1x32xf32, #tpu.memory_space<vmem>>, %arg11: memref<1x1x32xf32, #tpu.memory_space<vmem>>, %arg12: memref<1x1x32xf32, #tpu.memory_space<vmem>>, %arg13: memref<1x1x32xf32, #tpu.memory_space<vmem>>, %arg14: memref<1x1x32xf32, #tpu.memory_space<vmem>>, %arg15: memref<1x1x32xf32, #tpu.memory_space<vmem>>, %arg16: memref<1x1x32xf32, #tpu.memory_space<vmem>>, %arg17: memref<1x1x32xf32, #tpu.memory_space<vmem>>, %arg18: memref<1x1x32xf32, #tpu.memory_space<vmem>>, %arg19: memref<1x1x32xf32, #tpu.memory_space<vmem>>, %arg20: memref<1x1x32xf32, #tpu.memory_space<vmem>>, %arg21: memref<1x1x32xf32, #tpu.memory_space<vmem>>, %arg22: memref<1x1x32xf32, #tpu.memory_space<vmem>>, %arg23: memref<1x1x32xf32, #tpu.memory_space<vmem>>, %arg24: memref<1x1x32xf32, #tpu.memory_space<vmem>>, %arg25: memref<1x1x32xf32, #tpu.memory_space<vmem>>, %arg26: memref<1x1x32xf32, #tpu.memory_space<vmem>>, %arg27: memref<1x1x32xf32, #tpu.memory_space<vmem>>, %arg28: memref<1x1x32xf32, #tpu.memory_space<vmem>>, %arg29: memref<1x1x32xf32, #tpu.memory_space<vmem>>, %arg30: memref<1x32xf32, #tpu.memory_space<vmem>>, %arg31: memref<1x32xf32, #tpu.memory_space<vmem>>, %arg32: memref<1x8x32xf32, #tpu.memory_space<vmem>>) attributes {dimension_semantics = [#tpu.dimension_semantics<parallel>, #tpu.dimension_semantics<parallel>], iteration_bounds = array<i64: 2, 2>, scalar_prefetch = 4 : i64, scratch_operands = 0 : i64, tpu.core_type = #tpu.core_type<tc>, window_params = [{transform_indices = @transform_0, window_bounds = array<i64: 1, 1, 32>}, {transform_indices = @transform_1, window_bounds = array<i64: 1, 1, 32>}, {transform_indices = @transform_2, window_bounds = array<i64: 1, 1, 32>}, {transform_indices = @transform_3, window_bounds = array<i64: 1, 1, 32>}, {transform_indices = @transform_4, window_bounds = array<i64: 1, 1, 32>}, {transform_indices = @transform_5, window_bounds = array<i64: 1, 1, 32>}, {transform_indices = @transform_6, window_bounds = array<i64: 1, 1, 32>}, {transform_indices = @transform_7, window_bounds = array<i64: 1, 1, 32>}, {transform_indices = @transform_8, window_bounds = array<i64: 1, 1, 32>}, {transform_indices = @transform_9, window_bounds = array<i64: 1, 1, 32>}, {transform_indices = @transform_10, window_bounds = array<i64: 1, 1, 32>}, {transform_indices = @transform_11, window_bounds = array<i64: 1, 1, 32>}, {transform_indices = @transform_12, window_bounds = array<i64: 1, 1, 32>}, {transform_indices = @transform_13, window_bounds = array<i64: 1, 1, 32>}, {transform_indices = @transform_14, window_bounds = array<i64: 1, 1, 32>}, {transform_indices = @transform_15, window_bounds = array<i64: 1, 1, 32>}, {transform_indices = @transform_16, window_bounds = array<i64: 1, 1, 32>}, {transform_indices = @transform_17, window_bounds = array<i64: 1, 1, 32>}, {transform_indices = @transform_18, window_bounds = array<i64: 1, 1, 32>}, {transform_indices = @transform_19, window_bounds = array<i64: 1, 1, 32>}, {transform_indices = @transform_20, window_bounds = array<i64: 1, 1, 32>}, {transform_indices = @transform_21, window_bounds = array<i64: 1, 1, 32>}, {transform_indices = @transform_22, window_bounds = array<i64: 1, 1, 32>}, {transform_indices = @transform_23, window_bounds = array<i64: 1, 1, 32>}, {pipeline_mode = #tpu.pipeline_mode<synchronous>, transform_indices = @transform_24, window_bounds = array<i64: 1, 32>}, {pipeline_mode = #tpu.pipeline_mode<synchronous>, transform_indices = @transform_25, window_bounds = array<i64: 1, 32>}, {transform_indices = @transform_26, window_bounds = array<i64: 1, 8, 32>}]} {
    %c0 = arith.constant 0 : index
    %c0_0 = arith.constant 0 : index
    %c0_1 = arith.constant 0 : index
    %0 = vector.load %arg6[%c0, %c0_0, %c0_1] : memref<1x1x32xf32, #tpu.memory_space<vmem>>, vector<1x1x32xf32>
    %1 = vector.shape_cast %0 : vector<1x1x32xf32> to vector<1x32xf32>
    %c0_2 = arith.constant 0 : index
    %c0_3 = arith.constant 0 : index
    %c0_4 = arith.constant 0 : index
    %2 = vector.load %arg14[%c0_2, %c0_3, %c0_4] : memref<1x1x32xf32, #tpu.memory_space<vmem>>, vector<1x1x32xf32>
    %3 = vector.shape_cast %2 : vector<1x1x32xf32> to vector<1x32xf32>
    %4 = arith.addf %1, %3 : vector<1x32xf32>
    %c0_5 = arith.constant 0 : index
    %c0_6 = arith.constant 0 : index
    %c0_7 = arith.constant 0 : index
    %5 = vector.load %arg22[%c0_5, %c0_6, %c0_7] : memref<1x1x32xf32, #tpu.memory_space<vmem>>, vector<1x1x32xf32>
    %6 = vector.shape_cast %5 : vector<1x1x32xf32> to vector<1x32xf32>
    %7 = arith.addf %4, %6 : vector<1x32xf32>
    %c0_8 = arith.constant 0 : index
    %c0_9 = arith.constant 0 : index
    %c0_10 = arith.constant 0 : index
    %8 = vector.load %arg7[%c0_8, %c0_9, %c0_10] : memref<1x1x32xf32, #tpu.memory_space<vmem>>, vector<1x1x32xf32>
    %9 = vector.shape_cast %8 : vector<1x1x32xf32> to vector<1x32xf32>
    %c0_11 = arith.constant 0 : index
    %c0_12 = arith.constant 0 : index
    %c0_13 = arith.constant 0 : index
    %10 = vector.load %arg15[%c0_11, %c0_12, %c0_13] : memref<1x1x32xf32, #tpu.memory_space<vmem>>, vector<1x1x32xf32>
    %11 = vector.shape_cast %10 : vector<1x1x32xf32> to vector<1x32xf32>
    %12 = arith.addf %9, %11 : vector<1x32xf32>
    %c0_14 = arith.constant 0 : index
    %c0_15 = arith.constant 0 : index
    %c0_16 = arith.constant 0 : index
    %13 = vector.load %arg23[%c0_14, %c0_15, %c0_16] : memref<1x1x32xf32, #tpu.memory_space<vmem>>, vector<1x1x32xf32>
    %14 = vector.shape_cast %13 : vector<1x1x32xf32> to vector<1x32xf32>
    %15 = arith.addf %12, %14 : vector<1x32xf32>
    %c0_17 = arith.constant 0 : index
    %c0_18 = arith.constant 0 : index
    %c0_19 = arith.constant 0 : index
    %16 = vector.load %arg8[%c0_17, %c0_18, %c0_19] : memref<1x1x32xf32, #tpu.memory_space<vmem>>, vector<1x1x32xf32>
    %17 = vector.shape_cast %16 : vector<1x1x32xf32> to vector<1x32xf32>
    %c0_20 = arith.constant 0 : index
    %c0_21 = arith.constant 0 : index
    %c0_22 = arith.constant 0 : index
    %18 = vector.load %arg16[%c0_20, %c0_21, %c0_22] : memref<1x1x32xf32, #tpu.memory_space<vmem>>, vector<1x1x32xf32>
    %19 = vector.shape_cast %18 : vector<1x1x32xf32> to vector<1x32xf32>
    %20 = arith.addf %17, %19 : vector<1x32xf32>
    %c0_23 = arith.constant 0 : index
    %c0_24 = arith.constant 0 : index
    %c0_25 = arith.constant 0 : index
    %21 = vector.load %arg24[%c0_23, %c0_24, %c0_25] : memref<1x1x32xf32, #tpu.memory_space<vmem>>, vector<1x1x32xf32>
    %22 = vector.shape_cast %21 : vector<1x1x32xf32> to vector<1x32xf32>
    %23 = arith.addf %20, %22 : vector<1x32xf32>
    %c0_26 = arith.constant 0 : index
    %c0_27 = arith.constant 0 : index
    %c0_28 = arith.constant 0 : index
    %24 = vector.load %arg9[%c0_26, %c0_27, %c0_28] : memref<1x1x32xf32, #tpu.memory_space<vmem>>, vector<1x1x32xf32>
    %25 = vector.shape_cast %24 : vector<1x1x32xf32> to vector<1x32xf32>
    %c0_29 = arith.constant 0 : index
    %c0_30 = arith.constant 0 : index
    %c0_31 = arith.constant 0 : index
    %26 = vector.load %arg17[%c0_29, %c0_30, %c0_31] : memref<1x1x32xf32, #tpu.memory_space<vmem>>, vector<1x1x32xf32>
    %27 = vector.shape_cast %26 : vector<1x1x32xf32> to vector<1x32xf32>
    %28 = arith.addf %25, %27 : vector<1x32xf32>
    %c0_32 = arith.constant 0 : index
    %c0_33 = arith.constant 0 : index
    %c0_34 = arith.constant 0 : index
    %29 = vector.load %arg25[%c0_32, %c0_33, %c0_34] : memref<1x1x32xf32, #tpu.memory_space<vmem>>, vector<1x1x32xf32>
    %30 = vector.shape_cast %29 : vector<1x1x32xf32> to vector<1x32xf32>
    %31 = arith.addf %28, %30 : vector<1x32xf32>
    %c0_35 = arith.constant 0 : index
    %c0_36 = arith.constant 0 : index
    %c0_37 = arith.constant 0 : index
    %32 = vector.load %arg10[%c0_35, %c0_36, %c0_37] : memref<1x1x32xf32, #tpu.memory_space<vmem>>, vector<1x1x32xf32>
    %33 = vector.shape_cast %32 : vector<1x1x32xf32> to vector<1x32xf32>
    %c0_38 = arith.constant 0 : index
    %c0_39 = arith.constant 0 : index
    %c0_40 = arith.constant 0 : index
    %34 = vector.load %arg18[%c0_38, %c0_39, %c0_40] : memref<1x1x32xf32, #tpu.memory_space<vmem>>, vector<1x1x32xf32>
    %35 = vector.shape_cast %34 : vector<1x1x32xf32> to vector<1x32xf32>
    %36 = arith.addf %33, %35 : vector<1x32xf32>
    %c0_41 = arith.constant 0 : index
    %c0_42 = arith.constant 0 : index
    %c0_43 = arith.constant 0 : index
    %37 = vector.load %arg26[%c0_41, %c0_42, %c0_43] : memref<1x1x32xf32, #tpu.memory_space<vmem>>, vector<1x1x32xf32>
    %38 = vector.shape_cast %37 : vector<1x1x32xf32> to vector<1x32xf32>
    %39 = arith.addf %36, %38 : vector<1x32xf32>
    %c0_44 = arith.constant 0 : index
    %c0_45 = arith.constant 0 : index
    %c0_46 = arith.constant 0 : index
    %40 = vector.load %arg11[%c0_44, %c0_45, %c0_46] : memref<1x1x32xf32, #tpu.memory_space<vmem>>, vector<1x1x32xf32>
    %41 = vector.shape_cast %40 : vector<1x1x32xf32> to vector<1x32xf32>
    %c0_47 = arith.constant 0 : index
    %c0_48 = arith.constant 0 : index
    %c0_49 = arith.constant 0 : index
    %42 = vector.load %arg19[%c0_47, %c0_48, %c0_49] : memref<1x1x32xf32, #tpu.memory_space<vmem>>, vector<1x1x32xf32>
    %43 = vector.shape_cast %42 : vector<1x1x32xf32> to vector<1x32xf32>
    %44 = arith.addf %41, %43 : vector<1x32xf32>
    %c0_50 = arith.constant 0 : index
    %c0_51 = arith.constant 0 : index
    %c0_52 = arith.constant 0 : index
    %45 = vector.load %arg27[%c0_50, %c0_51, %c0_52] : memref<1x1x32xf32, #tpu.memory_space<vmem>>, vector<1x1x32xf32>
    %46 = vector.shape_cast %45 : vector<1x1x32xf32> to vector<1x32xf32>
    %47 = arith.addf %44, %46 : vector<1x32xf32>
    %c0_53 = arith.constant 0 : index
    %c0_54 = arith.constant 0 : index
    %c0_55 = arith.constant 0 : index
    %48 = vector.load %arg12[%c0_53, %c0_54, %c0_55] : memref<1x1x32xf32, #tpu.memory_space<vmem>>, vector<1x1x32xf32>
    %49 = vector.shape_cast %48 : vector<1x1x32xf32> to vector<1x32xf32>
    %c0_56 = arith.constant 0 : index
    %c0_57 = arith.constant 0 : index
    %c0_58 = arith.constant 0 : index
    %50 = vector.load %arg20[%c0_56, %c0_57, %c0_58] : memref<1x1x32xf32, #tpu.memory_space<vmem>>, vector<1x1x32xf32>
    %51 = vector.shape_cast %50 : vector<1x1x32xf32> to vector<1x32xf32>
    %52 = arith.addf %49, %51 : vector<1x32xf32>
    %c0_59 = arith.constant 0 : index
    %c0_60 = arith.constant 0 : index
    %c0_61 = arith.constant 0 : index
    %53 = vector.load %arg28[%c0_59, %c0_60, %c0_61] : memref<1x1x32xf32, #tpu.memory_space<vmem>>, vector<1x1x32xf32>
    %54 = vector.shape_cast %53 : vector<1x1x32xf32> to vector<1x32xf32>
    %55 = arith.addf %52, %54 : vector<1x32xf32>
    %c0_62 = arith.constant 0 : index
    %c0_63 = arith.constant 0 : index
    %c0_64 = arith.constant 0 : index
    %56 = vector.load %arg13[%c0_62, %c0_63, %c0_64] : memref<1x1x32xf32, #tpu.memory_space<vmem>>, vector<1x1x32xf32>
    %57 = vector.shape_cast %56 : vector<1x1x32xf32> to vector<1x32xf32>
    %c0_65 = arith.constant 0 : index
    %c0_66 = arith.constant 0 : index
    %c0_67 = arith.constant 0 : index
    %58 = vector.load %arg21[%c0_65, %c0_66, %c0_67] : memref<1x1x32xf32, #tpu.memory_space<vmem>>, vector<1x1x32xf32>
    %59 = vector.shape_cast %58 : vector<1x1x32xf32> to vector<1x32xf32>
    %60 = arith.addf %57, %59 : vector<1x32xf32>
    %c0_68 = arith.constant 0 : index
    %c0_69 = arith.constant 0 : index
    %c0_70 = arith.constant 0 : index
    %61 = vector.load %arg29[%c0_68, %c0_69, %c0_70] : memref<1x1x32xf32, #tpu.memory_space<vmem>>, vector<1x1x32xf32>
    %62 = vector.shape_cast %61 : vector<1x1x32xf32> to vector<1x32xf32>
    %63 = arith.addf %60, %62 : vector<1x32xf32>
    %64 = tpu.concatenate %7, %15, %23, %31, %39, %47, %55, %63 in 0 : vector<1x32xf32>, vector<1x32xf32>, vector<1x32xf32>, vector<1x32xf32>, vector<1x32xf32>, vector<1x32xf32>, vector<1x32xf32>, vector<1x32xf32> -> vector<8x32xf32>
    %cst = arith.constant dense<0.000000e+00> : vector<8xf32>
    %65 = vector.multi_reduction <add>, %64, %cst [1] : vector<8x32xf32> to vector<8xf32>
    %66 = vector.shape_cast %65 : vector<8xf32> to vector<8x1xf32>
    %cst_71 = arith.constant 3.200000e+01 : f32
    %67 = vector.broadcast %cst_71 : f32 to vector<8x1xf32>
    %68 = arith.divf %66, %67 : vector<8x1xf32>
    %69 = vector.broadcast %68 : vector<8x1xf32> to vector<8x32xf32>
    %70 = arith.subf %64, %69 : vector<8x32xf32>
    %71 = arith.mulf %70, %70 : vector<8x32xf32>
    %cst_72 = arith.constant dense<0.000000e+00> : vector<8xf32>
    %72 = vector.multi_reduction <add>, %71, %cst_72 [1] : vector<8x32xf32> to vector<8xf32>
    %73 = vector.shape_cast %72 : vector<8xf32> to vector<8x1xf32>
    %cst_73 = arith.constant 3.200000e+01 : f32
    %74 = vector.broadcast %cst_73 : f32 to vector<8x1xf32>
    %75 = arith.divf %73, %74 : vector<8x1xf32>
    %cst_74 = arith.constant 9.99999996E-13 : f32
    %76 = vector.broadcast %cst_74 : f32 to vector<8x1xf32>
    %77 = arith.addf %75, %76 : vector<8x1xf32>
    %78 = math.rsqrt %77 : vector<8x1xf32>
    %79 = vector.broadcast %78 : vector<8x1xf32> to vector<8x32xf32>
    %80 = arith.mulf %70, %79 : vector<8x32xf32>
    %c0_75 = arith.constant 0 : index
    %c0_76 = arith.constant 0 : index
    %81 = vector.load %arg30[%c0_75, %c0_76] : memref<1x32xf32, #tpu.memory_space<vmem>>, vector<1x32xf32>
    %82 = vector.broadcast %81 : vector<1x32xf32> to vector<8x32xf32>
    %83 = arith.mulf %80, %82 : vector<8x32xf32>
    %c0_77 = arith.constant 0 : index
    %c0_78 = arith.constant 0 : index
    %84 = vector.load %arg31[%c0_77, %c0_78] : memref<1x32xf32, #tpu.memory_space<vmem>>, vector<1x32xf32>
    %85 = vector.broadcast %84 : vector<1x32xf32> to vector<8x32xf32>
    %86 = arith.addf %83, %85 : vector<8x32xf32>
    %c0_79 = arith.constant 0 : index
    %c0_80 = arith.constant 0 : index
    %c0_81 = arith.constant 0 : index
    %87 = vector.load %arg32[%c0_79, %c0_80, %c0_81] : memref<1x8x32xf32, #tpu.memory_space<vmem>>, vector<1x8x32xf32>
    %88 = vector.shape_cast %87 : vector<1x8x32xf32> to vector<8x32xf32>
    %89 = vector.shape_cast %86 : vector<8x32xf32> to vector<1x8x32xf32>
    tpu.vector_store %arg32[%c0_79, %c0_80, %c0_81], %89 {strides = array<i32>} : memref<1x8x32xf32, #tpu.memory_space<vmem>>, vector<1x8x32xf32>,
    return
  }
  func.func @transform_0(%arg0: i32, %arg1: i32, %arg2: memref<2x16xi32, #tpu.memory_space<smem>>, %arg3: memref<2x16xi32, #tpu.memory_space<smem>>, %arg4: memref<2x16xi32, #tpu.memory_space<smem>>, %arg5: memref<1xi32, #tpu.memory_space<smem>>) -> (i32, i32, i32) {
    %c8_i32 = arith.constant 8 : i32
    %0 = arith.muli %arg1, %c8_i32 : i32
    %c0_i32 = arith.constant 0 : i32
    %1 = arith.addi %0, %c0_i32 : i32
    %2 = arith.index_cast %arg0 : i32 to index
    %3 = arith.index_cast %1 : i32 to index
    %4 = memref.load %arg2[%2, %3] : memref<2x16xi32, #tpu.memory_space<smem>>
    %c0_i32_0 = arith.constant 0 : i32
    %c0_i32_1 = arith.constant 0 : i32
    %c0_i32_2 = arith.constant 0 : i32
    return %4, %c0_i32_0, %c0_i32_1 : i32, i32, i32
  }
  func.func @transform_1(%arg0: i32, %arg1: i32, %arg2: memref<2x16xi32, #tpu.memory_space<smem>>, %arg3: memref<2x16xi32, #tpu.memory_space<smem>>, %arg4: memref<2x16xi32, #tpu.memory_space<smem>>, %arg5: memref<1xi32, #tpu.memory_space<smem>>) -> (i32, i32, i32) {
    %c8_i32 = arith.constant 8 : i32
    %0 = arith.muli %arg1, %c8_i32 : i32
    %c1_i32 = arith.constant 1 : i32
    %1 = arith.addi %0, %c1_i32 : i32
    %2 = arith.index_cast %arg0 : i32 to index
    %3 = arith.index_cast %1 : i32 to index
    %4 = memref.load %arg2[%2, %3] : memref<2x16xi32, #tpu.memory_space<smem>>
    %c0_i32 = arith.constant 0 : i32
    %c0_i32_0 = arith.constant 0 : i32
    %c0_i32_1 = arith.constant 0 : i32
    return %4, %c0_i32, %c0_i32_0 : i32, i32, i32
  }
  func.func @transform_2(%arg0: i32, %arg1: i32, %arg2: memref<2x16xi32, #tpu.memory_space<smem>>, %arg3: memref<2x16xi32, #tpu.memory_space<smem>>, %arg4: memref<2x16xi32, #tpu.memory_space<smem>>, %arg5: memref<1xi32, #tpu.memory_space<smem>>) -> (i32, i32, i32) {
    %c8_i32 = arith.constant 8 : i32
    %0 = arith.muli %arg1, %c8_i32 : i32
    %c2_i32 = arith.constant 2 : i32
    %1 = arith.addi %0, %c2_i32 : i32
    %2 = arith.index_cast %arg0 : i32 to index
    %3 = arith.index_cast %1 : i32 to index
    %4 = memref.load %arg2[%2, %3] : memref<2x16xi32, #tpu.memory_space<smem>>
    %c0_i32 = arith.constant 0 : i32
    %c0_i32_0 = arith.constant 0 : i32
    %c0_i32_1 = arith.constant 0 : i32
    return %4, %c0_i32, %c0_i32_0 : i32, i32, i32
  }
  func.func @transform_3(%arg0: i32, %arg1: i32, %arg2: memref<2x16xi32, #tpu.memory_space<smem>>, %arg3: memref<2x16xi32, #tpu.memory_space<smem>>, %arg4: memref<2x16xi32, #tpu.memory_space<smem>>, %arg5: memref<1xi32, #tpu.memory_space<smem>>) -> (i32, i32, i32) {
    %c8_i32 = arith.constant 8 : i32
    %0 = arith.muli %arg1, %c8_i32 : i32
    %c3_i32 = arith.constant 3 : i32
    %1 = arith.addi %0, %c3_i32 : i32
    %2 = arith.index_cast %arg0 : i32 to index
    %3 = arith.index_cast %1 : i32 to index
    %4 = memref.load %arg2[%2, %3] : memref<2x16xi32, #tpu.memory_space<smem>>
    %c0_i32 = arith.constant 0 : i32
    %c0_i32_0 = arith.constant 0 : i32
    %c0_i32_1 = arith.constant 0 : i32
    return %4, %c0_i32, %c0_i32_0 : i32, i32, i32
  }
  func.func @transform_4(%arg0: i32, %arg1: i32, %arg2: memref<2x16xi32, #tpu.memory_space<smem>>, %arg3: memref<2x16xi32, #tpu.memory_space<smem>>, %arg4: memref<2x16xi32, #tpu.memory_space<smem>>, %arg5: memref<1xi32, #tpu.memory_space<smem>>) -> (i32, i32, i32) {
    %c8_i32 = arith.constant 8 : i32
    %0 = arith.muli %arg1, %c8_i32 : i32
    %c4_i32 = arith.constant 4 : i32
    %1 = arith.addi %0, %c4_i32 : i32
    %2 = arith.index_cast %arg0 : i32 to index
    %3 = arith.index_cast %1 : i32 to index
    %4 = memref.load %arg2[%2, %3] : memref<2x16xi32, #tpu.memory_space<smem>>
    %c0_i32 = arith.constant 0 : i32
    %c0_i32_0 = arith.constant 0 : i32
    %c0_i32_1 = arith.constant 0 : i32
    return %4, %c0_i32, %c0_i32_0 : i32, i32, i32
  }
  func.func @transform_5(%arg0: i32, %arg1: i32, %arg2: memref<2x16xi32, #tpu.memory_space<smem>>, %arg3: memref<2x16xi32, #tpu.memory_space<smem>>, %arg4: memref<2x16xi32, #tpu.memory_space<smem>>, %arg5: memref<1xi32, #tpu.memory_space<smem>>) -> (i32, i32, i32) {
    %c8_i32 = arith.constant 8 : i32
    %0 = arith.muli %arg1, %c8_i32 : i32
    %c5_i32 = arith.constant 5 : i32
    %1 = arith.addi %0, %c5_i32 : i32
    %2 = arith.index_cast %arg0 : i32 to index
    %3 = arith.index_cast %1 : i32 to index
    %4 = memref.load %arg2[%2, %3] : memref<2x16xi32, #tpu.memory_space<smem>>
    %c0_i32 = arith.constant 0 : i32
    %c0_i32_0 = arith.constant 0 : i32
    %c0_i32_1 = arith.constant 0 : i32
    return %4, %c0_i32, %c0_i32_0 : i32, i32, i32
  }
  func.func @transform_6(%arg0: i32, %arg1: i32, %arg2: memref<2x16xi32, #tpu.memory_space<smem>>, %arg3: memref<2x16xi32, #tpu.memory_space<smem>>, %arg4: memref<2x16xi32, #tpu.memory_space<smem>>, %arg5: memref<1xi32, #tpu.memory_space<smem>>) -> (i32, i32, i32) {
    %c8_i32 = arith.constant 8 : i32
    %0 = arith.muli %arg1, %c8_i32 : i32
    %c6_i32 = arith.constant 6 : i32
    %1 = arith.addi %0, %c6_i32 : i32
    %2 = arith.index_cast %arg0 : i32 to index
    %3 = arith.index_cast %1 : i32 to index
    %4 = memref.load %arg2[%2, %3] : memref<2x16xi32, #tpu.memory_space<smem>>
    %c0_i32 = arith.constant 0 : i32
    %c0_i32_0 = arith.constant 0 : i32
    %c0_i32_1 = arith.constant 0 : i32
    return %4, %c0_i32, %c0_i32_0 : i32, i32, i32
  }
  func.func @transform_7(%arg0: i32, %arg1: i32, %arg2: memref<2x16xi32, #tpu.memory_space<smem>>, %arg3: memref<2x16xi32, #tpu.memory_space<smem>>, %arg4: memref<2x16xi32, #tpu.memory_space<smem>>, %arg5: memref<1xi32, #tpu.memory_space<smem>>) -> (i32, i32, i32) {
    %c8_i32 = arith.constant 8 : i32
    %0 = arith.muli %arg1, %c8_i32 : i32
    %c7_i32 = arith.constant 7 : i32
    %1 = arith.addi %0, %c7_i32 : i32
    %2 = arith.index_cast %arg0 : i32 to index
    %3 = arith.index_cast %1 : i32 to index
    %4 = memref.load %arg2[%2, %3] : memref<2x16xi32, #tpu.memory_space<smem>>
    %c0_i32 = arith.constant 0 : i32
    %c0_i32_0 = arith.constant 0 : i32
    %c0_i32_1 = arith.constant 0 : i32
    return %4, %c0_i32, %c0_i32_0 : i32, i32, i32
  }
  func.func @transform_8(%arg0: i32, %arg1: i32, %arg2: memref<2x16xi32, #tpu.memory_space<smem>>, %arg3: memref<2x16xi32, #tpu.memory_space<smem>>, %arg4: memref<2x16xi32, #tpu.memory_space<smem>>, %arg5: memref<1xi32, #tpu.memory_space<smem>>) -> (i32, i32, i32) {
    %c8_i32 = arith.constant 8 : i32
    %0 = arith.muli %arg1, %c8_i32 : i32
    %c0_i32 = arith.constant 0 : i32
    %1 = arith.addi %0, %c0_i32 : i32
    %2 = arith.index_cast %arg0 : i32 to index
    %3 = arith.index_cast %1 : i32 to index
    %4 = memref.load %arg4[%2, %3] : memref<2x16xi32, #tpu.memory_space<smem>>
    %c0_i32_0 = arith.constant 0 : i32
    %c0_i32_1 = arith.constant 0 : i32
    %c0_i32_2 = arith.constant 0 : i32
    return %4, %c0_i32_0, %c0_i32_1 : i32, i32, i32
  }
  func.func @transform_9(%arg0: i32, %arg1: i32, %arg2: memref<2x16xi32, #tpu.memory_space<smem>>, %arg3: memref<2x16xi32, #tpu.memory_space<smem>>, %arg4: memref<2x16xi32, #tpu.memory_space<smem>>, %arg5: memref<1xi32, #tpu.memory_space<smem>>) -> (i32, i32, i32) {
    %c8_i32 = arith.constant 8 : i32
    %0 = arith.muli %arg1, %c8_i32 : i32
    %c1_i32 = arith.constant 1 : i32
    %1 = arith.addi %0, %c1_i32 : i32
    %2 = arith.index_cast %arg0 : i32 to index
    %3 = arith.index_cast %1 : i32 to index
    %4 = memref.load %arg4[%2, %3] : memref<2x16xi32, #tpu.memory_space<smem>>
    %c0_i32 = arith.constant 0 : i32
    %c0_i32_0 = arith.constant 0 : i32
    %c0_i32_1 = arith.constant 0 : i32
    return %4, %c0_i32, %c0_i32_0 : i32, i32, i32
  }
  func.func @transform_10(%arg0: i32, %arg1: i32, %arg2: memref<2x16xi32, #tpu.memory_space<smem>>, %arg3: memref<2x16xi32, #tpu.memory_space<smem>>, %arg4: memref<2x16xi32, #tpu.memory_space<smem>>, %arg5: memref<1xi32, #tpu.memory_space<smem>>) -> (i32, i32, i32) {
    %c8_i32 = arith.constant 8 : i32
    %0 = arith.muli %arg1, %c8_i32 : i32
    %c2_i32 = arith.constant 2 : i32
    %1 = arith.addi %0, %c2_i32 : i32
    %2 = arith.index_cast %arg0 : i32 to index
    %3 = arith.index_cast %1 : i32 to index
    %4 = memref.load %arg4[%2, %3] : memref<2x16xi32, #tpu.memory_space<smem>>
    %c0_i32 = arith.constant 0 : i32
    %c0_i32_0 = arith.constant 0 : i32
    %c0_i32_1 = arith.constant 0 : i32
    return %4, %c0_i32, %c0_i32_0 : i32, i32, i32
  }
  func.func @transform_11(%arg0: i32, %arg1: i32, %arg2: memref<2x16xi32, #tpu.memory_space<smem>>, %arg3: memref<2x16xi32, #tpu.memory_space<smem>>, %arg4: memref<2x16xi32, #tpu.memory_space<smem>>, %arg5: memref<1xi32, #tpu.memory_space<smem>>) -> (i32, i32, i32) {
    %c8_i32 = arith.constant 8 : i32
    %0 = arith.muli %arg1, %c8_i32 : i32
    %c3_i32 = arith.constant 3 : i32
    %1 = arith.addi %0, %c3_i32 : i32
    %2 = arith.index_cast %arg0 : i32 to index
    %3 = arith.index_cast %1 : i32 to index
    %4 = memref.load %arg4[%2, %3] : memref<2x16xi32, #tpu.memory_space<smem>>
    %c0_i32 = arith.constant 0 : i32
    %c0_i32_0 = arith.constant 0 : i32
    %c0_i32_1 = arith.constant 0 : i32
    return %4, %c0_i32, %c0_i32_0 : i32, i32, i32
  }
  func.func @transform_12(%arg0: i32, %arg1: i32, %arg2: memref<2x16xi32, #tpu.memory_space<smem>>, %arg3: memref<2x16xi32, #tpu.memory_space<smem>>, %arg4: memref<2x16xi32, #tpu.memory_space<smem>>, %arg5: memref<1xi32, #tpu.memory_space<smem>>) -> (i32, i32, i32) {
    %c8_i32 = arith.constant 8 : i32
    %0 = arith.muli %arg1, %c8_i32 : i32
    %c4_i32 = arith.constant 4 : i32
    %1 = arith.addi %0, %c4_i32 : i32
    %2 = arith.index_cast %arg0 : i32 to index
    %3 = arith.index_cast %1 : i32 to index
    %4 = memref.load %arg4[%2, %3] : memref<2x16xi32, #tpu.memory_space<smem>>
    %c0_i32 = arith.constant 0 : i32
    %c0_i32_0 = arith.constant 0 : i32
    %c0_i32_1 = arith.constant 0 : i32
    return %4, %c0_i32, %c0_i32_0 : i32, i32, i32
  }
  func.func @transform_13(%arg0: i32, %arg1: i32, %arg2: memref<2x16xi32, #tpu.memory_space<smem>>, %arg3: memref<2x16xi32, #tpu.memory_space<smem>>, %arg4: memref<2x16xi32, #tpu.memory_space<smem>>, %arg5: memref<1xi32, #tpu.memory_space<smem>>) -> (i32, i32, i32) {
    %c8_i32 = arith.constant 8 : i32
    %0 = arith.muli %arg1, %c8_i32 : i32
    %c5_i32 = arith.constant 5 : i32
    %1 = arith.addi %0, %c5_i32 : i32
    %2 = arith.index_cast %arg0 : i32 to index
    %3 = arith.index_cast %1 : i32 to index
    %4 = memref.load %arg4[%2, %3] : memref<2x16xi32, #tpu.memory_space<smem>>
    %c0_i32 = arith.constant 0 : i32
    %c0_i32_0 = arith.constant 0 : i32
    %c0_i32_1 = arith.constant 0 : i32
    return %4, %c0_i32, %c0_i32_0 : i32, i32, i32
  }
  func.func @transform_14(%arg0: i32, %arg1: i32, %arg2: memref<2x16xi32, #tpu.memory_space<smem>>, %arg3: memref<2x16xi32, #tpu.memory_space<smem>>, %arg4: memref<2x16xi32, #tpu.memory_space<smem>>, %arg5: memref<1xi32, #tpu.memory_space<smem>>) -> (i32, i32, i32) {
    %c8_i32 = arith.constant 8 : i32
    %0 = arith.muli %arg1, %c8_i32 : i32
    %c6_i32 = arith.constant 6 : i32
    %1 = arith.addi %0, %c6_i32 : i32
    %2 = arith.index_cast %arg0 : i32 to index
    %3 = arith.index_cast %1 : i32 to index
    %4 = memref.load %arg4[%2, %3] : memref<2x16xi32, #tpu.memory_space<smem>>
    %c0_i32 = arith.constant 0 : i32
    %c0_i32_0 = arith.constant 0 : i32
    %c0_i32_1 = arith.constant 0 : i32
    return %4, %c0_i32, %c0_i32_0 : i32, i32, i32
  }
  func.func @transform_15(%arg0: i32, %arg1: i32, %arg2: memref<2x16xi32, #tpu.memory_space<smem>>, %arg3: memref<2x16xi32, #tpu.memory_space<smem>>, %arg4: memref<2x16xi32, #tpu.memory_space<smem>>, %arg5: memref<1xi32, #tpu.memory_space<smem>>) -> (i32, i32, i32) {
    %c8_i32 = arith.constant 8 : i32
    %0 = arith.muli %arg1, %c8_i32 : i32
    %c7_i32 = arith.constant 7 : i32
    %1 = arith.addi %0, %c7_i32 : i32
    %2 = arith.index_cast %arg0 : i32 to index
    %3 = arith.index_cast %1 : i32 to index
    %4 = memref.load %arg4[%2, %3] : memref<2x16xi32, #tpu.memory_space<smem>>
    %c0_i32 = arith.constant 0 : i32
    %c0_i32_0 = arith.constant 0 : i32
    %c0_i32_1 = arith.constant 0 : i32
    return %4, %c0_i32, %c0_i32_0 : i32, i32, i32
  }
  func.func @transform_16(%arg0: i32, %arg1: i32, %arg2: memref<2x16xi32, #tpu.memory_space<smem>>, %arg3: memref<2x16xi32, #tpu.memory_space<smem>>, %arg4: memref<2x16xi32, #tpu.memory_space<smem>>, %arg5: memref<1xi32, #tpu.memory_space<smem>>) -> (i32, i32, i32) {
    %c8_i32 = arith.constant 8 : i32
    %0 = arith.muli %arg1, %c8_i32 : i32
    %c0_i32 = arith.constant 0 : i32
    %1 = arith.addi %0, %c0_i32 : i32
    %2 = arith.index_cast %arg0 : i32 to index
    %3 = arith.index_cast %1 : i32 to index
    %4 = memref.load %arg3[%2, %3] : memref<2x16xi32, #tpu.memory_space<smem>>
    %c0_i32_0 = arith.constant 0 : i32
    %c0_i32_1 = arith.constant 0 : i32
    %c0_i32_2 = arith.constant 0 : i32
    return %4, %c0_i32_0, %c0_i32_1 : i32, i32, i32
  }
  func.func @transform_17(%arg0: i32, %arg1: i32, %arg2: memref<2x16xi32, #tpu.memory_space<smem>>, %arg3: memref<2x16xi32, #tpu.memory_space<smem>>, %arg4: memref<2x16xi32, #tpu.memory_space<smem>>, %arg5: memref<1xi32, #tpu.memory_space<smem>>) -> (i32, i32, i32) {
    %c8_i32 = arith.constant 8 : i32
    %0 = arith.muli %arg1, %c8_i32 : i32
    %c1_i32 = arith.constant 1 : i32
    %1 = arith.addi %0, %c1_i32 : i32
    %2 = arith.index_cast %arg0 : i32 to index
    %3 = arith.index_cast %1 : i32 to index
    %4 = memref.load %arg3[%2, %3] : memref<2x16xi32, #tpu.memory_space<smem>>
    %c0_i32 = arith.constant 0 : i32
    %c0_i32_0 = arith.constant 0 : i32
    %c0_i32_1 = arith.constant 0 : i32
    return %4, %c0_i32, %c0_i32_0 : i32, i32, i32
  }
  func.func @transform_18(%arg0: i32, %arg1: i32, %arg2: memref<2x16xi32, #tpu.memory_space<smem>>, %arg3: memref<2x16xi32, #tpu.memory_space<smem>>, %arg4: memref<2x16xi32, #tpu.memory_space<smem>>, %arg5: memref<1xi32, #tpu.memory_space<smem>>) -> (i32, i32, i32) {
    %c8_i32 = arith.constant 8 : i32
    %0 = arith.muli %arg1, %c8_i32 : i32
    %c2_i32 = arith.constant 2 : i32
    %1 = arith.addi %0, %c2_i32 : i32
    %2 = arith.index_cast %arg0 : i32 to index
    %3 = arith.index_cast %1 : i32 to index
    %4 = memref.load %arg3[%2, %3] : memref<2x16xi32, #tpu.memory_space<smem>>
    %c0_i32 = arith.constant 0 : i32
    %c0_i32_0 = arith.constant 0 : i32
    %c0_i32_1 = arith.constant 0 : i32
    return %4, %c0_i32, %c0_i32_0 : i32, i32, i32
  }
  func.func @transform_19(%arg0: i32, %arg1: i32, %arg2: memref<2x16xi32, #tpu.memory_space<smem>>, %arg3: memref<2x16xi32, #tpu.memory_space<smem>>, %arg4: memref<2x16xi32, #tpu.memory_space<smem>>, %arg5: memref<1xi32, #tpu.memory_space<smem>>) -> (i32, i32, i32) {
    %c8_i32 = arith.constant 8 : i32
    %0 = arith.muli %arg1, %c8_i32 : i32
    %c3_i32 = arith.constant 3 : i32
    %1 = arith.addi %0, %c3_i32 : i32
    %2 = arith.index_cast %arg0 : i32 to index
    %3 = arith.index_cast %1 : i32 to index
    %4 = memref.load %arg3[%2, %3] : memref<2x16xi32, #tpu.memory_space<smem>>
    %c0_i32 = arith.constant 0 : i32
    %c0_i32_0 = arith.constant 0 : i32
    %c0_i32_1 = arith.constant 0 : i32
    return %4, %c0_i32, %c0_i32_0 : i32, i32, i32
  }
  func.func @transform_20(%arg0: i32, %arg1: i32, %arg2: memref<2x16xi32, #tpu.memory_space<smem>>, %arg3: memref<2x16xi32, #tpu.memory_space<smem>>, %arg4: memref<2x16xi32, #tpu.memory_space<smem>>, %arg5: memref<1xi32, #tpu.memory_space<smem>>) -> (i32, i32, i32) {
    %c8_i32 = arith.constant 8 : i32
    %0 = arith.muli %arg1, %c8_i32 : i32
    %c4_i32 = arith.constant 4 : i32
    %1 = arith.addi %0, %c4_i32 : i32
    %2 = arith.index_cast %arg0 : i32 to index
    %3 = arith.index_cast %1 : i32 to index
    %4 = memref.load %arg3[%2, %3] : memref<2x16xi32, #tpu.memory_space<smem>>
    %c0_i32 = arith.constant 0 : i32
    %c0_i32_0 = arith.constant 0 : i32
    %c0_i32_1 = arith.constant 0 : i32
    return %4, %c0_i32, %c0_i32_0 : i32, i32, i32
  }
  func.func @transform_21(%arg0: i32, %arg1: i32, %arg2: memref<2x16xi32, #tpu.memory_space<smem>>, %arg3: memref<2x16xi32, #tpu.memory_space<smem>>, %arg4: memref<2x16xi32, #tpu.memory_space<smem>>, %arg5: memref<1xi32, #tpu.memory_space<smem>>) -> (i32, i32, i32) {
    %c8_i32 = arith.constant 8 : i32
    %0 = arith.muli %arg1, %c8_i32 : i32
    %c5_i32 = arith.constant 5 : i32
    %1 = arith.addi %0, %c5_i32 : i32
    %2 = arith.index_cast %arg0 : i32 to index
    %3 = arith.index_cast %1 : i32 to index
    %4 = memref.load %arg3[%2, %3] : memref<2x16xi32, #tpu.memory_space<smem>>
    %c0_i32 = arith.constant 0 : i32
    %c0_i32_0 = arith.constant 0 : i32
    %c0_i32_1 = arith.constant 0 : i32
    return %4, %c0_i32, %c0_i32_0 : i32, i32, i32
  }
  func.func @transform_22(%arg0: i32, %arg1: i32, %arg2: memref<2x16xi32, #tpu.memory_space<smem>>, %arg3: memref<2x16xi32, #tpu.memory_space<smem>>, %arg4: memref<2x16xi32, #tpu.memory_space<smem>>, %arg5: memref<1xi32, #tpu.memory_space<smem>>) -> (i32, i32, i32) {
    %c8_i32 = arith.constant 8 : i32
    %0 = arith.muli %arg1, %c8_i32 : i32
    %c6_i32 = arith.constant 6 : i32
    %1 = arith.addi %0, %c6_i32 : i32
    %2 = arith.index_cast %arg0 : i32 to index
    %3 = arith.index_cast %1 : i32 to index
    %4 = memref.load %arg3[%2, %3] : memref<2x16xi32, #tpu.memory_space<smem>>
    %c0_i32 = arith.constant 0 : i32
    %c0_i32_0 = arith.constant 0 : i32
    %c0_i32_1 = arith.constant 0 : i32
    return %4, %c0_i32, %c0_i32_0 : i32, i32, i32
  }
  func.func @transform_23(%arg0: i32, %arg1: i32, %arg2: memref<2x16xi32, #tpu.memory_space<smem>>, %arg3: memref<2x16xi32, #tpu.memory_space<smem>>, %arg4: memref<2x16xi32, #tpu.memory_space<smem>>, %arg5: memref<1xi32, #tpu.memory_space<smem>>) -> (i32, i32, i32) {
    %c8_i32 = arith.constant 8 : i32
    %0 = arith.muli %arg1, %c8_i32 : i32
    %c7_i32 = arith.constant 7 : i32
    %1 = arith.addi %0, %c7_i32 : i32
    %2 = arith.index_cast %arg0 : i32 to index
    %3 = arith.index_cast %1 : i32 to index
    %4 = memref.load %arg3[%2, %3] : memref<2x16xi32, #tpu.memory_space<smem>>
    %c0_i32 = arith.constant 0 : i32
    %c0_i32_0 = arith.constant 0 : i32
    %c0_i32_1 = arith.constant 0 : i32
    return %4, %c0_i32, %c0_i32_0 : i32, i32, i32
  }
  func.func @transform_24(%arg0: i32, %arg1: i32, %arg2: memref<2x16xi32, #tpu.memory_space<smem>>, %arg3: memref<2x16xi32, #tpu.memory_space<smem>>, %arg4: memref<2x16xi32, #tpu.memory_space<smem>>, %arg5: memref<1xi32, #tpu.memory_space<smem>>) -> (i32, i32) {
    %c0_i32 = arith.constant 0 : i32
    %c0_i32_0 = arith.constant 0 : i32
    %c0_i32_1 = arith.constant 0 : i32
    return %c0_i32, %c0_i32_0 : i32, i32
  }
  func.func @transform_25(%arg0: i32, %arg1: i32, %arg2: memref<2x16xi32, #tpu.memory_space<smem>>, %arg3: memref<2x16xi32, #tpu.memory_space<smem>>, %arg4: memref<2x16xi32, #tpu.memory_space<smem>>, %arg5: memref<1xi32, #tpu.memory_space<smem>>) -> (i32, i32) {
    %c0_i32 = arith.constant 0 : i32
    %c0_i32_0 = arith.constant 0 : i32
    %c0_i32_1 = arith.constant 0 : i32
    return %c0_i32, %c0_i32_0 : i32, i32
  }
  func.func @transform_26(%arg0: i32, %arg1: i32, %arg2: memref<2x16xi32, #tpu.memory_space<smem>>, %arg3: memref<2x16xi32, #tpu.memory_space<smem>>, %arg4: memref<2x16xi32, #tpu.memory_space<smem>>, %arg5: memref<1xi32, #tpu.memory_space<smem>>) -> (i32, i32, i32) {
    %c0_i32 = arith.constant 0 : i32
    %c0_i32_0 = arith.constant 0 : i32
    return %arg0, %arg1, %c0_i32 : i32, i32, i32
  }
}

</mosaic_0001>

<llo_original>
// kernel: tpu_custom_call.1
$region0: #{tpu_custom_call.1}
  #allocation0 [shape = 'u32[]', space=smem, size = 0x4, offset = 0x4, fixed_abs, tag = 'smem constant byte address 0x4 - core index']
  #allocation1 [shape = 'u32[144,128]{1,0:T(1,128)}', space=vmem, size = 0x12000, scoped, tag = 'internal scratch']
  #allocation2 [shape = 's32[1]{0}', space=sflag, size = 0x4, scoped, tag = 'scoped memory for tpu_custom_call.1']
  #allocation3 [shape = 'u8[1024]{0}', space=smem, size = 0x400, scoped, tag = 'prefetched SMEM operand 0']
  #allocation4 [shape = 'u8[1024]{0}', space=smem, size = 0x400, scoped, tag = 'prefetched SMEM operand 1']
  #allocation5 [shape = 'u8[1024]{0}', space=smem, size = 0x400, scoped, tag = 'prefetched SMEM operand 2']
  #allocation6 [shape = 's32[1]{0:T(128)S(6)}', space=smem, size = 0x200, scoped, tag = 'prefetched SMEM operand 3']
  %s0 = inlined_call_operand.smem [shape: u32[31], index: -1, kind: input, shape index: {}]
  %s1 = sld [smem:[%s0]]
  %s2 = scalar_lea.smem %s0, 1
  %s3 = sld [smem:[%s2]]
  %s4 = scalar_lea.smem %s0, 2
  %s5 = sld [smem:[%s4]]
  %s6 = scalar_lea.smem %s0, 3
  %s7 = sld [smem:[%s6]]
  %s8 = scalar_lea.smem %s0, 4
  %s9 = sld [smem:[%s8]]
  %s10 = scalar_lea.smem %s0, 5
  %s11 = sld [smem:[%s10]]
  %s12 = scalar_lea.smem %s0, 6
  %s13 = sld [smem:[%s12]]
  %s14 = scalar_lea.smem %s0, 7
  %s15 = sld [smem:[%s14]]
  %s16 = scalar_lea.smem %s0, 8
  %s17 = sld [smem:[%s16]]
  %s18 = scalar_lea.smem %s0, 9
  %s19 = sld [smem:[%s18]]
  %s20 = scalar_lea.smem %s0, 10
  %s21 = sld [smem:[%s20]]
  %s22 = scalar_lea.smem %s0, 11
  %s23 = sld [smem:[%s22]]
  %s24 = scalar_lea.smem %s0, 12
  %s25 = sld [smem:[%s24]]
  %s26 = scalar_lea.smem %s0, 13
  %s27 = sld [smem:[%s26]]
  %s28 = scalar_lea.smem %s0, 14
  %s29 = sld [smem:[%s28]]
  %s30 = scalar_lea.smem %s0, 15
  %s31 = sld [smem:[%s30]]
  %s32 = scalar_lea.smem %s0, 16
  %s33 = sld [smem:[%s32]]
  %s34 = scalar_lea.smem %s0, 17
  %s35 = sld [smem:[%s34]]
  %s36 = scalar_lea.smem %s0, 18
  %s37 = sld [smem:[%s36]]
  %s38 = scalar_lea.smem %s0, 19
  %s39 = sld [smem:[%s38]]
  %s40 = scalar_lea.smem %s0, 20
  %s41 = sld [smem:[%s40]]
  %s42 = scalar_lea.smem %s0, 21
  %s43 = sld [smem:[%s42]]
  %s44 = scalar_lea.smem %s0, 22
  %s45 = sld [smem:[%s44]]
  %s46 = scalar_lea.smem %s0, 23
  %s47 = sld [smem:[%s46]]
  %s48 = scalar_lea.smem %s0, 24
  %s49 = sld [smem:[%s48]]
  %s50 = scalar_lea.smem %s0, 25
  %s51 = sld [smem:[%s50]]
  %s52 = scalar_lea.smem %s0, 26
  %s53 = sld [smem:[%s52]]
  %s54 = scalar_lea.smem %s0, 27
  %s55 = sld [smem:[%s54]]
  %s56 = scalar_lea.smem %s0, 28
  %s57 = sld [smem:[%s56]]
  %s58 = scalar_lea.smem %s0, 29
  %s59 = sld [smem:[%s58]]
  %s60 = scalar_lea.smem %s0, 30
  %s61 = sld [smem:[%s60]]
  %s62 = sld [smem:[#allocation0]]
  $region137: #{tpu_custom_call.1} parent=0
    _
  %s64 = ssub.s32 1, %s62
  %s65 = scalar_select 0, %s64, %s62
  %s66 = sshll.u32 %s1, 4
  %s67 = int_to_ptr.vmem [resolvable:$true] %s66
  %69 = dma.vmem_to_smem %s67, 32, [#allocation3], [#allocation2]
  %s70 = sshll.u32 %s3, 4
  %s71 = int_to_ptr.vmem [resolvable:$true] %s70
  %73 = dma.vmem_to_smem %s71, 32, [#allocation4], [#allocation2]
  %s74 = sshll.u32 %s5, 4
  %s75 = int_to_ptr.vmem [resolvable:$true] %s74
  %77 = dma.vmem_to_smem %s75, 32, [#allocation5], [#allocation2]
  %78 = sst [smem:[#allocation6]] %s7
  %79 = dma.done [#allocation2], 96
  %80 = sfence
  $region1: #{tpu_custom_call.1} parent=0
    #allocation7 [shape = 'u8[8192]{0}', space=vmem, size = 0x2000, scoped, tag = 'output window, operand 0']
    #allocation8 [shape = 's32[2]{0}', space=sflag, size = 0x8, scoped, tag = 'scoped memory for tpu_custom_call.1']
    %81 = vsyncpa [#allocation8], 0
    %s82 = scalar_lea.sflag [#allocation8], 1
    %83 = vsyncpa %s82, 0
    loop: start=0, step=1, limit=6
    $region2: #{tpu_custom_call.1} parent=1 // loop_pre_header
      _
    $region3: #{tpu_custom_call.1} parent=1 // loop_header
      %s85 = sphi 0, %s89
      %p86 = scmp.ge.s32.totalorder %s85, 6
      %s92 = sphi 0, %s104
      %s93 = sphi 0, %s100
      %s94 = sphi 0, %s92
      %s95 = sphi 0, %s93
      %s96 = sphi 0, %s94
      %s97 = sphi 0, %s95
      %s125 = sphi 0, %s127
      %s128 = sphi 0, %s125
      %s129 = sphi 0, %s128
      %s145 = sphi 0, %s129
      %s171 = sphi 0, %s173
      %s174 = sphi 0, %s171
      %s175 = sphi 0, %s174
      %s191 = sphi 0, %s175
      %s217 = sphi 0, %s219
      %s220 = sphi 0, %s217
      %s221 = sphi 0, %s220
      %s237 = sphi 0, %s221
      %s263 = sphi 0, %s265
      %s266 = sphi 0, %s263
      %s267 = sphi 0, %s266
      %s283 = sphi 0, %s267
      %s309 = sphi 0, %s311
      %s312 = sphi 0, %s309
      %s313 = sphi 0, %s312
      %s329 = sphi 0, %s313
      %s355 = sphi 0, %s357
      %s358 = sphi 0, %s355
      %s359 = sphi 0, %s358
      %s375 = sphi 0, %s359
      %s401 = sphi 0, %s403
      %s404 = sphi 0, %s401
      %s405 = sphi 0, %s404
      %s421 = sphi 0, %s405
      %s447 = sphi 0, %s449
      %s450 = sphi 0, %s447
      %s451 = sphi 0, %s450
      %s467 = sphi 0, %s451
      %s491 = sphi 0, %s493
      %s494 = sphi 0, %s491
      %s495 = sphi 0, %s494
      %s511 = sphi 0, %s495
      %s537 = sphi 0, %s539
      %s540 = sphi 0, %s537
      %s541 = sphi 0, %s540
      %s557 = sphi 0, %s541
      %s583 = sphi 0, %s585
      %s586 = sphi 0, %s583
      %s587 = sphi 0, %s586
      %s603 = sphi 0, %s587
      %s629 = sphi 0, %s631
      %s632 = sphi 0, %s629
      %s633 = sphi 0, %s632
      %s649 = sphi 0, %s633
      %s675 = sphi 0, %s677
      %s678 = sphi 0, %s675
      %s679 = sphi 0, %s678
      %s695 = sphi 0, %s679
      %s721 = sphi 0, %s723
      %s724 = sphi 0, %s721
      %s725 = sphi 0, %s724
      %s741 = sphi 0, %s725
      %s767 = sphi 0, %s769
      %s770 = sphi 0, %s767
      %s771 = sphi 0, %s770
      %s787 = sphi 0, %s771
      %s813 = sphi 0, %s815
      %s816 = sphi 0, %s813
      %s817 = sphi 0, %s816
      %s833 = sphi 0, %s817
      %s857 = sphi 0, %s859
      %s860 = sphi 0, %s857
      %s861 = sphi 0, %s860
      %s877 = sphi 0, %s861
      %s903 = sphi 0, %s905
      %s906 = sphi 0, %s903
      %s907 = sphi 0, %s906
      %s923 = sphi 0, %s907
      %s949 = sphi 0, %s951
      %s952 = sphi 0, %s949
      %s953 = sphi 0, %s952
      %s969 = sphi 0, %s953
      %s995 = sphi 0, %s997
      %s998 = sphi 0, %s995
      %s999 = sphi 0, %s998
      %s1015 = sphi 0, %s999
      %s1041 = sphi 0, %s1043
      %s1044 = sphi 0, %s1041
      %s1045 = sphi 0, %s1044
      %s1061 = sphi 0, %s1045
      %s1087 = sphi 0, %s1089
      %s1090 = sphi 0, %s1087
      %s1091 = sphi 0, %s1090
      %s1107 = sphi 0, %s1091
      %s1133 = sphi 0, %s1135
      %s1136 = sphi 0, %s1133
      %s1137 = sphi 0, %s1136
      %s1153 = sphi 0, %s1137
      %s1179 = sphi 0, %s1181
      %s1182 = sphi 0, %s1179
      %s1183 = sphi 0, %s1182
      %s1199 = sphi 0, %s1183
      %s1203 = sphi 0, %s1203
      %s1205 = sphi 0, %s1203
      %s1206 = sphi 0, %s1205
      %s1220 = sphi 0, %s1206
      %s1224 = sphi 0, %s1224
      %s1226 = sphi 0, %s1224
      %s1227 = sphi 0, %s1226
      %s1241 = sphi 0, %s1227
      %s1249 = sphi 0, %s1251
      %s1252 = sphi 0, %s1249
      %s1253 = sphi 0, %s1252
      %s1269 = sphi 0, %s1253
    $region4: #{tpu_custom_call.1} parent=1 // loop_header_branch
      %88 = sbr.rel (%p86) target = $region8
    $region5: #{tpu_custom_call.1} parent=1 // loop_body
      %s90 = ssub.s32 %s85, 1
      %s91 = ssub.s32 %s85, 2
      %s98 = sadd.s32 1, %s93
      %p99 = scmp.ge.s32.totalorder %s98, 2
      %s100 = scalar_select %p99, 0, %s98
      %s101 = sadd.s32 1, %s92
      %s102 = scalar_select %p99, %s101, %s92
      %p103 = scmp.ge.s32.totalorder %s102, 2
      %s104 = scalar_select %p103, 0, %s102
      %s105 = smul.u32 %s93, 8
      %s106 = sshra.s32 %s105, 7
      %s107 = sand.u32 %s105, 127
      %s108 = sadd.s32 %s106, %s92
      %s109 = smul.u32 %s108, 128
      %s110 = sshra.s32 %s105, 7
      %s111 = sand.u32 %s105, 127
      %s112 = sadd.s32 %s109, %s111
      %s113 = sld [smem:[#allocation3 + %s112]]
      %s114 = smul.u32 %s100, 8
      %s115 = sshra.s32 %s114, 7
      %s116 = sand.u32 %s114, 127
      %s117 = sadd.s32 %s115, %s104
      %s118 = smul.u32 %s117, 128
      %s119 = sshra.s32 %s114, 7
      %s120 = sand.u32 %s114, 127
      %s121 = sadd.s32 %s118, %s120
      %s122 = sld [smem:[#allocation3 + %s121]]
      %s123 = ssub.s32 %s113, %s122
      %p124 = scmp.eq.s32.totalorder %s123, 0
      %s126 = sadd.s32 %s125, 1
      %s127 = scalar_select %p124, %s125, %s126
      %p130 = pneg %p124
      %p131 = scmp.eq.s32.totalorder %s85, 3
      %p132 = por %p130, %p131
      %p133 = scmp.ne.s32.totalorder %s125, %s128
      %p134 = scmp.eq.s32.totalorder %s85, 0
      %p135 = por %p133, %p134
      %p136 = scmp.ne.s32.totalorder %s125, %s128
      %p137 = scmp.eq.s32.totalorder %s90, 3
      %p138 = por %p136, %p137
      %p139 = scmp.ne.s32.totalorder %s128, %s129
      %p140 = scmp.eq.s32.totalorder %s90, 0
      %p141 = por %p139, %p140
      %p142 = scmp.ne.s32.totalorder %s128, %s129
      %p143 = scmp.eq.s32.totalorder %s91, 3
      %p144 = por %p142, %p143
      %p146 = scmp.ne.s32.totalorder %s129, %s145
      %p147 = scmp.eq.s32.totalorder %s91, 0
      %p148 = por %p146, %p147
      %s149 = smul.u32 %s93, 8
      %s150 = sadd.s32 %s149, 1
      %s151 = sshra.s32 %s150, 7
      %s152 = sand.u32 %s150, 127
      %s153 = sadd.s32 %s151, %s92
      %s154 = smul.u32 %s153, 128
      %s155 = sshra.s32 %s150, 7
      %s156 = sand.u32 %s150, 127
      %s157 = sadd.s32 %s154, %s156
      %s158 = sld [smem:[#allocation3 + %s157]]
      %s159 = smul.u32 %s100, 8
      %s160 = sadd.s32 %s159, 1
      %s161 = sshra.s32 %s160, 7
      %s162 = sand.u32 %s160, 127
      %s163 = sadd.s32 %s161, %s104
      %s164 = smul.u32 %s163, 128
      %s165 = sshra.s32 %s160, 7
      %s166 = sand.u32 %s160, 127
      %s167 = sadd.s32 %s164, %s166
      %s168 = sld [smem:[#allocation3 + %s167]]
      %s169 = ssub.s32 %s158, %s168
      %p170 = scmp.eq.s32.totalorder %s169, 0
      %s172 = sadd.s32 %s171, 1
      %s173 = scalar_select %p170, %s171, %s172
      %p176 = pneg %p170
      %p177 = scmp.eq.s32.totalorder %s85, 3
      %p178 = por %p176, %p177
      %p179 = scmp.ne.s32.totalorder %s171, %s174
      %p180 = scmp.eq.s32.totalorder %s85, 0
      %p181 = por %p179, %p180
      %p182 = scmp.ne.s32.totalorder %s171, %s174
      %p183 = scmp.eq.s32.totalorder %s90, 3
      %p184 = por %p182, %p183
      %p185 = scmp.ne.s32.totalorder %s174, %s175
      %p186 = scmp.eq.s32.totalorder %s90, 0
      %p187 = por %p185, %p186
      %p188 = scmp.ne.s32.totalorder %s174, %s175
      %p189 = scmp.eq.s32.totalorder %s91, 3
      %p190 = por %p188, %p189
      %p192 = scmp.ne.s32.totalorder %s175, %s191
      %p193 = scmp.eq.s32.totalorder %s91, 0
      %p194 = por %p192, %p193
      %s195 = smul.u32 %s93, 8
      %s196 = sadd.s32 %s195, 2
      %s197 = sshra.s32 %s196, 7
      %s198 = sand.u32 %s196, 127
      %s199 = sadd.s32 %s197, %s92
      %s200 = smul.u32 %s199, 128
      %s201 = sshra.s32 %s196, 7
      %s202 = sand.u32 %s196, 127
      %s203 = sadd.s32 %s200, %s202
      %s204 = sld [smem:[#allocation3 + %s203]]
      %s205 = smul.u32 %s100, 8
      %s206 = sadd.s32 %s205, 2
      %s207 = sshra.s32 %s206, 7
      %s208 = sand.u32 %s206, 127
      %s209 = sadd.s32 %s207, %s104
      %s210 = smul.u32 %s209, 128
      %s211 = sshra.s32 %s206, 7
      %s212 = sand.u32 %s206, 127
      %s213 = sadd.s32 %s210, %s212
      %s214 = sld [smem:[#allocation3 + %s213]]
      %s215 = ssub.s32 %s204, %s214
      %p216 = scmp.eq.s32.totalorder %s215, 0
      %s218 = sadd.s32 %s217, 1
      %s219 = scalar_select %p216, %s217, %s218
      %p222 = pneg %p216
      %p223 = scmp.eq.s32.totalorder %s85, 3
      %p224 = por %p222, %p223
      %p225 = scmp.ne.s32.totalorder %s217, %s220
      %p226 = scmp.eq.s32.totalorder %s85, 0
      %p227 = por %p225, %p226
      %p228 = scmp.ne.s32.totalorder %s217, %s220
      %p229 = scmp.eq.s32.totalorder %s90, 3
      %p230 = por %p228, %p229
      %p231 = scmp.ne.s32.totalorder %s220, %s221
      %p232 = scmp.eq.s32.totalorder %s90, 0
      %p233 = por %p231, %p232
      %p234 = scmp.ne.s32.totalorder %s220, %s221
      %p235 = scmp.eq.s32.totalorder %s91, 3
      %p236 = por %p234, %p235
      %p238 = scmp.ne.s32.totalorder %s221, %s237
      %p239 = scmp.eq.s32.totalorder %s91, 0
      %p240 = por %p238, %p239
      %s241 = smul.u32 %s93, 8
      %s242 = sadd.s32 %s241, 3
      %s243 = sshra.s32 %s242, 7
      %s244 = sand.u32 %s242, 127
      %s245 = sadd.s32 %s243, %s92
      %s246 = smul.u32 %s245, 128
      %s247 = sshra.s32 %s242, 7
      %s248 = sand.u32 %s242, 127
      %s249 = sadd.s32 %s246, %s248
      %s250 = sld [smem:[#allocation3 + %s249]]
      %s251 = smul.u32 %s100, 8
      %s252 = sadd.s32 %s251, 3
      %s253 = sshra.s32 %s252, 7
      %s254 = sand.u32 %s252, 127
      %s255 = sadd.s32 %s253, %s104
      %s256 = smul.u32 %s255, 128
      %s257 = sshra.s32 %s252, 7
      %s258 = sand.u32 %s252, 127
      %s259 = sadd.s32 %s256, %s258
      %s260 = sld [smem:[#allocation3 + %s259]]
      %s261 = ssub.s32 %s250, %s260
      %p262 = scmp.eq.s32.totalorder %s261, 0
      %s264 = sadd.s32 %s263, 1
      %s265 = scalar_select %p262, %s263, %s264
      %p268 = pneg %p262
      %p269 = scmp.eq.s32.totalorder %s85, 3
      %p270 = por %p268, %p269
      %p271 = scmp.ne.s32.totalorder %s263, %s266
      %p272 = scmp.eq.s32.totalorder %s85, 0
      %p273 = por %p271, %p272
      %p274 = scmp.ne.s32.totalorder %s263, %s266
      %p275 = scmp.eq.s32.totalorder %s90, 3
      %p276 = por %p274, %p275
      %p277 = scmp.ne.s32.totalorder %s266, %s267
      %p278 = scmp.eq.s32.totalorder %s90, 0
      %p279 = por %p277, %p278
      %p280 = scmp.ne.s32.totalorder %s266, %s267
      %p281 = scmp.eq.s32.totalorder %s91, 3
      %p282 = por %p280, %p281
      %p284 = scmp.ne.s32.totalorder %s267, %s283
      %p285 = scmp.eq.s32.totalorder %s91, 0
      %p286 = por %p284, %p285
      %s287 = smul.u32 %s93, 8
      %s288 = sadd.s32 %s287, 4
      %s289 = sshra.s32 %s288, 7
      %s290 = sand.u32 %s288, 127
      %s291 = sadd.s32 %s289, %s92
      %s292 = smul.u32 %s291, 128
      %s293 = sshra.s32 %s288, 7
      %s294 = sand.u32 %s288, 127
      %s295 = sadd.s32 %s292, %s294
      %s296 = sld [smem:[#allocation3 + %s295]]
      %s297 = smul.u32 %s100, 8
      %s298 = sadd.s32 %s297, 4
      %s299 = sshra.s32 %s298, 7
      %s300 = sand.u32 %s298, 127
      %s301 = sadd.s32 %s299, %s104
      %s302 = smul.u32 %s301, 128
      %s303 = sshra.s32 %s298, 7
      %s304 = sand.u32 %s298, 127
      %s305 = sadd.s32 %s302, %s304
      %s306 = sld [smem:[#allocation3 + %s305]]
      %s307 = ssub.s32 %s296, %s306
      %p308 = scmp.eq.s32.totalorder %s307, 0
      %s310 = sadd.s32 %s309, 1
      %s311 = scalar_select %p308, %s309, %s310
      %p314 = pneg %p308
      %p315 = scmp.eq.s32.totalorder %s85, 3
      %p316 = por %p314, %p315
      %p317 = scmp.ne.s32.totalorder %s309, %s312
      %p318 = scmp.eq.s32.totalorder %s85, 0
      %p319 = por %p317, %p318
      %p320 = scmp.ne.s32.totalorder %s309, %s312
      %p321 = scmp.eq.s32.totalorder %s90, 3
      %p322 = por %p320, %p321
      %p323 = scmp.ne.s32.totalorder %s312, %s313
      %p324 = scmp.eq.s32.totalorder %s90, 0
      %p325 = por %p323, %p324
      %p326 = scmp.ne.s32.totalorder %s312, %s313
      %p327 = scmp.eq.s32.totalorder %s91, 3
      %p328 = por %p326, %p327
      %p330 = scmp.ne.s32.totalorder %s313, %s329
      %p331 = scmp.eq.s32.totalorder %s91, 0
      %p332 = por %p330, %p331
      %s333 = smul.u32 %s93, 8
      %s334 = sadd.s32 %s333, 5
      %s335 = sshra.s32 %s334, 7
      %s336 = sand.u32 %s334, 127
      %s337 = sadd.s32 %s335, %s92
      %s338 = smul.u32 %s337, 128
      %s339 = sshra.s32 %s334, 7
      %s340 = sand.u32 %s334, 127
      %s341 = sadd.s32 %s338, %s340
      %s342 = sld [smem:[#allocation3 + %s341]]
      %s343 = smul.u32 %s100, 8
      %s344 = sadd.s32 %s343, 5
      %s345 = sshra.s32 %s344, 7
      %s346 = sand.u32 %s344, 127
      %s347 = sadd.s32 %s345, %s104
      %s348 = smul.u32 %s347, 128
      %s349 = sshra.s32 %s344, 7
      %s350 = sand.u32 %s344, 127
      %s351 = sadd.s32 %s348, %s350
      %s352 = sld [smem:[#allocation3 + %s351]]
      %s353 = ssub.s32 %s342, %s352
      %p354 = scmp.eq.s32.totalorder %s353, 0
      %s356 = sadd.s32 %s355, 1
      %s357 = scalar_select %p354, %s355, %s356
      %p360 = pneg %p354
      %p361 = scmp.eq.s32.totalorder %s85, 3
      %p362 = por %p360, %p361
      %p363 = scmp.ne.s32.totalorder %s355, %s358
      %p364 = scmp.eq.s32.totalorder %s85, 0
      %p365 = por %p363, %p364
      %p366 = scmp.ne.s32.totalorder %s355, %s358
      %p367 = scmp.eq.s32.totalorder %s90, 3
      %p368 = por %p366, %p367
      %p369 = scmp.ne.s32.totalorder %s358, %s359
      %p370 = scmp.eq.s32.totalorder %s90, 0
      %p371 = por %p369, %p370
      %p372 = scmp.ne.s32.totalorder %s358, %s359
      %p373 = scmp.eq.s32.totalorder %s91, 3
      %p374 = por %p372, %p373
      %p376 = scmp.ne.s32.totalorder %s359, %s375
      %p377 = scmp.eq.s32.totalorder %s91, 0
      %p378 = por %p376, %p377
      %s379 = smul.u32 %s93, 8
      %s380 = sadd.s32 %s379, 6
      %s381 = sshra.s32 %s380, 7
      %s382 = sand.u32 %s380, 127
      %s383 = sadd.s32 %s381, %s92
      %s384 = smul.u32 %s383, 128
      %s385 = sshra.s32 %s380, 7
      %s386 = sand.u32 %s380, 127
      %s387 = sadd.s32 %s384, %s386
      %s388 = sld [smem:[#allocation3 + %s387]]
      %s389 = smul.u32 %s100, 8
      %s390 = sadd.s32 %s389, 6
      %s391 = sshra.s32 %s390, 7
      %s392 = sand.u32 %s390, 127
      %s393 = sadd.s32 %s391, %s104
      %s394 = smul.u32 %s393, 128
      %s395 = sshra.s32 %s390, 7
      %s396 = sand.u32 %s390, 127
      %s397 = sadd.s32 %s394, %s396
      %s398 = sld [smem:[#allocation3 + %s397]]
      %s399 = ssub.s32 %s388, %s398
      %p400 = scmp.eq.s32.totalorder %s399, 0
      %s402 = sadd.s32 %s401, 1
      %s403 = scalar_select %p400, %s401, %s402
      %p406 = pneg %p400
      %p407 = scmp.eq.s32.totalorder %s85, 3
      %p408 = por %p406, %p407
      %p409 = scmp.ne.s32.totalorder %s401, %s404
      %p410 = scmp.eq.s32.totalorder %s85, 0
      %p411 = por %p409, %p410
      %p412 = scmp.ne.s32.totalorder %s401, %s404
      %p413 = scmp.eq.s32.totalorder %s90, 3
      %p414 = por %p412, %p413
      %p415 = scmp.ne.s32.totalorder %s404, %s405
      %p416 = scmp.eq.s32.totalorder %s90, 0
      %p417 = por %p415, %p416
      %p418 = scmp.ne.s32.totalorder %s404, %s405
      %p419 = scmp.eq.s32.totalorder %s91, 3
      %p420 = por %p418, %p419
      %p422 = scmp.ne.s32.totalorder %s405, %s421
      %p423 = scmp.eq.s32.totalorder %s91, 0
      %p424 = por %p422, %p423
      %s425 = smul.u32 %s93, 8
      %s426 = sadd.s32 %s425, 7
      %s427 = sshra.s32 %s426, 7
      %s428 = sand.u32 %s426, 127
      %s429 = sadd.s32 %s427, %s92
      %s430 = smul.u32 %s429, 128
      %s431 = sshra.s32 %s426, 7
      %s432 = sand.u32 %s426, 127
      %s433 = sadd.s32 %s430, %s432
      %s434 = sld [smem:[#allocation3 + %s433]]
      %s435 = smul.u32 %s100, 8
      %s436 = sadd.s32 %s435, 7
      %s437 = sshra.s32 %s436, 7
      %s438 = sand.u32 %s436, 127
      %s439 = sadd.s32 %s437, %s104
      %s440 = smul.u32 %s439, 128
      %s441 = sshra.s32 %s436, 7
      %s442 = sand.u32 %s436, 127
      %s443 = sadd.s32 %s440, %s442
      %s444 = sld [smem:[#allocation3 + %s443]]
      %s445 = ssub.s32 %s434, %s444
      %p446 = scmp.eq.s32.totalorder %s445, 0
      %s448 = sadd.s32 %s447, 1
      %s449 = scalar_select %p446, %s447, %s448
      %p452 = pneg %p446
      %p453 = scmp.eq.s32.totalorder %s85, 3
      %p454 = por %p452, %p453
      %p455 = scmp.ne.s32.totalorder %s447, %s450
      %p456 = scmp.eq.s32.totalorder %s85, 0
      %p457 = por %p455, %p456
      %p458 = scmp.ne.s32.totalorder %s447, %s450
      %p459 = scmp.eq.s32.totalorder %s90, 3
      %p460 = por %p458, %p459
      %p461 = scmp.ne.s32.totalorder %s450, %s451
      %p462 = scmp.eq.s32.totalorder %s90, 0
      %p463 = por %p461, %p462
      %p464 = scmp.ne.s32.totalorder %s450, %s451
      %p465 = scmp.eq.s32.totalorder %s91, 3
      %p466 = por %p464, %p465
      %p468 = scmp.ne.s32.totalorder %s451, %s467
      %p469 = scmp.eq.s32.totalorder %s91, 0
      %p470 = por %p468, %p469
      %s471 = smul.u32 %s93, 8
      %s472 = sshra.s32 %s471, 7
      %s473 = sand.u32 %s471, 127
      %s474 = sadd.s32 %s472, %s92
      %s475 = smul.u32 %s474, 128
      %s476 = sshra.s32 %s471, 7
      %s477 = sand.u32 %s471, 127
      %s478 = sadd.s32 %s475, %s477
      %s479 = sld [smem:[#allocation5 + %s478]]
      %s480 = smul.u32 %s100, 8
      %s481 = sshra.s32 %s480, 7
      %s482 = sand.u32 %s480, 127
      %s483 = sadd.s32 %s481, %s104
      %s484 = smul.u32 %s483, 128
      %s485 = sshra.s32 %s480, 7
      %s486 = sand.u32 %s480, 127
      %s487 = sadd.s32 %s484, %s486
      %s488 = sld [smem:[#allocation5 + %s487]]
      %s489 = ssub.s32 %s479, %s488
      %p490 = scmp.eq.s32.totalorder %s489, 0
      %s492 = sadd.s32 %s491, 1
      %s493 = scalar_select %p490, %s491, %s492
      %p496 = pneg %p490
      %p497 = scmp.eq.s32.totalorder %s85, 3
      %p498 = por %p496, %p497
      %p499 = scmp.ne.s32.totalorder %s491, %s494
      %p500 = scmp.eq.s32.totalorder %s85, 0
      %p501 = por %p499, %p500
      %p502 = scmp.ne.s32.totalorder %s491, %s494
      %p503 = scmp.eq.s32.totalorder %s90, 3
      %p504 = por %p502, %p503
      %p505 = scmp.ne.s32.totalorder %s494, %s495
      %p506 = scmp.eq.s32.totalorder %s90, 0
      %p507 = por %p505, %p506
      %p508 = scmp.ne.s32.totalorder %s494, %s495
      %p509 = scmp.eq.s32.totalorder %s91, 3
      %p510 = por %p508, %p509
      %p512 = scmp.ne.s32.totalorder %s495, %s511
      %p513 = scmp.eq.s32.totalorder %s91, 0
      %p514 = por %p512, %p513
      %s515 = smul.u32 %s93, 8
      %s516 = sadd.s32 %s515, 1
      %s517 = sshra.s32 %s516, 7
      %s518 = sand.u32 %s516, 127
      %s519 = sadd.s32 %s517, %s92
      %s520 = smul.u32 %s519, 128
      %s521 = sshra.s32 %s516, 7
      %s522 = sand.u32 %s516, 127
      %s523 = sadd.s32 %s520, %s522
      %s524 = sld [smem:[#allocation5 + %s523]]
      %s525 = smul.u32 %s100, 8
      %s526 = sadd.s32 %s525, 1
      %s527 = sshra.s32 %s526, 7
      %s528 = sand.u32 %s526, 127
      %s529 = sadd.s32 %s527, %s104
      %s530 = smul.u32 %s529, 128
      %s531 = sshra.s32 %s526, 7
      %s532 = sand.u32 %s526, 127
      %s533 = sadd.s32 %s530, %s532
      %s534 = sld [smem:[#allocation5 + %s533]]
      %s535 = ssub.s32 %s524, %s534
      %p536 = scmp.eq.s32.totalorder %s535, 0
      %s538 = sadd.s32 %s537, 1
      %s539 = scalar_select %p536, %s537, %s538
      %p542 = pneg %p536
      %p543 = scmp.eq.s32.totalorder %s85, 3
      %p544 = por %p542, %p543
      %p545 = scmp.ne.s32.totalorder %s537, %s540
      %p546 = scmp.eq.s32.totalorder %s85, 0
      %p547 = por %p545, %p546
      %p548 = scmp.ne.s32.totalorder %s537, %s540
      %p549 = scmp.eq.s32.totalorder %s90, 3
      %p550 = por %p548, %p549
      %p551 = scmp.ne.s32.totalorder %s540, %s541
      %p552 = scmp.eq.s32.totalorder %s90, 0
      %p553 = por %p551, %p552
      %p554 = scmp.ne.s32.totalorder %s540, %s541
      %p555 = scmp.eq.s32.totalorder %s91, 3
      %p556 = por %p554, %p555
      %p558 = scmp.ne.s32.totalorder %s541, %s557
      %p559 = scmp.eq.s32.totalorder %s91, 0
      %p560 = por %p558, %p559
      %s561 = smul.u32 %s93, 8
      %s562 = sadd.s32 %s561, 2
      %s563 = sshra.s32 %s562, 7
      %s564 = sand.u32 %s562, 127
      %s565 = sadd.s32 %s563, %s92
      %s566 = smul.u32 %s565, 128
      %s567 = sshra.s32 %s562, 7
      %s568 = sand.u32 %s562, 127
      %s569 = sadd.s32 %s566, %s568
      %s570 = sld [smem:[#allocation5 + %s569]]
      %s571 = smul.u32 %s100, 8
      %s572 = sadd.s32 %s571, 2
      %s573 = sshra.s32 %s572, 7
      %s574 = sand.u32 %s572, 127
      %s575 = sadd.s32 %s573, %s104
      %s576 = smul.u32 %s575, 128
      %s577 = sshra.s32 %s572, 7
      %s578 = sand.u32 %s572, 127
      %s579 = sadd.s32 %s576, %s578
      %s580 = sld [smem:[#allocation5 + %s579]]
      %s581 = ssub.s32 %s570, %s580
      %p582 = scmp.eq.s32.totalorder %s581, 0
      %s584 = sadd.s32 %s583, 1
      %s585 = scalar_select %p582, %s583, %s584
      %p588 = pneg %p582
      %p589 = scmp.eq.s32.totalorder %s85, 3
      %p590 = por %p588, %p589
      %p591 = scmp.ne.s32.totalorder %s583, %s586
      %p592 = scmp.eq.s32.totalorder %s85, 0
      %p593 = por %p591, %p592
      %p594 = scmp.ne.s32.totalorder %s583, %s586
      %p595 = scmp.eq.s32.totalorder %s90, 3
      %p596 = por %p594, %p595
      %p597 = scmp.ne.s32.totalorder %s586, %s587
      %p598 = scmp.eq.s32.totalorder %s90, 0
      %p599 = por %p597, %p598
      %p600 = scmp.ne.s32.totalorder %s586, %s587
      %p601 = scmp.eq.s32.totalorder %s91, 3
      %p602 = por %p600, %p601
      %p604 = scmp.ne.s32.totalorder %s587, %s603
      %p605 = scmp.eq.s32.totalorder %s91, 0
      %p606 = por %p604, %p605
      %s607 = smul.u32 %s93, 8
      %s608 = sadd.s32 %s607, 3
      %s609 = sshra.s32 %s608, 7
      %s610 = sand.u32 %s608, 127
      %s611 = sadd.s32 %s609, %s92
      %s612 = smul.u32 %s611, 128
      %s613 = sshra.s32 %s608, 7
      %s614 = sand.u32 %s608, 127
      %s615 = sadd.s32 %s612, %s614
      %s616 = sld [smem:[#allocation5 + %s615]]
      %s617 = smul.u32 %s100, 8
      %s618 = sadd.s32 %s617, 3
      %s619 = sshra.s32 %s618, 7
      %s620 = sand.u32 %s618, 127
      %s621 = sadd.s32 %s619, %s104
      %s622 = smul.u32 %s621, 128
      %s623 = sshra.s32 %s618, 7
      %s624 = sand.u32 %s618, 127
      %s625 = sadd.s32 %s622, %s624
      %s626 = sld [smem:[#allocation5 + %s625]]
      %s627 = ssub.s32 %s616, %s626
      %p628 = scmp.eq.s32.totalorder %s627, 0
      %s630 = sadd.s32 %s629, 1
      %s631 = scalar_select %p628, %s629, %s630
      %p634 = pneg %p628
      %p635 = scmp.eq.s32.totalorder %s85, 3
      %p636 = por %p634, %p635
      %p637 = scmp.ne.s32.totalorder %s629, %s632
      %p638 = scmp.eq.s32.totalorder %s85, 0
      %p639 = por %p637, %p638
      %p640 = scmp.ne.s32.totalorder %s629, %s632
      %p641 = scmp.eq.s32.totalorder %s90, 3
      %p642 = por %p640, %p641
      %p643 = scmp.ne.s32.totalorder %s632, %s633
      %p644 = scmp.eq.s32.totalorder %s90, 0
      %p645 = por %p643, %p644
      %p646 = scmp.ne.s32.totalorder %s632, %s633
      %p647 = scmp.eq.s32.totalorder %s91, 3
      %p648 = por %p646, %p647
      %p650 = scmp.ne.s32.totalorder %s633, %s649
      %p651 = scmp.eq.s32.totalorder %s91, 0
      %p652 = por %p650, %p651
      %s653 = smul.u32 %s93, 8
      %s654 = sadd.s32 %s653, 4
      %s655 = sshra.s32 %s654, 7
      %s656 = sand.u32 %s654, 127
      %s657 = sadd.s32 %s655, %s92
      %s658 = smul.u32 %s657, 128
      %s659 = sshra.s32 %s654, 7
      %s660 = sand.u32 %s654, 127
      %s661 = sadd.s32 %s658, %s660
      %s662 = sld [smem:[#allocation5 + %s661]]
      %s663 = smul.u32 %s100, 8
      %s664 = sadd.s32 %s663, 4
      %s665 = sshra.s32 %s664, 7
      %s666 = sand.u32 %s664, 127
      %s667 = sadd.s32 %s665, %s104
      %s668 = smul.u32 %s667, 128
      %s669 = sshra.s32 %s664, 7
      %s670 = sand.u32 %s664, 127
      %s671 = sadd.s32 %s668, %s670
      %s672 = sld [smem:[#allocation5 + %s671]]
      %s673 = ssub.s32 %s662, %s672
      %p674 = scmp.eq.s32.totalorder %s673, 0
      %s676 = sadd.s32 %s675, 1
      %s677 = scalar_select %p674, %s675, %s676
      %p680 = pneg %p674
      %p681 = scmp.eq.s32.totalorder %s85, 3
      %p682 = por %p680, %p681
      %p683 = scmp.ne.s32.totalorder %s675, %s678
      %p684 = scmp.eq.s32.totalorder %s85, 0
      %p685 = por %p683, %p684
      %p686 = scmp.ne.s32.totalorder %s675, %s678
      %p687 = scmp.eq.s32.totalorder %s90, 3
      %p688 = por %p686, %p687
      %p689 = scmp.ne.s32.totalorder %s678, %s679
      %p690 = scmp.eq.s32.totalorder %s90, 0
      %p691 = por %p689, %p690
      %p692 = scmp.ne.s32.totalorder %s678, %s679
      %p693 = scmp.eq.s32.totalorder %s91, 3
      %p694 = por %p692, %p693
      %p696 = scmp.ne.s32.totalorder %s679, %s695
      %p697 = scmp.eq.s32.totalorder %s91, 0
      %p698 = por %p696, %p697
      %s699 = smul.u32 %s93, 8
      %s700 = sadd.s32 %s699, 5
      %s701 = sshra.s32 %s700, 7
      %s702 = sand.u32 %s700, 127
      %s703 = sadd.s32 %s701, %s92
      %s704 = smul.u32 %s703, 128
      %s705 = sshra.s32 %s700, 7
      %s706 = sand.u32 %s700, 127
      %s707 = sadd.s32 %s704, %s706
      %s708 = sld [smem:[#allocation5 + %s707]]
      %s709 = smul.u32 %s100, 8
      %s710 = sadd.s32 %s709, 5
      %s711 = sshra.s32 %s710, 7
      %s712 = sand.u32 %s710, 127
      %s713 = sadd.s32 %s711, %s104
      %s714 = smul.u32 %s713, 128
      %s715 = sshra.s32 %s710, 7
      %s716 = sand.u32 %s710, 127
      %s717 = sadd.s32 %s714, %s716
      %s718 = sld [smem:[#allocation5 + %s717]]
      %s719 = ssub.s32 %s708, %s718
      %p720 = scmp.eq.s32.totalorder %s719, 0
      %s722 = sadd.s32 %s721, 1
      %s723 = scalar_select %p720, %s721, %s722
      %p726 = pneg %p720
      %p727 = scmp.eq.s32.totalorder %s85, 3
      %p728 = por %p726, %p727
      %p729 = scmp.ne.s32.totalorder %s721, %s724
      %p730 = scmp.eq.s32.totalorder %s85, 0
      %p731 = por %p729, %p730
      %p732 = scmp.ne.s32.totalorder %s721, %s724
      %p733 = scmp.eq.s32.totalorder %s90, 3
      %p734 = por %p732, %p733
      %p735 = scmp.ne.s32.totalorder %s724, %s725
      %p736 = scmp.eq.s32.totalorder %s90, 0
      %p737 = por %p735, %p736
      %p738 = scmp.ne.s32.totalorder %s724, %s725
      %p739 = scmp.eq.s32.totalorder %s91, 3
      %p740 = por %p738, %p739
      %p742 = scmp.ne.s32.totalorder %s725, %s741
      %p743 = scmp.eq.s32.totalorder %s91, 0
      %p744 = por %p742, %p743
      %s745 = smul.u32 %s93, 8
      %s746 = sadd.s32 %s745, 6
      %s747 = sshra.s32 %s746, 7
      %s748 = sand.u32 %s746, 127
      %s749 = sadd.s32 %s747, %s92
      %s750 = smul.u32 %s749, 128
      %s751 = sshra.s32 %s746, 7
      %s752 = sand.u32 %s746, 127
      %s753 = sadd.s32 %s750, %s752
      %s754 = sld [smem:[#allocation5 + %s753]]
      %s755 = smul.u32 %s100, 8
      %s756 = sadd.s32 %s755, 6
      %s757 = sshra.s32 %s756, 7
      %s758 = sand.u32 %s756, 127
      %s759 = sadd.s32 %s757, %s104
      %s760 = smul.u32 %s759, 128
      %s761 = sshra.s32 %s756, 7
      %s762 = sand.u32 %s756, 127
      %s763 = sadd.s32 %s760, %s762
      %s764 = sld [smem:[#allocation5 + %s763]]
      %s765 = ssub.s32 %s754, %s764
      %p766 = scmp.eq.s32.totalorder %s765, 0
      %s768 = sadd.s32 %s767, 1
      %s769 = scalar_select %p766, %s767, %s768
      %p772 = pneg %p766
      %p773 = scmp.eq.s32.totalorder %s85, 3
      %p774 = por %p772, %p773
      %p775 = scmp.ne.s32.totalorder %s767, %s770
      %p776 = scmp.eq.s32.totalorder %s85, 0
      %p777 = por %p775, %p776
      %p778 = scmp.ne.s32.totalorder %s767, %s770
      %p779 = scmp.eq.s32.totalorder %s90, 3
      %p780 = por %p778, %p779
      %p781 = scmp.ne.s32.totalorder %s770, %s771
      %p782 = scmp.eq.s32.totalorder %s90, 0
      %p783 = por %p781, %p782
      %p784 = scmp.ne.s32.totalorder %s770, %s771
      %p785 = scmp.eq.s32.totalorder %s91, 3
      %p786 = por %p784, %p785
      %p788 = scmp.ne.s32.totalorder %s771, %s787
      %p789 = scmp.eq.s32.totalorder %s91, 0
      %p790 = por %p788, %p789
      %s791 = smul.u32 %s93, 8
      %s792 = sadd.s32 %s791, 7
      %s793 = sshra.s32 %s792, 7
      %s794 = sand.u32 %s792, 127
      %s795 = sadd.s32 %s793, %s92
      %s796 = smul.u32 %s795, 128
      %s797 = sshra.s32 %s792, 7
      %s798 = sand.u32 %s792, 127
      %s799 = sadd.s32 %s796, %s798
      %s800 = sld [smem:[#allocation5 + %s799]]
      %s801 = smul.u32 %s100, 8
      %s802 = sadd.s32 %s801, 7
      %s803 = sshra.s32 %s802, 7
      %s804 = sand.u32 %s802, 127
      %s805 = sadd.s32 %s803, %s104
      %s806 = smul.u32 %s805, 128
      %s807 = sshra.s32 %s802, 7
      %s808 = sand.u32 %s802, 127
      %s809 = sadd.s32 %s806, %s808
      %s810 = sld [smem:[#allocation5 + %s809]]
      %s811 = ssub.s32 %s800, %s810
      %p812 = scmp.eq.s32.totalorder %s811, 0
      %s814 = sadd.s32 %s813, 1
      %s815 = scalar_select %p812, %s813, %s814
      %p818 = pneg %p812
      %p819 = scmp.eq.s32.totalorder %s85, 3
      %p820 = por %p818, %p819
      %p821 = scmp.ne.s32.totalorder %s813, %s816
      %p822 = scmp.eq.s32.totalorder %s85, 0
      %p823 = por %p821, %p822
      %p824 = scmp.ne.s32.totalorder %s813, %s816
      %p825 = scmp.eq.s32.totalorder %s90, 3
      %p826 = por %p824, %p825
      %p827 = scmp.ne.s32.totalorder %s816, %s817
      %p828 = scmp.eq.s32.totalorder %s90, 0
      %p829 = por %p827, %p828
      %p830 = scmp.ne.s32.totalorder %s816, %s817
      %p831 = scmp.eq.s32.totalorder %s91, 3
      %p832 = por %p830, %p831
      %p834 = scmp.ne.s32.totalorder %s817, %s833
      %p835 = scmp.eq.s32.totalorder %s91, 0
      %p836 = por %p834, %p835
      %s837 = smul.u32 %s93, 8
      %s838 = sshra.s32 %s837, 7
      %s839 = sand.u32 %s837, 127
      %s840 = sadd.s32 %s838, %s92
      %s841 = smul.u32 %s840, 128
      %s842 = sshra.s32 %s837, 7
      %s843 = sand.u32 %s837, 127
      %s844 = sadd.s32 %s841, %s843
      %s845 = sld [smem:[#allocation4 + %s844]]
      %s846 = smul.u32 %s100, 8
      %s847 = sshra.s32 %s846, 7
      %s848 = sand.u32 %s846, 127
      %s849 = sadd.s32 %s847, %s104
      %s850 = smul.u32 %s849, 128
      %s851 = sshra.s32 %s846, 7
      %s852 = sand.u32 %s846, 127
      %s853 = sadd.s32 %s850, %s852
      %s854 = sld [smem:[#allocation4 + %s853]]
      %s855 = ssub.s32 %s845, %s854
      %p856 = scmp.eq.s32.totalorder %s855, 0
      %s858 = sadd.s32 %s857, 1
      %s859 = scalar_select %p856, %s857, %s858
      %p862 = pneg %p856
      %p863 = scmp.eq.s32.totalorder %s85, 3
      %p864 = por %p862, %p863
      %p865 = scmp.ne.s32.totalorder %s857, %s860
      %p866 = scmp.eq.s32.totalorder %s85, 0
      %p867 = por %p865, %p866
      %p868 = scmp.ne.s32.totalorder %s857, %s860
      %p869 = scmp.eq.s32.totalorder %s90, 3
      %p870 = por %p868, %p869
      %p871 = scmp.ne.s32.totalorder %s860, %s861
      %p872 = scmp.eq.s32.totalorder %s90, 0
      %p873 = por %p871, %p872
      %p874 = scmp.ne.s32.totalorder %s860, %s861
      %p875 = scmp.eq.s32.totalorder %s91, 3
      %p876 = por %p874, %p875
      %p878 = scmp.ne.s32.totalorder %s861, %s877
      %p879 = scmp.eq.s32.totalorder %s91, 0
      %p880 = por %p878, %p879
      %s881 = smul.u32 %s93, 8
      %s882 = sadd.s32 %s881, 1
      %s883 = sshra.s32 %s882, 7
      %s884 = sand.u32 %s882, 127
      %s885 = sadd.s32 %s883, %s92
      %s886 = smul.u32 %s885, 128
      %s887 = sshra.s32 %s882, 7
      %s888 = sand.u32 %s882, 127
      %s889 = sadd.s32 %s886, %s888
      %s890 = sld [smem:[#allocation4 + %s889]]
      %s891 = smul.u32 %s100, 8
      %s892 = sadd.s32 %s891, 1
      %s893 = sshra.s32 %s892, 7
      %s894 = sand.u32 %s892, 127
      %s895 = sadd.s32 %s893, %s104
      %s896 = smul.u32 %s895, 128
      %s897 = sshra.s32 %s892, 7
      %s898 = sand.u32 %s892, 127
      %s899 = sadd.s32 %s896, %s898
      %s900 = sld [smem:[#allocation4 + %s899]]
      %s901 = ssub.s32 %s890, %s900
      %p902 = scmp.eq.s32.totalorder %s901, 0
      %s904 = sadd.s32 %s903, 1
      %s905 = scalar_select %p902, %s903, %s904
      %p908 = pneg %p902
      %p909 = scmp.eq.s32.totalorder %s85, 3
      %p910 = por %p908, %p909
      %p911 = scmp.ne.s32.totalorder %s903, %s906
      %p912 = scmp.eq.s32.totalorder %s85, 0
      %p913 = por %p911, %p912
      %p914 = scmp.ne.s32.totalorder %s903, %s906
      %p915 = scmp.eq.s32.totalorder %s90, 3
      %p916 = por %p914, %p915
      %p917 = scmp.ne.s32.totalorder %s906, %s907
      %p918 = scmp.eq.s32.totalorder %s90, 0
      %p919 = por %p917, %p918
      %p920 = scmp.ne.s32.totalorder %s906, %s907
      %p921 = scmp.eq.s32.totalorder %s91, 3
      %p922 = por %p920, %p921
      %p924 = scmp.ne.s32.totalorder %s907, %s923
      %p925 = scmp.eq.s32.totalorder %s91, 0
      %p926 = por %p924, %p925
      %s927 = smul.u32 %s93, 8
      %s928 = sadd.s32 %s927, 2
      %s929 = sshra.s32 %s928, 7
      %s930 = sand.u32 %s928, 127
      %s931 = sadd.s32 %s929, %s92
      %s932 = smul.u32 %s931, 128
      %s933 = sshra.s32 %s928, 7
      %s934 = sand.u32 %s928, 127
      %s935 = sadd.s32 %s932, %s934
      %s936 = sld [smem:[#allocation4 + %s935]]
      %s937 = smul.u32 %s100, 8
      %s938 = sadd.s32 %s937, 2
      %s939 = sshra.s32 %s938, 7
      %s940 = sand.u32 %s938, 127
      %s941 = sadd.s32 %s939, %s104
      %s942 = smul.u32 %s941, 128
      %s943 = sshra.s32 %s938, 7
      %s944 = sand.u32 %s938, 127
      %s945 = sadd.s32 %s942, %s944
      %s946 = sld [smem:[#allocation4 + %s945]]
      %s947 = ssub.s32 %s936, %s946
      %p948 = scmp.eq.s32.totalorder %s947, 0
      %s950 = sadd.s32 %s949, 1
      %s951 = scalar_select %p948, %s949, %s950
      %p954 = pneg %p948
      %p955 = scmp.eq.s32.totalorder %s85, 3
      %p956 = por %p954, %p955
      %p957 = scmp.ne.s32.totalorder %s949, %s952
      %p958 = scmp.eq.s32.totalorder %s85, 0
      %p959 = por %p957, %p958
      %p960 = scmp.ne.s32.totalorder %s949, %s952
      %p961 = scmp.eq.s32.totalorder %s90, 3
      %p962 = por %p960, %p961
      %p963 = scmp.ne.s32.totalorder %s952, %s953
      %p964 = scmp.eq.s32.totalorder %s90, 0
      %p965 = por %p963, %p964
      %p966 = scmp.ne.s32.totalorder %s952, %s953
      %p967 = scmp.eq.s32.totalorder %s91, 3
      %p968 = por %p966, %p967
      %p970 = scmp.ne.s32.totalorder %s953, %s969
      %p971 = scmp.eq.s32.totalorder %s91, 0
      %p972 = por %p970, %p971
      %s973 = smul.u32 %s93, 8
      %s974 = sadd.s32 %s973, 3
      %s975 = sshra.s32 %s974, 7
      %s976 = sand.u32 %s974, 127
      %s977 = sadd.s32 %s975, %s92
      %s978 = smul.u32 %s977, 128
      %s979 = sshra.s32 %s974, 7
      %s980 = sand.u32 %s974, 127
      %s981 = sadd.s32 %s978, %s980
      %s982 = sld [smem:[#allocation4 + %s981]]
      %s983 = smul.u32 %s100, 8
      %s984 = sadd.s32 %s983, 3
      %s985 = sshra.s32 %s984, 7
      %s986 = sand.u32 %s984, 127
      %s987 = sadd.s32 %s985, %s104
      %s988 = smul.u32 %s987, 128
      %s989 = sshra.s32 %s984, 7
      %s990 = sand.u32 %s984, 127
      %s991 = sadd.s32 %s988, %s990
      %s992 = sld [smem:[#allocation4 + %s991]]
      %s993 = ssub.s32 %s982, %s992
      %p994 = scmp.eq.s32.totalorder %s993, 0
      %s996 = sadd.s32 %s995, 1
      %s997 = scalar_select %p994, %s995, %s996
      %p1000 = pneg %p994
      %p1001 = scmp.eq.s32.totalorder %s85, 3
      %p1002 = por %p1000, %p1001
      %p1003 = scmp.ne.s32.totalorder %s995, %s998
      %p1004 = scmp.eq.s32.totalorder %s85, 0
      %p1005 = por %p1003, %p1004
      %p1006 = scmp.ne.s32.totalorder %s995, %s998
      %p1007 = scmp.eq.s32.totalorder %s90, 3
      %p1008 = por %p1006, %p1007
      %p1009 = scmp.ne.s32.totalorder %s998, %s999
      %p1010 = scmp.eq.s32.totalorder %s90, 0
      %p1011 = por %p1009, %p1010
      %p1012 = scmp.ne.s32.totalorder %s998, %s999
      %p1013 = scmp.eq.s32.totalorder %s91, 3
      %p1014 = por %p1012, %p1013
      %p1016 = scmp.ne.s32.totalorder %s999, %s1015
      %p1017 = scmp.eq.s32.totalorder %s91, 0
      %p1018 = por %p1016, %p1017
      %s1019 = smul.u32 %s93, 8
      %s1020 = sadd.s32 %s1019, 4
      %s1021 = sshra.s32 %s1020, 7
      %s1022 = sand.u32 %s1020, 127
      %s1023 = sadd.s32 %s1021, %s92
      %s1024 = smul.u32 %s1023, 128
      %s1025 = sshra.s32 %s1020, 7
      %s1026 = sand.u32 %s1020, 127
      %s1027 = sadd.s32 %s1024, %s1026
      %s1028 = sld [smem:[#allocation4 + %s1027]]
      %s1029 = smul.u32 %s100, 8
      %s1030 = sadd.s32 %s1029, 4
      %s1031 = sshra.s32 %s1030, 7
      %s1032 = sand.u32 %s1030, 127
      %s1033 = sadd.s32 %s1031, %s104
      %s1034 = smul.u32 %s1033, 128
      %s1035 = sshra.s32 %s1030, 7
      %s1036 = sand.u32 %s1030, 127
      %s1037 = sadd.s32 %s1034, %s1036
      %s1038 = sld [smem:[#allocation4 + %s1037]]
      %s1039 = ssub.s32 %s1028, %s1038
      %p1040 = scmp.eq.s32.totalorder %s1039, 0
      %s1042 = sadd.s32 %s1041, 1
      %s1043 = scalar_select %p1040, %s1041, %s1042
      %p1046 = pneg %p1040
      %p1047 = scmp.eq.s32.totalorder %s85, 3
      %p1048 = por %p1046, %p1047
      %p1049 = scmp.ne.s32.totalorder %s1041, %s1044
      %p1050 = scmp.eq.s32.totalorder %s85, 0
      %p1051 = por %p1049, %p1050
      %p1052 = scmp.ne.s32.totalorder %s1041, %s1044
      %p1053 = scmp.eq.s32.totalorder %s90, 3
      %p1054 = por %p1052, %p1053
      %p1055 = scmp.ne.s32.totalorder %s1044, %s1045
      %p1056 = scmp.eq.s32.totalorder %s90, 0
      %p1057 = por %p1055, %p1056
      %p1058 = scmp.ne.s32.totalorder %s1044, %s1045
      %p1059 = scmp.eq.s32.totalorder %s91, 3
      %p1060 = por %p1058, %p1059
      %p1062 = scmp.ne.s32.totalorder %s1045, %s1061
      %p1063 = scmp.eq.s32.totalorder %s91, 0
      %p1064 = por %p1062, %p1063
      %s1065 = smul.u32 %s93, 8
      %s1066 = sadd.s32 %s1065, 5
      %s1067 = sshra.s32 %s1066, 7
      %s1068 = sand.u32 %s1066, 127
      %s1069 = sadd.s32 %s1067, %s92
      %s1070 = smul.u32 %s1069, 128
      %s1071 = sshra.s32 %s1066, 7
      %s1072 = sand.u32 %s1066, 127
      %s1073 = sadd.s32 %s1070, %s1072
      %s1074 = sld [smem:[#allocation4 + %s1073]]
      %s1075 = smul.u32 %s100, 8
      %s1076 = sadd.s32 %s1075, 5
      %s1077 = sshra.s32 %s1076, 7
      %s1078 = sand.u32 %s1076, 127
      %s1079 = sadd.s32 %s1077, %s104
      %s1080 = smul.u32 %s1079, 128
      %s1081 = sshra.s32 %s1076, 7
      %s1082 = sand.u32 %s1076, 127
      %s1083 = sadd.s32 %s1080, %s1082
      %s1084 = sld [smem:[#allocation4 + %s1083]]
      %s1085 = ssub.s32 %s1074, %s1084
      %p1086 = scmp.eq.s32.totalorder %s1085, 0
      %s1088 = sadd.s32 %s1087, 1
      %s1089 = scalar_select %p1086, %s1087, %s1088
      %p1092 = pneg %p1086
      %p1093 = scmp.eq.s32.totalorder %s85, 3
      %p1094 = por %p1092, %p1093
      %p1095 = scmp.ne.s32.totalorder %s1087, %s1090
      %p1096 = scmp.eq.s32.totalorder %s85, 0
      %p1097 = por %p1095, %p1096
      %p1098 = scmp.ne.s32.totalorder %s1087, %s1090
      %p1099 = scmp.eq.s32.totalorder %s90, 3
      %p1100 = por %p1098, %p1099
      %p1101 = scmp.ne.s32.totalorder %s1090, %s1091
      %p1102 = scmp.eq.s32.totalorder %s90, 0
      %p1103 = por %p1101, %p1102
      %p1104 = scmp.ne.s32.totalorder %s1090, %s1091
      %p1105 = scmp.eq.s32.totalorder %s91, 3
      %p1106 = por %p1104, %p1105
      %p1108 = scmp.ne.s32.totalorder %s1091, %s1107
      %p1109 = scmp.eq.s32.totalorder %s91, 0
      %p1110 = por %p1108, %p1109
      %s1111 = smul.u32 %s93, 8
      %s1112 = sadd.s32 %s1111, 6
      %s1113 = sshra.s32 %s1112, 7
      %s1114 = sand.u32 %s1112, 127
      %s1115 = sadd.s32 %s1113, %s92
      %s1116 = smul.u32 %s1115, 128
      %s1117 = sshra.s32 %s1112, 7
      %s1118 = sand.u32 %s1112, 127
      %s1119 = sadd.s32 %s1116, %s1118
      %s1120 = sld [smem:[#allocation4 + %s1119]]
      %s1121 = smul.u32 %s100, 8
      %s1122 = sadd.s32 %s1121, 6
      %s1123 = sshra.s32 %s1122, 7
      %s1124 = sand.u32 %s1122, 127
      %s1125 = sadd.s32 %s1123, %s104
      %s1126 = smul.u32 %s1125, 128
      %s1127 = sshra.s32 %s1122, 7
      %s1128 = sand.u32 %s1122, 127
      %s1129 = sadd.s32 %s1126, %s1128
      %s1130 = sld [smem:[#allocation4 + %s1129]]
      %s1131 = ssub.s32 %s1120, %s1130
      %p1132 = scmp.eq.s32.totalorder %s1131, 0
      %s1134 = sadd.s32 %s1133, 1
      %s1135 = scalar_select %p1132, %s1133, %s1134
      %p1138 = pneg %p1132
      %p1139 = scmp.eq.s32.totalorder %s85, 3
      %p1140 = por %p1138, %p1139
      %p1141 = scmp.ne.s32.totalorder %s1133, %s1136
      %p1142 = scmp.eq.s32.totalorder %s85, 0
      %p1143 = por %p1141, %p1142
      %p1144 = scmp.ne.s32.totalorder %s1133, %s1136
      %p1145 = scmp.eq.s32.totalorder %s90, 3
      %p1146 = por %p1144, %p1145
      %p1147 = scmp.ne.s32.totalorder %s1136, %s1137
      %p1148 = scmp.eq.s32.totalorder %s90, 0
      %p1149 = por %p1147, %p1148
      %p1150 = scmp.ne.s32.totalorder %s1136, %s1137
      %p1151 = scmp.eq.s32.totalorder %s91, 3
      %p1152 = por %p1150, %p1151
      %p1154 = scmp.ne.s32.totalorder %s1137, %s1153
      %p1155 = scmp.eq.s32.totalorder %s91, 0
      %p1156 = por %p1154, %p1155
      %s1157 = smul.u32 %s93, 8
      %s1158 = sadd.s32 %s1157, 7
      %s1159 = sshra.s32 %s1158, 7
      %s1160 = sand.u32 %s1158, 127
      %s1161 = sadd.s32 %s1159, %s92
      %s1162 = smul.u32 %s1161, 128
      %s1163 = sshra.s32 %s1158, 7
      %s1164 = sand.u32 %s1158, 127
      %s1165 = sadd.s32 %s1162, %s1164
      %s1166 = sld [smem:[#allocation4 + %s1165]]
      %s1167 = smul.u32 %s100, 8
      %s1168 = sadd.s32 %s1167, 7
      %s1169 = sshra.s32 %s1168, 7
      %s1170 = sand.u32 %s1168, 127
      %s1171 = sadd.s32 %s1169, %s104
      %s1172 = smul.u32 %s1171, 128
      %s1173 = sshra.s32 %s1168, 7
      %s1174 = sand.u32 %s1168, 127
      %s1175 = sadd.s32 %s1172, %s1174
      %s1176 = sld [smem:[#allocation4 + %s1175]]
      %s1177 = ssub.s32 %s1166, %s1176
      %p1178 = scmp.eq.s32.totalorder %s1177, 0
      %s1180 = sadd.s32 %s1179, 1
      %s1181 = scalar_select %p1178, %s1179, %s1180
      %p1184 = pneg %p1178
      %p1185 = scmp.eq.s32.totalorder %s85, 3
      %p1186 = por %p1184, %p1185
      %p1187 = scmp.ne.s32.totalorder %s1179, %s1182
      %p1188 = scmp.eq.s32.totalorder %s85, 0
      %p1189 = por %p1187, %p1188
      %p1190 = scmp.ne.s32.totalorder %s1179, %s1182
      %p1191 = scmp.eq.s32.totalorder %s90, 3
      %p1192 = por %p1190, %p1191
      %p1193 = scmp.ne.s32.totalorder %s1182, %s1183
      %p1194 = scmp.eq.s32.totalorder %s90, 0
      %p1195 = por %p1193, %p1194
      %p1196 = scmp.ne.s32.totalorder %s1182, %s1183
      %p1197 = scmp.eq.s32.totalorder %s91, 3
      %p1198 = por %p1196, %p1197
      %p1200 = scmp.ne.s32.totalorder %s1183, %s1199
      %p1201 = scmp.eq.s32.totalorder %s91, 0
      %p1202 = por %p1200, %p1201
      %s1204 = sadd.s32 %s1203, 1
      %p1207 = scmp.eq.s32.totalorder %s85, 3
      %p1208 = scmp.ne.s32.totalorder %s1203, %s1205
      %p1209 = scmp.eq.s32.totalorder %s85, 0
      %p1210 = por %p1208, %p1209
      %p1211 = scmp.ne.s32.totalorder %s1203, %s1205
      %p1212 = scmp.eq.s32.totalorder %s90, 3
      %p1213 = por %p1211, %p1212
      %p1214 = scmp.ne.s32.totalorder %s1205, %s1206
      %p1215 = scmp.eq.s32.totalorder %s90, 0
      %p1216 = por %p1214, %p1215
      %p1217 = scmp.ne.s32.totalorder %s1205, %s1206
      %p1218 = scmp.eq.s32.totalorder %s91, 3
      %p1219 = por %p1217, %p1218
      %p1221 = scmp.ne.s32.totalorder %s1206, %s1220
      %p1222 = scmp.eq.s32.totalorder %s91, 0
      %p1223 = por %p1221, %p1222
      %s1225 = sadd.s32 %s1224, 1
      %p1228 = scmp.eq.s32.totalorder %s85, 3
      %p1229 = scmp.ne.s32.totalorder %s1224, %s1226
      %p1230 = scmp.eq.s32.totalorder %s85, 0
      %p1231 = por %p1229, %p1230
      %p1232 = scmp.ne.s32.totalorder %s1224, %s1226
      %p1233 = scmp.eq.s32.totalorder %s90, 3
      %p1234 = por %p1232, %p1233
      %p1235 = scmp.ne.s32.totalorder %s1226, %s1227
      %p1236 = scmp.eq.s32.totalorder %s90, 0
      %p1237 = por %p1235, %p1236
      %p1238 = scmp.ne.s32.totalorder %s1226, %s1227
      %p1239 = scmp.eq.s32.totalorder %s91, 3
      %p1240 = por %p1238, %p1239
      %p1242 = scmp.ne.s32.totalorder %s1227, %s1241
      %p1243 = scmp.eq.s32.totalorder %s91, 0
      %p1244 = por %p1242, %p1243
      %s1245 = ssub.s32 %s92, %s104
      %s1246 = ssub.s32 %s93, %s100
      %s1247 = sor.u32 %s1245, %s1246
      %p1248 = scmp.eq.s32.totalorder %s1247, 0
      %s1250 = sadd.s32 %s1249, 1
      %s1251 = scalar_select %p1248, %s1249, %s1250
      %p1254 = pneg %p1248
      %p1255 = scmp.eq.s32.totalorder %s85, 3
      %p1256 = por %p1254, %p1255
      %p1257 = scmp.ne.s32.totalorder %s1249, %s1252
      %p1258 = scmp.eq.s32.totalorder %s85, 0
      %p1259 = por %p1257, %p1258
      %p1260 = scmp.ne.s32.totalorder %s1249, %s1252
      %p1261 = scmp.eq.s32.totalorder %s90, 3
      %p1262 = por %p1260, %p1261
      %p1263 = scmp.ne.s32.totalorder %s1252, %s1253
      %p1264 = scmp.eq.s32.totalorder %s90, 0
      %p1265 = por %p1263, %p1264
      %p1266 = scmp.ne.s32.totalorder %s1252, %s1253
      %p1267 = scmp.eq.s32.totalorder %s91, 3
      %p1268 = por %p1266, %p1267
      %p1270 = scmp.ne.s32.totalorder %s1253, %s1269
      %p1271 = scmp.eq.s32.totalorder %s91, 0
      %p1272 = por %p1270, %p1271
      %p1273 = scmp.le.s32.totalorder 1, %s85
      %p1274 = scmp.lt.s32.totalorder %s85, 5
      %p1275 = pnand %p1273, %p1274
      %p1276 = pneg %p1275
      // Predicated region
      $region9: #{tpu_custom_call.1} parent=5 // pred_check
        _
      $region10: #{tpu_custom_call.1} parent=5 // pred_check_branch
        %1278 = sbr.rel (%p1275) target = $region12
      $region11: #{tpu_custom_call.1} parent=5 // pred_region
        %s1279 = ssub.s32 %s85, 1
        // Predicated region
        $region13: #{tpu_custom_call.1} parent=11 // pred_check
          %p1280 = pneg %p1216
        $region14: #{tpu_custom_call.1} parent=11 // pred_check_branch
          %1282 = sbr.rel (%p1280) target = $region16
        $region15: #{tpu_custom_call.1} parent=11 // pred_region
          _
        $region16: #{tpu_custom_call.1} parent=11 // pred_fallthru
          _
        // Predicated region
        $region17: #{tpu_custom_call.1} parent=11 // pred_check
          %p1283 = pneg %p1237
        $region18: #{tpu_custom_call.1} parent=11 // pred_check_branch
          %1285 = sbr.rel (%p1283) target = $region20
        $region19: #{tpu_custom_call.1} parent=11 // pred_region
          _
        $region20: #{tpu_custom_call.1} parent=11 // pred_fallthru
          _
      $region12: #{tpu_custom_call.1} parent=5 // pred_fallthru
        _
      %p1286 = scmp.lt.s32.totalorder %s85, 4
      // Predicated region
      $region21: #{tpu_custom_call.1} parent=5 // pred_check
        %p1287 = pneg %p1286
      $region22: #{tpu_custom_call.1} parent=5 // pred_check_branch
        %1289 = sbr.rel (%p1287) target = $region24
      $region23: #{tpu_custom_call.1} parent=5 // pred_region
        // Predicated region
        $region25: #{tpu_custom_call.1} parent=23 // pred_check
          %p1290 = pneg %p135
        $region26: #{tpu_custom_call.1} parent=23 // pred_check_branch
          %1292 = sbr.rel (%p1290) target = $region28
        $region27: #{tpu_custom_call.1} parent=23 // pred_region
          %s1293 = smul.u32 %s93, 8
          %s1294 = sshra.s32 %s1293, 7
          %s1295 = sand.u32 %s1293, 127
          %s1296 = sadd.s32 %s1294, %s92
          %s1297 = smul.u32 %s1296, 128
          %s1298 = sshra.s32 %s1293, 7
          %s1299 = sand.u32 %s1293, 127
          %s1300 = sadd.s32 %s1297, %s1299
          %s1301 = sld [smem:[#allocation3 + %s1300]]
          %p1302 = scmp.lt.s32.totalorder %s1301, 63
          %s1303 = scalar_select %p1302, %s1301, 63
          %s1304 = scalar_lea.vmem %s9, %s1303
          %s1305 = smul.u32 %s93, 8
          %s1306 = sshra.s32 %s1305, 7
          %s1307 = sand.u32 %s1305, 127
          %s1308 = sadd.s32 %s1306, %s92
          %s1309 = smul.u32 %s1308, 128
          %s1310 = sshra.s32 %s1305, 7
          %s1311 = sand.u32 %s1305, 127
          %s1312 = sadd.s32 %s1309, %s1311
          %s1313 = sld [smem:[#allocation3 + %s1312]]
        $region28: #{tpu_custom_call.1} parent=23 // pred_fallthru
          _
        // Predicated region
        $region29: #{tpu_custom_call.1} parent=23 // pred_check
          %p1314 = pneg %p181
        $region30: #{tpu_custom_call.1} parent=23 // pred_check_branch
          %1316 = sbr.rel (%p1314) target = $region32
        $region31: #{tpu_custom_call.1} parent=23 // pred_region
          %s1317 = smul.u32 %s93, 8
          %s1318 = sadd.s32 %s1317, 1
          %s1319 = sshra.s32 %s1318, 7
          %s1320 = sand.u32 %s1318, 127
          %s1321 = sadd.s32 %s1319, %s92
          %s1322 = smul.u32 %s1321, 128
          %s1323 = sshra.s32 %s1318, 7
          %s1324 = sand.u32 %s1318, 127
          %s1325 = sadd.s32 %s1322, %s1324
          %s1326 = sld [smem:[#allocation3 + %s1325]]
          %p1327 = scmp.lt.s32.totalorder %s1326, 63
          %s1328 = scalar_select %p1327, %s1326, 63
          %s1329 = scalar_lea.vmem %s11, %s1328
          %s1330 = smul.u32 %s93, 8
          %s1331 = sadd.s32 %s1330, 1
          %s1332 = sshra.s32 %s1331, 7
          %s1333 = sand.u32 %s1331, 127
          %s1334 = sadd.s32 %s1332, %s92
          %s1335 = smul.u32 %s1334, 128
          %s1336 = sshra.s32 %s1331, 7
          %s1337 = sand.u32 %s1331, 127
          %s1338 = sadd.s32 %s1335, %s1337
          %s1339 = sld [smem:[#allocation3 + %s1338]]
        $region32: #{tpu_custom_call.1} parent=23 // pred_fallthru
          _
        // Predicated region
        $region33: #{tpu_custom_call.1} parent=23 // pred_check
          %p1340 = pneg %p227
        $region34: #{tpu_custom_call.1} parent=23 // pred_check_branch
          %1342 = sbr.rel (%p1340) target = $region36
        $region35: #{tpu_custom_call.1} parent=23 // pred_region
          %s1343 = smul.u32 %s93, 8
          %s1344 = sadd.s32 %s1343, 2
          %s1345 = sshra.s32 %s1344, 7
          %s1346 = sand.u32 %s1344, 127
          %s1347 = sadd.s32 %s1345, %s92
          %s1348 = smul.u32 %s1347, 128
          %s1349 = sshra.s32 %s1344, 7
          %s1350 = sand.u32 %s1344, 127
          %s1351 = sadd.s32 %s1348, %s1350
          %s1352 = sld [smem:[#allocation3 + %s1351]]
          %p1353 = scmp.lt.s32.totalorder %s1352, 63
          %s1354 = scalar_select %p1353, %s1352, 63
          %s1355 = scalar_lea.vmem %s13, %s1354
          %s1356 = smul.u32 %s93, 8
          %s1357 = sadd.s32 %s1356, 2
          %s1358 = sshra.s32 %s1357, 7
          %s1359 = sand.u32 %s1357, 127
          %s1360 = sadd.s32 %s1358, %s92
          %s1361 = smul.u32 %s1360, 128
          %s1362 = sshra.s32 %s1357, 7
          %s1363 = sand.u32 %s1357, 127
          %s1364 = sadd.s32 %s1361, %s1363
          %s1365 = sld [smem:[#allocation3 + %s1364]]
        $region36: #{tpu_custom_call.1} parent=23 // pred_fallthru
          _
        // Predicated region
        $region37: #{tpu_custom_call.1} parent=23 // pred_check
          %p1366 = pneg %p273
        $region38: #{tpu_custom_call.1} parent=23 // pred_check_branch
          %1368 = sbr.rel (%p1366) target = $region40
        $region39: #{tpu_custom_call.1} parent=23 // pred_region
          %s1369 = smul.u32 %s93, 8
          %s1370 = sadd.s32 %s1369, 3
          %s1371 = sshra.s32 %s1370, 7
          %s1372 = sand.u32 %s1370, 127
          %s1373 = sadd.s32 %s1371, %s92
          %s1374 = smul.u32 %s1373, 128
          %s1375 = sshra.s32 %s1370, 7
          %s1376 = sand.u32 %s1370, 127
          %s1377 = sadd.s32 %s1374, %s1376
          %s1378 = sld [smem:[#allocation3 + %s1377]]
          %p1379 = scmp.lt.s32.totalorder %s1378, 63
          %s1380 = scalar_select %p1379, %s1378, 63
          %s1381 = scalar_lea.vmem %s15, %s1380
          %s1382 = smul.u32 %s93, 8
          %s1383 = sadd.s32 %s1382, 3
          %s1384 = sshra.s32 %s1383, 7
          %s1385 = sand.u32 %s1383, 127
          %s1386 = sadd.s32 %s1384, %s92
          %s1387 = smul.u32 %s1386, 128
          %s1388 = sshra.s32 %s1383, 7
          %s1389 = sand.u32 %s1383, 127
          %s1390 = sadd.s32 %s1387, %s1389
          %s1391 = sld [smem:[#allocation3 + %s1390]]
        $region40: #{tpu_custom_call.1} parent=23 // pred_fallthru
          _
        // Predicated region
        $region41: #{tpu_custom_call.1} parent=23 // pred_check
          %p1392 = pneg %p319
        $region42: #{tpu_custom_call.1} parent=23 // pred_check_branch
          %1394 = sbr.rel (%p1392) target = $region44
        $region43: #{tpu_custom_call.1} parent=23 // pred_region
          %s1395 = smul.u32 %s93, 8
          %s1396 = sadd.s32 %s1395, 4
          %s1397 = sshra.s32 %s1396, 7
          %s1398 = sand.u32 %s1396, 127
          %s1399 = sadd.s32 %s1397, %s92
          %s1400 = smul.u32 %s1399, 128
          %s1401 = sshra.s32 %s1396, 7
          %s1402 = sand.u32 %s1396, 127
          %s1403 = sadd.s32 %s1400, %s1402
          %s1404 = sld [smem:[#allocation3 + %s1403]]
          %p1405 = scmp.lt.s32.totalorder %s1404, 63
          %s1406 = scalar_select %p1405, %s1404, 63
          %s1407 = scalar_lea.vmem %s17, %s1406
          %s1408 = smul.u32 %s93, 8
          %s1409 = sadd.s32 %s1408, 4
          %s1410 = sshra.s32 %s1409, 7
          %s1411 = sand.u32 %s1409, 127
          %s1412 = sadd.s32 %s1410, %s92
          %s1413 = smul.u32 %s1412, 128
          %s1414 = sshra.s32 %s1409, 7
          %s1415 = sand.u32 %s1409, 127
          %s1416 = sadd.s32 %s1413, %s1415
          %s1417 = sld [smem:[#allocation3 + %s1416]]
        $region44: #{tpu_custom_call.1} parent=23 // pred_fallthru
          _
        // Predicated region
        $region45: #{tpu_custom_call.1} parent=23 // pred_check
          %p1418 = pneg %p365
        $region46: #{tpu_custom_call.1} parent=23 // pred_check_branch
          %1420 = sbr.rel (%p1418) target = $region48
        $region47: #{tpu_custom_call.1} parent=23 // pred_region
          %s1421 = smul.u32 %s93, 8
          %s1422 = sadd.s32 %s1421, 5
          %s1423 = sshra.s32 %s1422, 7
          %s1424 = sand.u32 %s1422, 127
          %s1425 = sadd.s32 %s1423, %s92
          %s1426 = smul.u32 %s1425, 128
          %s1427 = sshra.s32 %s1422, 7
          %s1428 = sand.u32 %s1422, 127
          %s1429 = sadd.s32 %s1426, %s1428
          %s1430 = sld [smem:[#allocation3 + %s1429]]
          %p1431 = scmp.lt.s32.totalorder %s1430, 63
          %s1432 = scalar_select %p1431, %s1430, 63
          %s1433 = scalar_lea.vmem %s19, %s1432
          %s1434 = smul.u32 %s93, 8
          %s1435 = sadd.s32 %s1434, 5
          %s1436 = sshra.s32 %s1435, 7
          %s1437 = sand.u32 %s1435, 127
          %s1438 = sadd.s32 %s1436, %s92
          %s1439 = smul.u32 %s1438, 128
          %s1440 = sshra.s32 %s1435, 7
          %s1441 = sand.u32 %s1435, 127
          %s1442 = sadd.s32 %s1439, %s1441
          %s1443 = sld [smem:[#allocation3 + %s1442]]
        $region48: #{tpu_custom_call.1} parent=23 // pred_fallthru
          _
        // Predicated region
        $region49: #{tpu_custom_call.1} parent=23 // pred_check
          %p1444 = pneg %p411
        $region50: #{tpu_custom_call.1} parent=23 // pred_check_branch
          %1446 = sbr.rel (%p1444) target = $region52
        $region51: #{tpu_custom_call.1} parent=23 // pred_region
          %s1447 = smul.u32 %s93, 8
          %s1448 = sadd.s32 %s1447, 6
          %s1449 = sshra.s32 %s1448, 7
          %s1450 = sand.u32 %s1448, 127
          %s1451 = sadd.s32 %s1449, %s92
          %s1452 = smul.u32 %s1451, 128
          %s1453 = sshra.s32 %s1448, 7
          %s1454 = sand.u32 %s1448, 127
          %s1455 = sadd.s32 %s1452, %s1454
          %s1456 = sld [smem:[#allocation3 + %s1455]]
          %p1457 = scmp.lt.s32.totalorder %s1456, 63
          %s1458 = scalar_select %p1457, %s1456, 63
          %s1459 = scalar_lea.vmem %s21, %s1458
          %s1460 = smul.u32 %s93, 8
          %s1461 = sadd.s32 %s1460, 6
          %s1462 = sshra.s32 %s1461, 7
          %s1463 = sand.u32 %s1461, 127
          %s1464 = sadd.s32 %s1462, %s92
          %s1465 = smul.u32 %s1464, 128
          %s1466 = sshra.s32 %s1461, 7
          %s1467 = sand.u32 %s1461, 127
          %s1468 = sadd.s32 %s1465, %s1467
          %s1469 = sld [smem:[#allocation3 + %s1468]]
        $region52: #{tpu_custom_call.1} parent=23 // pred_fallthru
          _
        // Predicated region
        $region53: #{tpu_custom_call.1} parent=23 // pred_check
          %p1470 = pneg %p457
        $region54: #{tpu_custom_call.1} parent=23 // pred_check_branch
          %1472 = sbr.rel (%p1470) target = $region56
        $region55: #{tpu_custom_call.1} parent=23 // pred_region
          %s1473 = smul.u32 %s93, 8
          %s1474 = sadd.s32 %s1473, 7
          %s1475 = sshra.s32 %s1474, 7
          %s1476 = sand.u32 %s1474, 127
          %s1477 = sadd.s32 %s1475, %s92
          %s1478 = smul.u32 %s1477, 128
          %s1479 = sshra.s32 %s1474, 7
          %s1480 = sand.u32 %s1474, 127
          %s1481 = sadd.s32 %s1478, %s1480
          %s1482 = sld [smem:[#allocation3 + %s1481]]
          %p1483 = scmp.lt.s32.totalorder %s1482, 63
          %s1484 = scalar_select %p1483, %s1482, 63
          %s1485 = scalar_lea.vmem %s23, %s1484
          %s1486 = smul.u32 %s93, 8
          %s1487 = sadd.s32 %s1486, 7
          %s1488 = sshra.s32 %s1487, 7
          %s1489 = sand.u32 %s1487, 127
          %s1490 = sadd.s32 %s1488, %s92
          %s1491 = smul.u32 %s1490, 128
          %s1492 = sshra.s32 %s1487, 7
          %s1493 = sand.u32 %s1487, 127
          %s1494 = sadd.s32 %s1491, %s1493
          %s1495 = sld [smem:[#allocation3 + %s1494]]
        $region56: #{tpu_custom_call.1} parent=23 // pred_fallthru
          _
        // Predicated region
        $region57: #{tpu_custom_call.1} parent=23 // pred_check
          %p1496 = pneg %p501
        $region58: #{tpu_custom_call.1} parent=23 // pred_check_branch
          %1498 = sbr.rel (%p1496) target = $region60
        $region59: #{tpu_custom_call.1} parent=23 // pred_region
          %s1499 = smul.u32 %s93, 8
          %s1500 = sshra.s32 %s1499, 7
          %s1501 = sand.u32 %s1499, 127
          %s1502 = sadd.s32 %s1500, %s92
          %s1503 = smul.u32 %s1502, 128
          %s1504 = sshra.s32 %s1499, 7
          %s1505 = sand.u32 %s1499, 127
          %s1506 = sadd.s32 %s1503, %s1505
          %s1507 = sld [smem:[#allocation5 + %s1506]]
          %p1508 = scmp.lt.s32.totalorder %s1507, 31
          %s1509 = scalar_select %p1508, %s1507, 31
          %s1510 = scalar_lea.vmem %s25, %s1509
          %s1511 = smul.u32 %s93, 8
          %s1512 = sshra.s32 %s1511, 7
          %s1513 = sand.u32 %s1511, 127
          %s1514 = sadd.s32 %s1512, %s92
          %s1515 = smul.u32 %s1514, 128
          %s1516 = sshra.s32 %s1511, 7
          %s1517 = sand.u32 %s1511, 127
          %s1518 = sadd.s32 %s1515, %s1517
          %s1519 = sld [smem:[#allocation5 + %s1518]]
        $region60: #{tpu_custom_call.1} parent=23 // pred_fallthru
          _
        // Predicated region
        $region61: #{tpu_custom_call.1} parent=23 // pred_check
          %p1520 = pneg %p547
        $region62: #{tpu_custom_call.1} parent=23 // pred_check_branch
          %1522 = sbr.rel (%p1520) target = $region64
        $region63: #{tpu_custom_call.1} parent=23 // pred_region
          %s1523 = smul.u32 %s93, 8
          %s1524 = sadd.s32 %s1523, 1
          %s1525 = sshra.s32 %s1524, 7
          %s1526 = sand.u32 %s1524, 127
          %s1527 = sadd.s32 %s1525, %s92
          %s1528 = smul.u32 %s1527, 128
          %s1529 = sshra.s32 %s1524, 7
          %s1530 = sand.u32 %s1524, 127
          %s1531 = sadd.s32 %s1528, %s1530
          %s1532 = sld [smem:[#allocation5 + %s1531]]
          %p1533 = scmp.lt.s32.totalorder %s1532, 31
          %s1534 = scalar_select %p1533, %s1532, 31
          %s1535 = scalar_lea.vmem %s27, %s1534
          %s1536 = smul.u32 %s93, 8
          %s1537 = sadd.s32 %s1536, 1
          %s1538 = sshra.s32 %s1537, 7
          %s1539 = sand.u32 %s1537, 127
          %s1540 = sadd.s32 %s1538, %s92
          %s1541 = smul.u32 %s1540, 128
          %s1542 = sshra.s32 %s1537, 7
          %s1543 = sand.u32 %s1537, 127
          %s1544 = sadd.s32 %s1541, %s1543
          %s1545 = sld [smem:[#allocation5 + %s1544]]
        $region64: #{tpu_custom_call.1} parent=23 // pred_fallthru
          _
        // Predicated region
        $region65: #{tpu_custom_call.1} parent=23 // pred_check
          %p1546 = pneg %p593
        $region66: #{tpu_custom_call.1} parent=23 // pred_check_branch
          %1548 = sbr.rel (%p1546) target = $region68
        $region67: #{tpu_custom_call.1} parent=23 // pred_region
          %s1549 = smul.u32 %s93, 8
          %s1550 = sadd.s32 %s1549, 2
          %s1551 = sshra.s32 %s1550, 7
          %s1552 = sand.u32 %s1550, 127
          %s1553 = sadd.s32 %s1551, %s92
          %s1554 = smul.u32 %s1553, 128
          %s1555 = sshra.s32 %s1550, 7
          %s1556 = sand.u32 %s1550, 127
          %s1557 = sadd.s32 %s1554, %s1556
          %s1558 = sld [smem:[#allocation5 + %s1557]]
          %p1559 = scmp.lt.s32.totalorder %s1558, 31
          %s1560 = scalar_select %p1559, %s1558, 31
          %s1561 = scalar_lea.vmem %s29, %s1560
          %s1562 = smul.u32 %s93, 8
          %s1563 = sadd.s32 %s1562, 2
          %s1564 = sshra.s32 %s1563, 7
          %s1565 = sand.u32 %s1563, 127
          %s1566 = sadd.s32 %s1564, %s92
          %s1567 = smul.u32 %s1566, 128
          %s1568 = sshra.s32 %s1563, 7
          %s1569 = sand.u32 %s1563, 127
          %s1570 = sadd.s32 %s1567, %s1569
          %s1571 = sld [smem:[#allocation5 + %s1570]]
        $region68: #{tpu_custom_call.1} parent=23 // pred_fallthru
          _
        // Predicated region
        $region69: #{tpu_custom_call.1} parent=23 // pred_check
          %p1572 = pneg %p639
        $region70: #{tpu_custom_call.1} parent=23 // pred_check_branch
          %1574 = sbr.rel (%p1572) target = $region72
        $region71: #{tpu_custom_call.1} parent=23 // pred_region
          %s1575 = smul.u32 %s93, 8
          %s1576 = sadd.s32 %s1575, 3
          %s1577 = sshra.s32 %s1576, 7
          %s1578 = sand.u32 %s1576, 127
          %s1579 = sadd.s32 %s1577, %s92
          %s1580 = smul.u32 %s1579, 128
          %s1581 = sshra.s32 %s1576, 7
          %s1582 = sand.u32 %s1576, 127
          %s1583 = sadd.s32 %s1580, %s1582
          %s1584 = sld [smem:[#allocation5 + %s1583]]
          %p1585 = scmp.lt.s32.totalorder %s1584, 31
          %s1586 = scalar_select %p1585, %s1584, 31
          %s1587 = scalar_lea.vmem %s31, %s1586
          %s1588 = smul.u32 %s93, 8
          %s1589 = sadd.s32 %s1588, 3
          %s1590 = sshra.s32 %s1589, 7
          %s1591 = sand.u32 %s1589, 127
          %s1592 = sadd.s32 %s1590, %s92
          %s1593 = smul.u32 %s1592, 128
          %s1594 = sshra.s32 %s1589, 7
          %s1595 = sand.u32 %s1589, 127
          %s1596 = sadd.s32 %s1593, %s1595
          %s1597 = sld [smem:[#allocation5 + %s1596]]
        $region72: #{tpu_custom_call.1} parent=23 // pred_fallthru
          _
        // Predicated region
        $region73: #{tpu_custom_call.1} parent=23 // pred_check
          %p1598 = pneg %p685
        $region74: #{tpu_custom_call.1} parent=23 // pred_check_branch
          %1600 = sbr.rel (%p1598) target = $region76
        $region75: #{tpu_custom_call.1} parent=23 // pred_region
          %s1601 = smul.u32 %s93, 8
          %s1602 = sadd.s32 %s1601, 4
          %s1603 = sshra.s32 %s1602, 7
          %s1604 = sand.u32 %s1602, 127
          %s1605 = sadd.s32 %s1603, %s92
          %s1606 = smul.u32 %s1605, 128
          %s1607 = sshra.s32 %s1602, 7
          %s1608 = sand.u32 %s1602, 127
          %s1609 = sadd.s32 %s1606, %s1608
          %s1610 = sld [smem:[#allocation5 + %s1609]]
          %p1611 = scmp.lt.s32.totalorder %s1610, 31
          %s1612 = scalar_select %p1611, %s1610, 31
          %s1613 = scalar_lea.vmem %s33, %s1612
          %s1614 = smul.u32 %s93, 8
          %s1615 = sadd.s32 %s1614, 4
          %s1616 = sshra.s32 %s1615, 7
          %s1617 = sand.u32 %s1615, 127
          %s1618 = sadd.s32 %s1616, %s92
          %s1619 = smul.u32 %s1618, 128
          %s1620 = sshra.s32 %s1615, 7
          %s1621 = sand.u32 %s1615, 127
          %s1622 = sadd.s32 %s1619, %s1621
          %s1623 = sld [smem:[#allocation5 + %s1622]]
        $region76: #{tpu_custom_call.1} parent=23 // pred_fallthru
          _
        // Predicated region
        $region77: #{tpu_custom_call.1} parent=23 // pred_check
          %p1624 = pneg %p731
        $region78: #{tpu_custom_call.1} parent=23 // pred_check_branch
          %1626 = sbr.rel (%p1624) target = $region80
        $region79: #{tpu_custom_call.1} parent=23 // pred_region
          %s1627 = smul.u32 %s93, 8
          %s1628 = sadd.s32 %s1627, 5
          %s1629 = sshra.s32 %s1628, 7
          %s1630 = sand.u32 %s1628, 127
          %s1631 = sadd.s32 %s1629, %s92
          %s1632 = smul.u32 %s1631, 128
          %s1633 = sshra.s32 %s1628, 7
          %s1634 = sand.u32 %s1628, 127
          %s1635 = sadd.s32 %s1632, %s1634
          %s1636 = sld [smem:[#allocation5 + %s1635]]
          %p1637 = scmp.lt.s32.totalorder %s1636, 31
          %s1638 = scalar_select %p1637, %s1636, 31
          %s1639 = scalar_lea.vmem %s35, %s1638
          %s1640 = smul.u32 %s93, 8
          %s1641 = sadd.s32 %s1640, 5
          %s1642 = sshra.s32 %s1641, 7
          %s1643 = sand.u32 %s1641, 127
          %s1644 = sadd.s32 %s1642, %s92
          %s1645 = smul.u32 %s1644, 128
          %s1646 = sshra.s32 %s1641, 7
          %s1647 = sand.u32 %s1641, 127
          %s1648 = sadd.s32 %s1645, %s1647
          %s1649 = sld [smem:[#allocation5 + %s1648]]
        $region80: #{tpu_custom_call.1} parent=23 // pred_fallthru
          _
        // Predicated region
        $region81: #{tpu_custom_call.1} parent=23 // pred_check
          %p1650 = pneg %p777
        $region82: #{tpu_custom_call.1} parent=23 // pred_check_branch
          %1652 = sbr.rel (%p1650) target = $region84
        $region83: #{tpu_custom_call.1} parent=23 // pred_region
          %s1653 = smul.u32 %s93, 8
          %s1654 = sadd.s32 %s1653, 6
          %s1655 = sshra.s32 %s1654, 7
          %s1656 = sand.u32 %s1654, 127
          %s1657 = sadd.s32 %s1655, %s92
          %s1658 = smul.u32 %s1657, 128
          %s1659 = sshra.s32 %s1654, 7
          %s1660 = sand.u32 %s1654, 127
          %s1661 = sadd.s32 %s1658, %s1660
          %s1662 = sld [smem:[#allocation5 + %s1661]]
          %p1663 = scmp.lt.s32.totalorder %s1662, 31
          %s1664 = scalar_select %p1663, %s1662, 31
          %s1665 = scalar_lea.vmem %s37, %s1664
          %s1666 = smul.u32 %s93, 8
          %s1667 = sadd.s32 %s1666, 6
          %s1668 = sshra.s32 %s1667, 7
          %s1669 = sand.u32 %s1667, 127
          %s1670 = sadd.s32 %s1668, %s92
          %s1671 = smul.u32 %s1670, 128
          %s1672 = sshra.s32 %s1667, 7
          %s1673 = sand.u32 %s1667, 127
          %s1674 = sadd.s32 %s1671, %s1673
          %s1675 = sld [smem:[#allocation5 + %s1674]]
        $region84: #{tpu_custom_call.1} parent=23 // pred_fallthru
          _
        // Predicated region
        $region85: #{tpu_custom_call.1} parent=23 // pred_check
          %p1676 = pneg %p823
        $region86: #{tpu_custom_call.1} parent=23 // pred_check_branch
          %1678 = sbr.rel (%p1676) target = $region88
        $region87: #{tpu_custom_call.1} parent=23 // pred_region
          %s1679 = smul.u32 %s93, 8
          %s1680 = sadd.s32 %s1679, 7
          %s1681 = sshra.s32 %s1680, 7
          %s1682 = sand.u32 %s1680, 127
          %s1683 = sadd.s32 %s1681, %s92
          %s1684 = smul.u32 %s1683, 128
          %s1685 = sshra.s32 %s1680, 7
          %s1686 = sand.u32 %s1680, 127
          %s1687 = sadd.s32 %s1684, %s1686
          %s1688 = sld [smem:[#allocation5 + %s1687]]
          %p1689 = scmp.lt.s32.totalorder %s1688, 31
          %s1690 = scalar_select %p1689, %s1688, 31
          %s1691 = scalar_lea.vmem %s39, %s1690
          %s1692 = smul.u32 %s93, 8
          %s1693 = sadd.s32 %s1692, 7
          %s1694 = sshra.s32 %s1693, 7
          %s1695 = sand.u32 %s1693, 127
          %s1696 = sadd.s32 %s1694, %s92
          %s1697 = smul.u32 %s1696, 128
          %s1698 = sshra.s32 %s1693, 7
          %s1699 = sand.u32 %s1693, 127
          %s1700 = sadd.s32 %s1697, %s1699
          %s1701 = sld [smem:[#allocation5 + %s1700]]
        $region88: #{tpu_custom_call.1} parent=23 // pred_fallthru
          _
        // Predicated region
        $region89: #{tpu_custom_call.1} parent=23 // pred_check
          %p1702 = pneg %p867
        $region90: #{tpu_custom_call.1} parent=23 // pred_check_branch
          %1704 = sbr.rel (%p1702) target = $region92
        $region91: #{tpu_custom_call.1} parent=23 // pred_region
          %s1705 = smul.u32 %s93, 8
          %s1706 = sshra.s32 %s1705, 7
          %s1707 = sand.u32 %s1705, 127
          %s1708 = sadd.s32 %s1706, %s92
          %s1709 = smul.u32 %s1708, 128
          %s1710 = sshra.s32 %s1705, 7
          %s1711 = sand.u32 %s1705, 127
          %s1712 = sadd.s32 %s1709, %s1711
          %s1713 = sld [smem:[#allocation4 + %s1712]]
          %p1714 = scmp.lt.s32.totalorder %s1713, 1
          %s1715 = scalar_select %p1714, %s1713, 1
          %s1716 = scalar_lea.vmem %s41, %s1715
          %s1717 = smul.u32 %s93, 8
          %s1718 = sshra.s32 %s1717, 7
          %s1719 = sand.u32 %s1717, 127
          %s1720 = sadd.s32 %s1718, %s92
          %s1721 = smul.u32 %s1720, 128
          %s1722 = sshra.s32 %s1717, 7
          %s1723 = sand.u32 %s1717, 127
          %s1724 = sadd.s32 %s1721, %s1723
          %s1725 = sld [smem:[#allocation4 + %s1724]]
        $region92: #{tpu_custom_call.1} parent=23 // pred_fallthru
          _
        // Predicated region
        $region93: #{tpu_custom_call.1} parent=23 // pred_check
          %p1726 = pneg %p913
        $region94: #{tpu_custom_call.1} parent=23 // pred_check_branch
          %1728 = sbr.rel (%p1726) target = $region96
        $region95: #{tpu_custom_call.1} parent=23 // pred_region
          %s1729 = smul.u32 %s93, 8
          %s1730 = sadd.s32 %s1729, 1
          %s1731 = sshra.s32 %s1730, 7
          %s1732 = sand.u32 %s1730, 127
          %s1733 = sadd.s32 %s1731, %s92
          %s1734 = smul.u32 %s1733, 128
          %s1735 = sshra.s32 %s1730, 7
          %s1736 = sand.u32 %s1730, 127
          %s1737 = sadd.s32 %s1734, %s1736
          %s1738 = sld [smem:[#allocation4 + %s1737]]
          %p1739 = scmp.lt.s32.totalorder %s1738, 1
          %s1740 = scalar_select %p1739, %s1738, 1
          %s1741 = scalar_lea.vmem %s43, %s1740
          %s1742 = smul.u32 %s93, 8
          %s1743 = sadd.s32 %s1742, 1
          %s1744 = sshra.s32 %s1743, 7
          %s1745 = sand.u32 %s1743, 127
          %s1746 = sadd.s32 %s1744, %s92
          %s1747 = smul.u32 %s1746, 128
          %s1748 = sshra.s32 %s1743, 7
          %s1749 = sand.u32 %s1743, 127
          %s1750 = sadd.s32 %s1747, %s1749
          %s1751 = sld [smem:[#allocation4 + %s1750]]
        $region96: #{tpu_custom_call.1} parent=23 // pred_fallthru
          _
        // Predicated region
        $region97: #{tpu_custom_call.1} parent=23 // pred_check
          %p1752 = pneg %p959
        $region98: #{tpu_custom_call.1} parent=23 // pred_check_branch
          %1754 = sbr.rel (%p1752) target = $region100
        $region99: #{tpu_custom_call.1} parent=23 // pred_region
          %s1755 = smul.u32 %s93, 8
          %s1756 = sadd.s32 %s1755, 2
          %s1757 = sshra.s32 %s1756, 7
          %s1758 = sand.u32 %s1756, 127
          %s1759 = sadd.s32 %s1757, %s92
          %s1760 = smul.u32 %s1759, 128
          %s1761 = sshra.s32 %s1756, 7
          %s1762 = sand.u32 %s1756, 127
          %s1763 = sadd.s32 %s1760, %s1762
          %s1764 = sld [smem:[#allocation4 + %s1763]]
          %p1765 = scmp.lt.s32.totalorder %s1764, 1
          %s1766 = scalar_select %p1765, %s1764, 1
          %s1767 = scalar_lea.vmem %s45, %s1766
          %s1768 = smul.u32 %s93, 8
          %s1769 = sadd.s32 %s1768, 2
          %s1770 = sshra.s32 %s1769, 7
          %s1771 = sand.u32 %s1769, 127
          %s1772 = sadd.s32 %s1770, %s92
          %s1773 = smul.u32 %s1772, 128
          %s1774 = sshra.s32 %s1769, 7
          %s1775 = sand.u32 %s1769, 127
          %s1776 = sadd.s32 %s1773, %s1775
          %s1777 = sld [smem:[#allocation4 + %s1776]]
        $region100: #{tpu_custom_call.1} parent=23 // pred_fallthru
          _
        // Predicated region
        $region101: #{tpu_custom_call.1} parent=23 // pred_check
          %p1778 = pneg %p1005
        $region102: #{tpu_custom_call.1} parent=23 // pred_check_branch
          %1780 = sbr.rel (%p1778) target = $region104
        $region103: #{tpu_custom_call.1} parent=23 // pred_region
          %s1781 = smul.u32 %s93, 8
          %s1782 = sadd.s32 %s1781, 3
          %s1783 = sshra.s32 %s1782, 7
          %s1784 = sand.u32 %s1782, 127
          %s1785 = sadd.s32 %s1783, %s92
          %s1786 = smul.u32 %s1785, 128
          %s1787 = sshra.s32 %s1782, 7
          %s1788 = sand.u32 %s1782, 127
          %s1789 = sadd.s32 %s1786, %s1788
          %s1790 = sld [smem:[#allocation4 + %s1789]]
          %p1791 = scmp.lt.s32.totalorder %s1790, 1
          %s1792 = scalar_select %p1791, %s1790, 1
          %s1793 = scalar_lea.vmem %s47, %s1792
          %s1794 = smul.u32 %s93, 8
          %s1795 = sadd.s32 %s1794, 3
          %s1796 = sshra.s32 %s1795, 7
          %s1797 = sand.u32 %s1795, 127
          %s1798 = sadd.s32 %s1796, %s92
          %s1799 = smul.u32 %s1798, 128
          %s1800 = sshra.s32 %s1795, 7
          %s1801 = sand.u32 %s1795, 127
          %s1802 = sadd.s32 %s1799, %s1801
          %s1803 = sld [smem:[#allocation4 + %s1802]]
        $region104: #{tpu_custom_call.1} parent=23 // pred_fallthru
          _
        // Predicated region
        $region105: #{tpu_custom_call.1} parent=23 // pred_check
          %p1804 = pneg %p1051
        $region106: #{tpu_custom_call.1} parent=23 // pred_check_branch
          %1806 = sbr.rel (%p1804) target = $region108
        $region107: #{tpu_custom_call.1} parent=23 // pred_region
          %s1807 = smul.u32 %s93, 8
          %s1808 = sadd.s32 %s1807, 4
          %s1809 = sshra.s32 %s1808, 7
          %s1810 = sand.u32 %s1808, 127
          %s1811 = sadd.s32 %s1809, %s92
          %s1812 = smul.u32 %s1811, 128
          %s1813 = sshra.s32 %s1808, 7
          %s1814 = sand.u32 %s1808, 127
          %s1815 = sadd.s32 %s1812, %s1814
          %s1816 = sld [smem:[#allocation4 + %s1815]]
          %p1817 = scmp.lt.s32.totalorder %s1816, 1
          %s1818 = scalar_select %p1817, %s1816, 1
          %s1819 = scalar_lea.vmem %s49, %s1818
          %s1820 = smul.u32 %s93, 8
          %s1821 = sadd.s32 %s1820, 4
          %s1822 = sshra.s32 %s1821, 7
          %s1823 = sand.u32 %s1821, 127
          %s1824 = sadd.s32 %s1822, %s92
          %s1825 = smul.u32 %s1824, 128
          %s1826 = sshra.s32 %s1821, 7
          %s1827 = sand.u32 %s1821, 127
          %s1828 = sadd.s32 %s1825, %s1827
          %s1829 = sld [smem:[#allocation4 + %s1828]]
        $region108: #{tpu_custom_call.1} parent=23 // pred_fallthru
          _
        // Predicated region
        $region109: #{tpu_custom_call.1} parent=23 // pred_check
          %p1830 = pneg %p1097
        $region110: #{tpu_custom_call.1} parent=23 // pred_check_branch
          %1832 = sbr.rel (%p1830) target = $region112
        $region111: #{tpu_custom_call.1} parent=23 // pred_region
          %s1833 = smul.u32 %s93, 8
          %s1834 = sadd.s32 %s1833, 5
          %s1835 = sshra.s32 %s1834, 7
          %s1836 = sand.u32 %s1834, 127
          %s1837 = sadd.s32 %s1835, %s92
          %s1838 = smul.u32 %s1837, 128
          %s1839 = sshra.s32 %s1834, 7
          %s1840 = sand.u32 %s1834, 127
          %s1841 = sadd.s32 %s1838, %s1840
          %s1842 = sld [smem:[#allocation4 + %s1841]]
          %p1843 = scmp.lt.s32.totalorder %s1842, 1
          %s1844 = scalar_select %p1843, %s1842, 1
          %s1845 = scalar_lea.vmem %s51, %s1844
          %s1846 = smul.u32 %s93, 8
          %s1847 = sadd.s32 %s1846, 5
          %s1848 = sshra.s32 %s1847, 7
          %s1849 = sand.u32 %s1847, 127
          %s1850 = sadd.s32 %s1848, %s92
          %s1851 = smul.u32 %s1850, 128
          %s1852 = sshra.s32 %s1847, 7
          %s1853 = sand.u32 %s1847, 127
          %s1854 = sadd.s32 %s1851, %s1853
          %s1855 = sld [smem:[#allocation4 + %s1854]]
        $region112: #{tpu_custom_call.1} parent=23 // pred_fallthru
          _
        // Predicated region
        $region113: #{tpu_custom_call.1} parent=23 // pred_check
          %p1856 = pneg %p1143
        $region114: #{tpu_custom_call.1} parent=23 // pred_check_branch
          %1858 = sbr.rel (%p1856) target = $region116
        $region115: #{tpu_custom_call.1} parent=23 // pred_region
          %s1859 = smul.u32 %s93, 8
          %s1860 = sadd.s32 %s1859, 6
          %s1861 = sshra.s32 %s1860, 7
          %s1862 = sand.u32 %s1860, 127
          %s1863 = sadd.s32 %s1861, %s92
          %s1864 = smul.u32 %s1863, 128
          %s1865 = sshra.s32 %s1860, 7
          %s1866 = sand.u32 %s1860, 127
          %s1867 = sadd.s32 %s1864, %s1866
          %s1868 = sld [smem:[#allocation4 + %s1867]]
          %p1869 = scmp.lt.s32.totalorder %s1868, 1
          %s1870 = scalar_select %p1869, %s1868, 1
          %s1871 = scalar_lea.vmem %s53, %s1870
          %s1872 = smul.u32 %s93, 8
          %s1873 = sadd.s32 %s1872, 6
          %s1874 = sshra.s32 %s1873, 7
          %s1875 = sand.u32 %s1873, 127
          %s1876 = sadd.s32 %s1874, %s92
          %s1877 = smul.u32 %s1876, 128
          %s1878 = sshra.s32 %s1873, 7
          %s1879 = sand.u32 %s1873, 127
          %s1880 = sadd.s32 %s1877, %s1879
          %s1881 = sld [smem:[#allocation4 + %s1880]]
        $region116: #{tpu_custom_call.1} parent=23 // pred_fallthru
          _
        // Predicated region
        $region117: #{tpu_custom_call.1} parent=23 // pred_check
          %p1882 = pneg %p1189
        $region118: #{tpu_custom_call.1} parent=23 // pred_check_branch
          %1884 = sbr.rel (%p1882) target = $region120
        $region119: #{tpu_custom_call.1} parent=23 // pred_region
          %s1885 = smul.u32 %s93, 8
          %s1886 = sadd.s32 %s1885, 7
          %s1887 = sshra.s32 %s1886, 7
          %s1888 = sand.u32 %s1886, 127
          %s1889 = sadd.s32 %s1887, %s92
          %s1890 = smul.u32 %s1889, 128
          %s1891 = sshra.s32 %s1886, 7
          %s1892 = sand.u32 %s1886, 127
          %s1893 = sadd.s32 %s1890, %s1892
          %s1894 = sld [smem:[#allocation4 + %s1893]]
          %p1895 = scmp.lt.s32.totalorder %s1894, 1
          %s1896 = scalar_select %p1895, %s1894, 1
          %s1897 = scalar_lea.vmem %s55, %s1896
          %s1898 = smul.u32 %s93, 8
          %s1899 = sadd.s32 %s1898, 7
          %s1900 = sshra.s32 %s1899, 7
          %s1901 = sand.u32 %s1899, 127
          %s1902 = sadd.s32 %s1900, %s92
          %s1903 = smul.u32 %s1902, 128
          %s1904 = sshra.s32 %s1899, 7
          %s1905 = sand.u32 %s1899, 127
          %s1906 = sadd.s32 %s1903, %s1905
          %s1907 = sld [smem:[#allocation4 + %s1906]]
        $region120: #{tpu_custom_call.1} parent=23 // pred_fallthru
          _
      $region24: #{tpu_custom_call.1} parent=5 // pred_fallthru
        _
      %p1908 = scmp.le.s32.totalorder 1, %s85
      %p1909 = scmp.lt.s32.totalorder %s85, 5
      %p1910 = pnand %p1908, %p1909
      %p1911 = pneg %p1910
      // Predicated region
      $region121: #{tpu_custom_call.1} parent=5 // pred_check
        _
      $region122: #{tpu_custom_call.1} parent=5 // pred_check_branch
        %1913 = sbr.rel (%p1910) target = $region124
      $region123: #{tpu_custom_call.1} parent=5 // pred_region
        %s1914 = ssub.s32 %s85, 1
        %s1915 = smul.u32 %s95, 8
        %s1916 = sshra.s32 %s1915, 7
        %s1917 = sand.u32 %s1915, 127
        %s1918 = sadd.s32 %s1916, %s94
        %s1919 = smul.u32 %s1918, 128
        %s1920 = sshra.s32 %s1915, 7
        %s1921 = sand.u32 %s1915, 127
        %s1922 = sadd.s32 %s1919, %s1921
        %s1923 = sld [smem:[#allocation3 + %s1922]]
        %p1924 = scmp.lt.s32.totalorder %s1923, 63
        %s1925 = scalar_select %p1924, %s1923, 63
        %s1926 = scalar_lea.vmem %s9, %s1925
        %p1927 = pneg %p141
        %p1928 = pneg %p138
        %s1929 = smul.u32 %s95, 8
        %s1930 = sadd.s32 %s1929, 1
        %s1931 = sshra.s32 %s1930, 7
        %s1932 = sand.u32 %s1930, 127
        %s1933 = sadd.s32 %s1931, %s94
        %s1934 = smul.u32 %s1933, 128
        %s1935 = sshra.s32 %s1930, 7
        %s1936 = sand.u32 %s1930, 127
        %s1937 = sadd.s32 %s1934, %s1936
        %s1938 = sld [smem:[#allocation3 + %s1937]]
        %p1939 = scmp.lt.s32.totalorder %s1938, 63
        %s1940 = scalar_select %p1939, %s1938, 63
        %s1941 = scalar_lea.vmem %s11, %s1940
        %p1942 = pneg %p187
        %p1943 = pneg %p184
        %s1944 = smul.u32 %s95, 8
        %s1945 = sadd.s32 %s1944, 2
        %s1946 = sshra.s32 %s1945, 7
        %s1947 = sand.u32 %s1945, 127
        %s1948 = sadd.s32 %s1946, %s94
        %s1949 = smul.u32 %s1948, 128
        %s1950 = sshra.s32 %s1945, 7
        %s1951 = sand.u32 %s1945, 127
        %s1952 = sadd.s32 %s1949, %s1951
        %s1953 = sld [smem:[#allocation3 + %s1952]]
        %p1954 = scmp.lt.s32.totalorder %s1953, 63
        %s1955 = scalar_select %p1954, %s1953, 63
        %s1956 = scalar_lea.vmem %s13, %s1955
        %p1957 = pneg %p233
        %p1958 = pneg %p230
        %s1959 = smul.u32 %s95, 8
        %s1960 = sadd.s32 %s1959, 3
        %s1961 = sshra.s32 %s1960, 7
        %s1962 = sand.u32 %s1960, 127
        %s1963 = sadd.s32 %s1961, %s94
        %s1964 = smul.u32 %s1963, 128
        %s1965 = sshra.s32 %s1960, 7
        %s1966 = sand.u32 %s1960, 127
        %s1967 = sadd.s32 %s1964, %s1966
        %s1968 = sld [smem:[#allocation3 + %s1967]]
        %p1969 = scmp.lt.s32.totalorder %s1968, 63
        %s1970 = scalar_select %p1969, %s1968, 63
        %s1971 = scalar_lea.vmem %s15, %s1970
        %p1972 = pneg %p279
        %p1973 = pneg %p276
        %s1974 = smul.u32 %s95, 8
        %s1975 = sadd.s32 %s1974, 4
        %s1976 = sshra.s32 %s1975, 7
        %s1977 = sand.u32 %s1975, 127
        %s1978 = sadd.s32 %s1976, %s94
        %s1979 = smul.u32 %s1978, 128
        %s1980 = sshra.s32 %s1975, 7
        %s1981 = sand.u32 %s1975, 127
        %s1982 = sadd.s32 %s1979, %s1981
        %s1983 = sld [smem:[#allocation3 + %s1982]]
        %p1984 = scmp.lt.s32.totalorder %s1983, 63
        %s1985 = scalar_select %p1984, %s1983, 63
        %s1986 = scalar_lea.vmem %s17, %s1985
        %p1987 = pneg %p325
        %p1988 = pneg %p322
        %s1989 = smul.u32 %s95, 8
        %s1990 = sadd.s32 %s1989, 5
        %s1991 = sshra.s32 %s1990, 7
        %s1992 = sand.u32 %s1990, 127
        %s1993 = sadd.s32 %s1991, %s94
        %s1994 = smul.u32 %s1993, 128
        %s1995 = sshra.s32 %s1990, 7
        %s1996 = sand.u32 %s1990, 127
        %s1997 = sadd.s32 %s1994, %s1996
        %s1998 = sld [smem:[#allocation3 + %s1997]]
        %p1999 = scmp.lt.s32.totalorder %s1998, 63
        %s2000 = scalar_select %p1999, %s1998, 63
        %s2001 = scalar_lea.vmem %s19, %s2000
        %p2002 = pneg %p371
        %p2003 = pneg %p368
        %s2004 = smul.u32 %s95, 8
        %s2005 = sadd.s32 %s2004, 6
        %s2006 = sshra.s32 %s2005, 7
        %s2007 = sand.u32 %s2005, 127
        %s2008 = sadd.s32 %s2006, %s94
        %s2009 = smul.u32 %s2008, 128
        %s2010 = sshra.s32 %s2005, 7
        %s2011 = sand.u32 %s2005, 127
        %s2012 = sadd.s32 %s2009, %s2011
        %s2013 = sld [smem:[#allocation3 + %s2012]]
        %p2014 = scmp.lt.s32.totalorder %s2013, 63
        %s2015 = scalar_select %p2014, %s2013, 63
        %s2016 = scalar_lea.vmem %s21, %s2015
        %p2017 = pneg %p417
        %p2018 = pneg %p414
        %s2019 = smul.u32 %s95, 8
        %s2020 = sadd.s32 %s2019, 7
        %s2021 = sshra.s32 %s2020, 7
        %s2022 = sand.u32 %s2020, 127
        %s2023 = sadd.s32 %s2021, %s94
        %s2024 = smul.u32 %s2023, 128
        %s2025 = sshra.s32 %s2020, 7
        %s2026 = sand.u32 %s2020, 127
        %s2027 = sadd.s32 %s2024, %s2026
        %s2028 = sld [smem:[#allocation3 + %s2027]]
        %p2029 = scmp.lt.s32.totalorder %s2028, 63
        %s2030 = scalar_select %p2029, %s2028, 63
        %s2031 = scalar_lea.vmem %s23, %s2030
        %p2032 = pneg %p463
        %p2033 = pneg %p460
        %s2034 = smul.u32 %s95, 8
        %s2035 = sshra.s32 %s2034, 7
        %s2036 = sand.u32 %s2034, 127
        %s2037 = sadd.s32 %s2035, %s94
        %s2038 = smul.u32 %s2037, 128
        %s2039 = sshra.s32 %s2034, 7
        %s2040 = sand.u32 %s2034, 127
        %s2041 = sadd.s32 %s2038, %s2040
        %s2042 = sld [smem:[#allocation5 + %s2041]]
        %p2043 = scmp.lt.s32.totalorder %s2042, 31
        %s2044 = scalar_select %p2043, %s2042, 31
        %s2045 = scalar_lea.vmem %s25, %s2044
        %p2046 = pneg %p507
        %p2047 = pneg %p504
        %s2048 = smul.u32 %s95, 8
        %s2049 = sadd.s32 %s2048, 1
        %s2050 = sshra.s32 %s2049, 7
        %s2051 = sand.u32 %s2049, 127
        %s2052 = sadd.s32 %s2050, %s94
        %s2053 = smul.u32 %s2052, 128
        %s2054 = sshra.s32 %s2049, 7
        %s2055 = sand.u32 %s2049, 127
        %s2056 = sadd.s32 %s2053, %s2055
        %s2057 = sld [smem:[#allocation5 + %s2056]]
        %p2058 = scmp.lt.s32.totalorder %s2057, 31
        %s2059 = scalar_select %p2058, %s2057, 31
        %s2060 = scalar_lea.vmem %s27, %s2059
        %p2061 = pneg %p553
        %p2062 = pneg %p550
        %s2063 = smul.u32 %s95, 8
        %s2064 = sadd.s32 %s2063, 2
        %s2065 = sshra.s32 %s2064, 7
        %s2066 = sand.u32 %s2064, 127
        %s2067 = sadd.s32 %s2065, %s94
        %s2068 = smul.u32 %s2067, 128
        %s2069 = sshra.s32 %s2064, 7
        %s2070 = sand.u32 %s2064, 127
        %s2071 = sadd.s32 %s2068, %s2070
        %s2072 = sld [smem:[#allocation5 + %s2071]]
        %p2073 = scmp.lt.s32.totalorder %s2072, 31
        %s2074 = scalar_select %p2073, %s2072, 31
        %s2075 = scalar_lea.vmem %s29, %s2074
        %p2076 = pneg %p599
        %p2077 = pneg %p596
        %s2078 = smul.u32 %s95, 8
        %s2079 = sadd.s32 %s2078, 3
        %s2080 = sshra.s32 %s2079, 7
        %s2081 = sand.u32 %s2079, 127
        %s2082 = sadd.s32 %s2080, %s94
        %s2083 = smul.u32 %s2082, 128
        %s2084 = sshra.s32 %s2079, 7
        %s2085 = sand.u32 %s2079, 127
        %s2086 = sadd.s32 %s2083, %s2085
        %s2087 = sld [smem:[#allocation5 + %s2086]]
        %p2088 = scmp.lt.s32.totalorder %s2087, 31
        %s2089 = scalar_select %p2088, %s2087, 31
        %s2090 = scalar_lea.vmem %s31, %s2089
        %p2091 = pneg %p645
        %p2092 = pneg %p642
        %s2093 = smul.u32 %s95, 8
        %s2094 = sadd.s32 %s2093, 4
        %s2095 = sshra.s32 %s2094, 7
        %s2096 = sand.u32 %s2094, 127
        %s2097 = sadd.s32 %s2095, %s94
        %s2098 = smul.u32 %s2097, 128
        %s2099 = sshra.s32 %s2094, 7
        %s2100 = sand.u32 %s2094, 127
        %s2101 = sadd.s32 %s2098, %s2100
        %s2102 = sld [smem:[#allocation5 + %s2101]]
        %p2103 = scmp.lt.s32.totalorder %s2102, 31
        %s2104 = scalar_select %p2103, %s2102, 31
        %s2105 = scalar_lea.vmem %s33, %s2104
        %p2106 = pneg %p691
        %p2107 = pneg %p688
        %s2108 = smul.u32 %s95, 8
        %s2109 = sadd.s32 %s2108, 5
        %s2110 = sshra.s32 %s2109, 7
        %s2111 = sand.u32 %s2109, 127
        %s2112 = sadd.s32 %s2110, %s94
        %s2113 = smul.u32 %s2112, 128
        %s2114 = sshra.s32 %s2109, 7
        %s2115 = sand.u32 %s2109, 127
        %s2116 = sadd.s32 %s2113, %s2115
        %s2117 = sld [smem:[#allocation5 + %s2116]]
        %p2118 = scmp.lt.s32.totalorder %s2117, 31
        %s2119 = scalar_select %p2118, %s2117, 31
        %s2120 = scalar_lea.vmem %s35, %s2119
        %p2121 = pneg %p737
        %p2122 = pneg %p734
        %s2123 = smul.u32 %s95, 8
        %s2124 = sadd.s32 %s2123, 6
        %s2125 = sshra.s32 %s2124, 7
        %s2126 = sand.u32 %s2124, 127
        %s2127 = sadd.s32 %s2125, %s94
        %s2128 = smul.u32 %s2127, 128
        %s2129 = sshra.s32 %s2124, 7
        %s2130 = sand.u32 %s2124, 127
        %s2131 = sadd.s32 %s2128, %s2130
        %s2132 = sld [smem:[#allocation5 + %s2131]]
        %p2133 = scmp.lt.s32.totalorder %s2132, 31
        %s2134 = scalar_select %p2133, %s2132, 31
        %s2135 = scalar_lea.vmem %s37, %s2134
        %p2136 = pneg %p783
        %p2137 = pneg %p780
        %s2138 = smul.u32 %s95, 8
        %s2139 = sadd.s32 %s2138, 7
        %s2140 = sshra.s32 %s2139, 7
        %s2141 = sand.u32 %s2139, 127
        %s2142 = sadd.s32 %s2140, %s94
        %s2143 = smul.u32 %s2142, 128
        %s2144 = sshra.s32 %s2139, 7
        %s2145 = sand.u32 %s2139, 127
        %s2146 = sadd.s32 %s2143, %s2145
        %s2147 = sld [smem:[#allocation5 + %s2146]]
        %p2148 = scmp.lt.s32.totalorder %s2147, 31
        %s2149 = scalar_select %p2148, %s2147, 31
        %s2150 = scalar_lea.vmem %s39, %s2149
        %p2151 = pneg %p829
        %p2152 = pneg %p826
        %s2153 = smul.u32 %s95, 8
        %s2154 = sshra.s32 %s2153, 7
        %s2155 = sand.u32 %s2153, 127
        %s2156 = sadd.s32 %s2154, %s94
        %s2157 = smul.u32 %s2156, 128
        %s2158 = sshra.s32 %s2153, 7
        %s2159 = sand.u32 %s2153, 127
        %s2160 = sadd.s32 %s2157, %s2159
        %s2161 = sld [smem:[#allocation4 + %s2160]]
        %p2162 = scmp.lt.s32.totalorder %s2161, 1
        %s2163 = scalar_select %p2162, %s2161, 1
        %s2164 = scalar_lea.vmem %s41, %s2163
        %p2165 = pneg %p873
        %p2166 = pneg %p870
        %s2167 = smul.u32 %s95, 8
        %s2168 = sadd.s32 %s2167, 1
        %s2169 = sshra.s32 %s2168, 7
        %s2170 = sand.u32 %s2168, 127
        %s2171 = sadd.s32 %s2169, %s94
        %s2172 = smul.u32 %s2171, 128
        %s2173 = sshra.s32 %s2168, 7
        %s2174 = sand.u32 %s2168, 127
        %s2175 = sadd.s32 %s2172, %s2174
        %s2176 = sld [smem:[#allocation4 + %s2175]]
        %p2177 = scmp.lt.s32.totalorder %s2176, 1
        %s2178 = scalar_select %p2177, %s2176, 1
        %s2179 = scalar_lea.vmem %s43, %s2178
        %p2180 = pneg %p919
        %p2181 = pneg %p916
        %s2182 = smul.u32 %s95, 8
        %s2183 = sadd.s32 %s2182, 2
        %s2184 = sshra.s32 %s2183, 7
        %s2185 = sand.u32 %s2183, 127
        %s2186 = sadd.s32 %s2184, %s94
        %s2187 = smul.u32 %s2186, 128
        %s2188 = sshra.s32 %s2183, 7
        %s2189 = sand.u32 %s2183, 127
        %s2190 = sadd.s32 %s2187, %s2189
        %s2191 = sld [smem:[#allocation4 + %s2190]]
        %p2192 = scmp.lt.s32.totalorder %s2191, 1
        %s2193 = scalar_select %p2192, %s2191, 1
        %s2194 = scalar_lea.vmem %s45, %s2193
        %p2195 = pneg %p965
        %p2196 = pneg %p962
        %s2197 = smul.u32 %s95, 8
        %s2198 = sadd.s32 %s2197, 3
        %s2199 = sshra.s32 %s2198, 7
        %s2200 = sand.u32 %s2198, 127
        %s2201 = sadd.s32 %s2199, %s94
        %s2202 = smul.u32 %s2201, 128
        %s2203 = sshra.s32 %s2198, 7
        %s2204 = sand.u32 %s2198, 127
        %s2205 = sadd.s32 %s2202, %s2204
        %s2206 = sld [smem:[#allocation4 + %s2205]]
        %p2207 = scmp.lt.s32.totalorder %s2206, 1
        %s2208 = scalar_select %p2207, %s2206, 1
        %s2209 = scalar_lea.vmem %s47, %s2208
        %p2210 = pneg %p1011
        %p2211 = pneg %p1008
        %s2212 = smul.u32 %s95, 8
        %s2213 = sadd.s32 %s2212, 4
        %s2214 = sshra.s32 %s2213, 7
        %s2215 = sand.u32 %s2213, 127
        %s2216 = sadd.s32 %s2214, %s94
        %s2217 = smul.u32 %s2216, 128
        %s2218 = sshra.s32 %s2213, 7
        %s2219 = sand.u32 %s2213, 127
        %s2220 = sadd.s32 %s2217, %s2219
        %s2221 = sld [smem:[#allocation4 + %s2220]]
        %p2222 = scmp.lt.s32.totalorder %s2221, 1
        %s2223 = scalar_select %p2222, %s2221, 1
        %s2224 = scalar_lea.vmem %s49, %s2223
        %p2225 = pneg %p1057
        %p2226 = pneg %p1054
        %s2227 = smul.u32 %s95, 8
        %s2228 = sadd.s32 %s2227, 5
        %s2229 = sshra.s32 %s2228, 7
        %s2230 = sand.u32 %s2228, 127
        %s2231 = sadd.s32 %s2229, %s94
        %s2232 = smul.u32 %s2231, 128
        %s2233 = sshra.s32 %s2228, 7
        %s2234 = sand.u32 %s2228, 127
        %s2235 = sadd.s32 %s2232, %s2234
        %s2236 = sld [smem:[#allocation4 + %s2235]]
        %p2237 = scmp.lt.s32.totalorder %s2236, 1
        %s2238 = scalar_select %p2237, %s2236, 1
        %s2239 = scalar_lea.vmem %s51, %s2238
        %p2240 = pneg %p1103
        %p2241 = pneg %p1100
        %s2242 = smul.u32 %s95, 8
        %s2243 = sadd.s32 %s2242, 6
        %s2244 = sshra.s32 %s2243, 7
        %s2245 = sand.u32 %s2243, 127
        %s2246 = sadd.s32 %s2244, %s94
        %s2247 = smul.u32 %s2246, 128
        %s2248 = sshra.s32 %s2243, 7
        %s2249 = sand.u32 %s2243, 127
        %s2250 = sadd.s32 %s2247, %s2249
        %s2251 = sld [smem:[#allocation4 + %s2250]]
        %p2252 = scmp.lt.s32.totalorder %s2251, 1
        %s2253 = scalar_select %p2252, %s2251, 1
        %s2254 = scalar_lea.vmem %s53, %s2253
        %p2255 = pneg %p1149
        %p2256 = pneg %p1146
        %s2257 = smul.u32 %s95, 8
        %s2258 = sadd.s32 %s2257, 7
        %s2259 = sshra.s32 %s2258, 7
        %s2260 = sand.u32 %s2258, 127
        %s2261 = sadd.s32 %s2259, %s94
        %s2262 = smul.u32 %s2261, 128
        %s2263 = sshra.s32 %s2258, 7
        %s2264 = sand.u32 %s2258, 127
        %s2265 = sadd.s32 %s2262, %s2264
        %s2266 = sld [smem:[#allocation4 + %s2265]]
        %p2267 = scmp.lt.s32.totalorder %s2266, 1
        %s2268 = scalar_select %p2267, %s2266, 1
        %s2269 = scalar_lea.vmem %s55, %s2268
        %p2270 = pneg %p1195
        %p2271 = pneg %p1192
        %p2272 = pneg %p1216
        %p2273 = pneg %p1213
        %p2274 = pneg %p1237
        %p2275 = pneg %p1234
        %p2276 = pneg %p1265
        %p2277 = pneg %p1262
        %s2278 = sand.u32 %s1252, 1
        %s2279 = scalar_lea.sflag [#allocation8], %s2278
        %s2280 = sand.u32 %s1252, 1
        %s2281 = smul.addr %s2280, 8
        %s2282 = scalar_lea.vmem [#allocation7], %s2281
        %s2283 = smul.u32 %s95, 8
        %s2284 = sshra.s32 %s2283, 7
        %s2285 = sand.u32 %s2283, 127
        %s2286 = sadd.s32 %s2284, %s94
        %s2287 = smul.u32 %s2286, 128
        %s2288 = sshra.s32 %s2283, 7
        %s2289 = sand.u32 %s2283, 127
        %s2290 = sadd.s32 %s2287, %s2289
        %s2291 = sld [smem:[#allocation3 + %s2290]]
        %p2292 = scmp.lt.s32.totalorder %s2291, 63
        %s2293 = scalar_select %p2292, %s2291, 63
        %s2294 = scalar_lea.vmem %s9, %s2293
        %s2295 = smul.u32 %s95, 8
        %s2296 = sshra.s32 %s2295, 7
        %s2297 = sand.u32 %s2295, 127
        %s2298 = sadd.s32 %s2296, %s94
        %s2299 = smul.u32 %s2298, 128
        %s2300 = sshra.s32 %s2295, 7
        %s2301 = sand.u32 %s2295, 127
        %s2302 = sadd.s32 %s2299, %s2301
        %s2303 = sld [smem:[#allocation3 + %s2302]]
        %s2304 = smul.u32 %s95, 8
        %s2305 = sadd.s32 %s2304, 1
        %s2306 = sshra.s32 %s2305, 7
        %s2307 = sand.u32 %s2305, 127
        %s2308 = sadd.s32 %s2306, %s94
        %s2309 = smul.u32 %s2308, 128
        %s2310 = sshra.s32 %s2305, 7
        %s2311 = sand.u32 %s2305, 127
        %s2312 = sadd.s32 %s2309, %s2311
        %s2313 = sld [smem:[#allocation3 + %s2312]]
        %p2314 = scmp.lt.s32.totalorder %s2313, 63
        %s2315 = scalar_select %p2314, %s2313, 63
        %s2316 = scalar_lea.vmem %s11, %s2315
        %s2317 = smul.u32 %s95, 8
        %s2318 = sadd.s32 %s2317, 1
        %s2319 = sshra.s32 %s2318, 7
        %s2320 = sand.u32 %s2318, 127
        %s2321 = sadd.s32 %s2319, %s94
        %s2322 = smul.u32 %s2321, 128
        %s2323 = sshra.s32 %s2318, 7
        %s2324 = sand.u32 %s2318, 127
        %s2325 = sadd.s32 %s2322, %s2324
        %s2326 = sld [smem:[#allocation3 + %s2325]]
        %s2327 = smul.u32 %s95, 8
        %s2328 = sadd.s32 %s2327, 2
        %s2329 = sshra.s32 %s2328, 7
        %s2330 = sand.u32 %s2328, 127
        %s2331 = sadd.s32 %s2329, %s94
        %s2332 = smul.u32 %s2331, 128
        %s2333 = sshra.s32 %s2328, 7
        %s2334 = sand.u32 %s2328, 127
        %s2335 = sadd.s32 %s2332, %s2334
        %s2336 = sld [smem:[#allocation3 + %s2335]]
        %p2337 = scmp.lt.s32.totalorder %s2336, 63
        %s2338 = scalar_select %p2337, %s2336, 63
        %s2339 = scalar_lea.vmem %s13, %s2338
        %s2340 = smul.u32 %s95, 8
        %s2341 = sadd.s32 %s2340, 2
        %s2342 = sshra.s32 %s2341, 7
        %s2343 = sand.u32 %s2341, 127
        %s2344 = sadd.s32 %s2342, %s94
        %s2345 = smul.u32 %s2344, 128
        %s2346 = sshra.s32 %s2341, 7
        %s2347 = sand.u32 %s2341, 127
        %s2348 = sadd.s32 %s2345, %s2347
        %s2349 = sld [smem:[#allocation3 + %s2348]]
        %s2350 = smul.u32 %s95, 8
        %s2351 = sadd.s32 %s2350, 3
        %s2352 = sshra.s32 %s2351, 7
        %s2353 = sand.u32 %s2351, 127
        %s2354 = sadd.s32 %s2352, %s94
        %s2355 = smul.u32 %s2354, 128
        %s2356 = sshra.s32 %s2351, 7
        %s2357 = sand.u32 %s2351, 127
        %s2358 = sadd.s32 %s2355, %s2357
        %s2359 = sld [smem:[#allocation3 + %s2358]]
        %p2360 = scmp.lt.s32.totalorder %s2359, 63
        %s2361 = scalar_select %p2360, %s2359, 63
        %s2362 = scalar_lea.vmem %s15, %s2361
        %s2363 = smul.u32 %s95, 8
        %s2364 = sadd.s32 %s2363, 3
        %s2365 = sshra.s32 %s2364, 7
        %s2366 = sand.u32 %s2364, 127
        %s2367 = sadd.s32 %s2365, %s94
        %s2368 = smul.u32 %s2367, 128
        %s2369 = sshra.s32 %s2364, 7
        %s2370 = sand.u32 %s2364, 127
        %s2371 = sadd.s32 %s2368, %s2370
        %s2372 = sld [smem:[#allocation3 + %s2371]]
        %s2373 = smul.u32 %s95, 8
        %s2374 = sadd.s32 %s2373, 4
        %s2375 = sshra.s32 %s2374, 7
        %s2376 = sand.u32 %s2374, 127
        %s2377 = sadd.s32 %s2375, %s94
        %s2378 = smul.u32 %s2377, 128
        %s2379 = sshra.s32 %s2374, 7
        %s2380 = sand.u32 %s2374, 127
        %s2381 = sadd.s32 %s2378, %s2380
        %s2382 = sld [smem:[#allocation3 + %s2381]]
        %p2383 = scmp.lt.s32.totalorder %s2382, 63
        %s2384 = scalar_select %p2383, %s2382, 63
        %s2385 = scalar_lea.vmem %s17, %s2384
        %s2386 = smul.u32 %s95, 8
        %s2387 = sadd.s32 %s2386, 4
        %s2388 = sshra.s32 %s2387, 7
        %s2389 = sand.u32 %s2387, 127
        %s2390 = sadd.s32 %s2388, %s94
        %s2391 = smul.u32 %s2390, 128
        %s2392 = sshra.s32 %s2387, 7
        %s2393 = sand.u32 %s2387, 127
        %s2394 = sadd.s32 %s2391, %s2393
        %s2395 = sld [smem:[#allocation3 + %s2394]]
        %s2396 = smul.u32 %s95, 8
        %s2397 = sadd.s32 %s2396, 5
        %s2398 = sshra.s32 %s2397, 7
        %s2399 = sand.u32 %s2397, 127
        %s2400 = sadd.s32 %s2398, %s94
        %s2401 = smul.u32 %s2400, 128
        %s2402 = sshra.s32 %s2397, 7
        %s2403 = sand.u32 %s2397, 127
        %s2404 = sadd.s32 %s2401, %s2403
        %s2405 = sld [smem:[#allocation3 + %s2404]]
        %p2406 = scmp.lt.s32.totalorder %s2405, 63
        %s2407 = scalar_select %p2406, %s2405, 63
        %s2408 = scalar_lea.vmem %s19, %s2407
        %s2409 = smul.u32 %s95, 8
        %s2410 = sadd.s32 %s2409, 5
        %s2411 = sshra.s32 %s2410, 7
        %s2412 = sand.u32 %s2410, 127
        %s2413 = sadd.s32 %s2411, %s94
        %s2414 = smul.u32 %s2413, 128
        %s2415 = sshra.s32 %s2410, 7
        %s2416 = sand.u32 %s2410, 127
        %s2417 = sadd.s32 %s2414, %s2416
        %s2418 = sld [smem:[#allocation3 + %s2417]]
        %s2419 = smul.u32 %s95, 8
        %s2420 = sadd.s32 %s2419, 6
        %s2421 = sshra.s32 %s2420, 7
        %s2422 = sand.u32 %s2420, 127
        %s2423 = sadd.s32 %s2421, %s94
        %s2424 = smul.u32 %s2423, 128
        %s2425 = sshra.s32 %s2420, 7
        %s2426 = sand.u32 %s2420, 127
        %s2427 = sadd.s32 %s2424, %s2426
        %s2428 = sld [smem:[#allocation3 + %s2427]]
        %p2429 = scmp.lt.s32.totalorder %s2428, 63
        %s2430 = scalar_select %p2429, %s2428, 63
        %s2431 = scalar_lea.vmem %s21, %s2430
        %s2432 = smul.u32 %s95, 8
        %s2433 = sadd.s32 %s2432, 6
        %s2434 = sshra.s32 %s2433, 7
        %s2435 = sand.u32 %s2433, 127
        %s2436 = sadd.s32 %s2434, %s94
        %s2437 = smul.u32 %s2436, 128
        %s2438 = sshra.s32 %s2433, 7
        %s2439 = sand.u32 %s2433, 127
        %s2440 = sadd.s32 %s2437, %s2439
        %s2441 = sld [smem:[#allocation3 + %s2440]]
        %s2442 = smul.u32 %s95, 8
        %s2443 = sadd.s32 %s2442, 7
        %s2444 = sshra.s32 %s2443, 7
        %s2445 = sand.u32 %s2443, 127
        %s2446 = sadd.s32 %s2444, %s94
        %s2447 = smul.u32 %s2446, 128
        %s2448 = sshra.s32 %s2443, 7
        %s2449 = sand.u32 %s2443, 127
        %s2450 = sadd.s32 %s2447, %s2449
        %s2451 = sld [smem:[#allocation3 + %s2450]]
        %p2452 = scmp.lt.s32.totalorder %s2451, 63
        %s2453 = scalar_select %p2452, %s2451, 63
        %s2454 = scalar_lea.vmem %s23, %s2453
        %s2455 = smul.u32 %s95, 8
        %s2456 = sadd.s32 %s2455, 7
        %s2457 = sshra.s32 %s2456, 7
        %s2458 = sand.u32 %s2456, 127
        %s2459 = sadd.s32 %s2457, %s94
        %s2460 = smul.u32 %s2459, 128
        %s2461 = sshra.s32 %s2456, 7
        %s2462 = sand.u32 %s2456, 127
        %s2463 = sadd.s32 %s2460, %s2462
        %s2464 = sld [smem:[#allocation3 + %s2463]]
        %s2465 = smul.u32 %s95, 8
        %s2466 = sshra.s32 %s2465, 7
        %s2467 = sand.u32 %s2465, 127
        %s2468 = sadd.s32 %s2466, %s94
        %s2469 = smul.u32 %s2468, 128
        %s2470 = sshra.s32 %s2465, 7
        %s2471 = sand.u32 %s2465, 127
        %s2472 = sadd.s32 %s2469, %s2471
        %s2473 = sld [smem:[#allocation5 + %s2472]]
        %p2474 = scmp.lt.s32.totalorder %s2473, 31
        %s2475 = scalar_select %p2474, %s2473, 31
        %s2476 = scalar_lea.vmem %s25, %s2475
        %s2477 = smul.u32 %s95, 8
        %s2478 = sshra.s32 %s2477, 7
        %s2479 = sand.u32 %s2477, 127
        %s2480 = sadd.s32 %s2478, %s94
        %s2481 = smul.u32 %s2480, 128
        %s2482 = sshra.s32 %s2477, 7
        %s2483 = sand.u32 %s2477, 127
        %s2484 = sadd.s32 %s2481, %s2483
        %s2485 = sld [smem:[#allocation5 + %s2484]]
        %s2486 = smul.u32 %s95, 8
        %s2487 = sadd.s32 %s2486, 1
        %s2488 = sshra.s32 %s2487, 7
        %s2489 = sand.u32 %s2487, 127
        %s2490 = sadd.s32 %s2488, %s94
        %s2491 = smul.u32 %s2490, 128
        %s2492 = sshra.s32 %s2487, 7
        %s2493 = sand.u32 %s2487, 127
        %s2494 = sadd.s32 %s2491, %s2493
        %s2495 = sld [smem:[#allocation5 + %s2494]]
        %p2496 = scmp.lt.s32.totalorder %s2495, 31
        %s2497 = scalar_select %p2496, %s2495, 31
        %s2498 = scalar_lea.vmem %s27, %s2497
        %s2499 = smul.u32 %s95, 8
        %s2500 = sadd.s32 %s2499, 1
        %s2501 = sshra.s32 %s2500, 7
        %s2502 = sand.u32 %s2500, 127
        %s2503 = sadd.s32 %s2501, %s94
        %s2504 = smul.u32 %s2503, 128
        %s2505 = sshra.s32 %s2500, 7
        %s2506 = sand.u32 %s2500, 127
        %s2507 = sadd.s32 %s2504, %s2506
        %s2508 = sld [smem:[#allocation5 + %s2507]]
        %s2509 = smul.u32 %s95, 8
        %s2510 = sadd.s32 %s2509, 2
        %s2511 = sshra.s32 %s2510, 7
        %s2512 = sand.u32 %s2510, 127
        %s2513 = sadd.s32 %s2511, %s94
        %s2514 = smul.u32 %s2513, 128
        %s2515 = sshra.s32 %s2510, 7
        %s2516 = sand.u32 %s2510, 127
        %s2517 = sadd.s32 %s2514, %s2516
        %s2518 = sld [smem:[#allocation5 + %s2517]]
        %p2519 = scmp.lt.s32.totalorder %s2518, 31
        %s2520 = scalar_select %p2519, %s2518, 31
        %s2521 = scalar_lea.vmem %s29, %s2520
        %s2522 = smul.u32 %s95, 8
        %s2523 = sadd.s32 %s2522, 2
        %s2524 = sshra.s32 %s2523, 7
        %s2525 = sand.u32 %s2523, 127
        %s2526 = sadd.s32 %s2524, %s94
        %s2527 = smul.u32 %s2526, 128
        %s2528 = sshra.s32 %s2523, 7
        %s2529 = sand.u32 %s2523, 127
        %s2530 = sadd.s32 %s2527, %s2529
        %s2531 = sld [smem:[#allocation5 + %s2530]]
        %s2532 = smul.u32 %s95, 8
        %s2533 = sadd.s32 %s2532, 3
        %s2534 = sshra.s32 %s2533, 7
        %s2535 = sand.u32 %s2533, 127
        %s2536 = sadd.s32 %s2534, %s94
        %s2537 = smul.u32 %s2536, 128
        %s2538 = sshra.s32 %s2533, 7
        %s2539 = sand.u32 %s2533, 127
        %s2540 = sadd.s32 %s2537, %s2539
        %s2541 = sld [smem:[#allocation5 + %s2540]]
        %p2542 = scmp.lt.s32.totalorder %s2541, 31
        %s2543 = scalar_select %p2542, %s2541, 31
        %s2544 = scalar_lea.vmem %s31, %s2543
        %s2545 = smul.u32 %s95, 8
        %s2546 = sadd.s32 %s2545, 3
        %s2547 = sshra.s32 %s2546, 7
        %s2548 = sand.u32 %s2546, 127
        %s2549 = sadd.s32 %s2547, %s94
        %s2550 = smul.u32 %s2549, 128
        %s2551 = sshra.s32 %s2546, 7
        %s2552 = sand.u32 %s2546, 127
        %s2553 = sadd.s32 %s2550, %s2552
        %s2554 = sld [smem:[#allocation5 + %s2553]]
        %s2555 = smul.u32 %s95, 8
        %s2556 = sadd.s32 %s2555, 4
        %s2557 = sshra.s32 %s2556, 7
        %s2558 = sand.u32 %s2556, 127
        %s2559 = sadd.s32 %s2557, %s94
        %s2560 = smul.u32 %s2559, 128
        %s2561 = sshra.s32 %s2556, 7
        %s2562 = sand.u32 %s2556, 127
        %s2563 = sadd.s32 %s2560, %s2562
        %s2564 = sld [smem:[#allocation5 + %s2563]]
        %p2565 = scmp.lt.s32.totalorder %s2564, 31
        %s2566 = scalar_select %p2565, %s2564, 31
        %s2567 = scalar_lea.vmem %s33, %s2566
        %s2568 = smul.u32 %s95, 8
        %s2569 = sadd.s32 %s2568, 4
        %s2570 = sshra.s32 %s2569, 7
        %s2571 = sand.u32 %s2569, 127
        %s2572 = sadd.s32 %s2570, %s94
        %s2573 = smul.u32 %s2572, 128
        %s2574 = sshra.s32 %s2569, 7
        %s2575 = sand.u32 %s2569, 127
        %s2576 = sadd.s32 %s2573, %s2575
        %s2577 = sld [smem:[#allocation5 + %s2576]]
        %s2578 = smul.u32 %s95, 8
        %s2579 = sadd.s32 %s2578, 5
        %s2580 = sshra.s32 %s2579, 7
        %s2581 = sand.u32 %s2579, 127
        %s2582 = sadd.s32 %s2580, %s94
        %s2583 = smul.u32 %s2582, 128
        %s2584 = sshra.s32 %s2579, 7
        %s2585 = sand.u32 %s2579, 127
        %s2586 = sadd.s32 %s2583, %s2585
        %s2587 = sld [smem:[#allocation5 + %s2586]]
        %p2588 = scmp.lt.s32.totalorder %s2587, 31
        %s2589 = scalar_select %p2588, %s2587, 31
        %s2590 = scalar_lea.vmem %s35, %s2589
        %s2591 = smul.u32 %s95, 8
        %s2592 = sadd.s32 %s2591, 5
        %s2593 = sshra.s32 %s2592, 7
        %s2594 = sand.u32 %s2592, 127
        %s2595 = sadd.s32 %s2593, %s94
        %s2596 = smul.u32 %s2595, 128
        %s2597 = sshra.s32 %s2592, 7
        %s2598 = sand.u32 %s2592, 127
        %s2599 = sadd.s32 %s2596, %s2598
        %s2600 = sld [smem:[#allocation5 + %s2599]]
        %s2601 = smul.u32 %s95, 8
        %s2602 = sadd.s32 %s2601, 6
        %s2603 = sshra.s32 %s2602, 7
        %s2604 = sand.u32 %s2602, 127
        %s2605 = sadd.s32 %s2603, %s94
        %s2606 = smul.u32 %s2605, 128
        %s2607 = sshra.s32 %s2602, 7
        %s2608 = sand.u32 %s2602, 127
        %s2609 = sadd.s32 %s2606, %s2608
        %s2610 = sld [smem:[#allocation5 + %s2609]]
        %p2611 = scmp.lt.s32.totalorder %s2610, 31
        %s2612 = scalar_select %p2611, %s2610, 31
        %s2613 = scalar_lea.vmem %s37, %s2612
        %s2614 = smul.u32 %s95, 8
        %s2615 = sadd.s32 %s2614, 6
        %s2616 = sshra.s32 %s2615, 7
        %s2617 = sand.u32 %s2615, 127
        %s2618 = sadd.s32 %s2616, %s94
        %s2619 = smul.u32 %s2618, 128
        %s2620 = sshra.s32 %s2615, 7
        %s2621 = sand.u32 %s2615, 127
        %s2622 = sadd.s32 %s2619, %s2621
        %s2623 = sld [smem:[#allocation5 + %s2622]]
        %s2624 = smul.u32 %s95, 8
        %s2625 = sadd.s32 %s2624, 7
        %s2626 = sshra.s32 %s2625, 7
        %s2627 = sand.u32 %s2625, 127
        %s2628 = sadd.s32 %s2626, %s94
        %s2629 = smul.u32 %s2628, 128
        %s2630 = sshra.s32 %s2625, 7
        %s2631 = sand.u32 %s2625, 127
        %s2632 = sadd.s32 %s2629, %s2631
        %s2633 = sld [smem:[#allocation5 + %s2632]]
        %p2634 = scmp.lt.s32.totalorder %s2633, 31
        %s2635 = scalar_select %p2634, %s2633, 31
        %s2636 = scalar_lea.vmem %s39, %s2635
        %s2637 = smul.u32 %s95, 8
        %s2638 = sadd.s32 %s2637, 7
        %s2639 = sshra.s32 %s2638, 7
        %s2640 = sand.u32 %s2638, 127
        %s2641 = sadd.s32 %s2639, %s94
        %s2642 = smul.u32 %s2641, 128
        %s2643 = sshra.s32 %s2638, 7
        %s2644 = sand.u32 %s2638, 127
        %s2645 = sadd.s32 %s2642, %s2644
        %s2646 = sld [smem:[#allocation5 + %s2645]]
        %s2647 = smul.u32 %s95, 8
        %s2648 = sshra.s32 %s2647, 7
        %s2649 = sand.u32 %s2647, 127
        %s2650 = sadd.s32 %s2648, %s94
        %s2651 = smul.u32 %s2650, 128
        %s2652 = sshra.s32 %s2647, 7
        %s2653 = sand.u32 %s2647, 127
        %s2654 = sadd.s32 %s2651, %s2653
        %s2655 = sld [smem:[#allocation4 + %s2654]]
        %p2656 = scmp.lt.s32.totalorder %s2655, 1
        %s2657 = scalar_select %p2656, %s2655, 1
        %s2658 = scalar_lea.vmem %s41, %s2657
        %s2659 = smul.u32 %s95, 8
        %s2660 = sshra.s32 %s2659, 7
        %s2661 = sand.u32 %s2659, 127
        %s2662 = sadd.s32 %s2660, %s94
        %s2663 = smul.u32 %s2662, 128
        %s2664 = sshra.s32 %s2659, 7
        %s2665 = sand.u32 %s2659, 127
        %s2666 = sadd.s32 %s2663, %s2665
        %s2667 = sld [smem:[#allocation4 + %s2666]]
        %s2668 = smul.u32 %s95, 8
        %s2669 = sadd.s32 %s2668, 1
        %s2670 = sshra.s32 %s2669, 7
        %s2671 = sand.u32 %s2669, 127
        %s2672 = sadd.s32 %s2670, %s94
        %s2673 = smul.u32 %s2672, 128
        %s2674 = sshra.s32 %s2669, 7
        %s2675 = sand.u32 %s2669, 127
        %s2676 = sadd.s32 %s2673, %s2675
        %s2677 = sld [smem:[#allocation4 + %s2676]]
        %p2678 = scmp.lt.s32.totalorder %s2677, 1
        %s2679 = scalar_select %p2678, %s2677, 1
        %s2680 = scalar_lea.vmem %s43, %s2679
        %s2681 = smul.u32 %s95, 8
        %s2682 = sadd.s32 %s2681, 1
        %s2683 = sshra.s32 %s2682, 7
        %s2684 = sand.u32 %s2682, 127
        %s2685 = sadd.s32 %s2683, %s94
        %s2686 = smul.u32 %s2685, 128
        %s2687 = sshra.s32 %s2682, 7
        %s2688 = sand.u32 %s2682, 127
        %s2689 = sadd.s32 %s2686, %s2688
        %s2690 = sld [smem:[#allocation4 + %s2689]]
        %s2691 = smul.u32 %s95, 8
        %s2692 = sadd.s32 %s2691, 2
        %s2693 = sshra.s32 %s2692, 7
        %s2694 = sand.u32 %s2692, 127
        %s2695 = sadd.s32 %s2693, %s94
        %s2696 = smul.u32 %s2695, 128
        %s2697 = sshra.s32 %s2692, 7
        %s2698 = sand.u32 %s2692, 127
        %s2699 = sadd.s32 %s2696, %s2698
        %s2700 = sld [smem:[#allocation4 + %s2699]]
        %p2701 = scmp.lt.s32.totalorder %s2700, 1
        %s2702 = scalar_select %p2701, %s2700, 1
        %s2703 = scalar_lea.vmem %s45, %s2702
        %s2704 = smul.u32 %s95, 8
        %s2705 = sadd.s32 %s2704, 2
        %s2706 = sshra.s32 %s2705, 7
        %s2707 = sand.u32 %s2705, 127
        %s2708 = sadd.s32 %s2706, %s94
        %s2709 = smul.u32 %s2708, 128
        %s2710 = sshra.s32 %s2705, 7
        %s2711 = sand.u32 %s2705, 127
        %s2712 = sadd.s32 %s2709, %s2711
        %s2713 = sld [smem:[#allocation4 + %s2712]]
        %s2714 = smul.u32 %s95, 8
        %s2715 = sadd.s32 %s2714, 3
        %s2716 = sshra.s32 %s2715, 7
        %s2717 = sand.u32 %s2715, 127
        %s2718 = sadd.s32 %s2716, %s94
        %s2719 = smul.u32 %s2718, 128
        %s2720 = sshra.s32 %s2715, 7
        %s2721 = sand.u32 %s2715, 127
        %s2722 = sadd.s32 %s2719, %s2721
        %s2723 = sld [smem:[#allocation4 + %s2722]]
        %p2724 = scmp.lt.s32.totalorder %s2723, 1
        %s2725 = scalar_select %p2724, %s2723, 1
        %s2726 = scalar_lea.vmem %s47, %s2725
        %s2727 = smul.u32 %s95, 8
        %s2728 = sadd.s32 %s2727, 3
        %s2729 = sshra.s32 %s2728, 7
        %s2730 = sand.u32 %s2728, 127
        %s2731 = sadd.s32 %s2729, %s94
        %s2732 = smul.u32 %s2731, 128
        %s2733 = sshra.s32 %s2728, 7
        %s2734 = sand.u32 %s2728, 127
        %s2735 = sadd.s32 %s2732, %s2734
        %s2736 = sld [smem:[#allocation4 + %s2735]]
        %s2737 = smul.u32 %s95, 8
        %s2738 = sadd.s32 %s2737, 4
        %s2739 = sshra.s32 %s2738, 7
        %s2740 = sand.u32 %s2738, 127
        %s2741 = sadd.s32 %s2739, %s94
        %s2742 = smul.u32 %s2741, 128
        %s2743 = sshra.s32 %s2738, 7
        %s2744 = sand.u32 %s2738, 127
        %s2745 = sadd.s32 %s2742, %s2744
        %s2746 = sld [smem:[#allocation4 + %s2745]]
        %p2747 = scmp.lt.s32.totalorder %s2746, 1
        %s2748 = scalar_select %p2747, %s2746, 1
        %s2749 = scalar_lea.vmem %s49, %s2748
        %s2750 = smul.u32 %s95, 8
        %s2751 = sadd.s32 %s2750, 4
        %s2752 = sshra.s32 %s2751, 7
        %s2753 = sand.u32 %s2751, 127
        %s2754 = sadd.s32 %s2752, %s94
        %s2755 = smul.u32 %s2754, 128
        %s2756 = sshra.s32 %s2751, 7
        %s2757 = sand.u32 %s2751, 127
        %s2758 = sadd.s32 %s2755, %s2757
        %s2759 = sld [smem:[#allocation4 + %s2758]]
        %s2760 = smul.u32 %s95, 8
        %s2761 = sadd.s32 %s2760, 5
        %s2762 = sshra.s32 %s2761, 7
        %s2763 = sand.u32 %s2761, 127
        %s2764 = sadd.s32 %s2762, %s94
        %s2765 = smul.u32 %s2764, 128
        %s2766 = sshra.s32 %s2761, 7
        %s2767 = sand.u32 %s2761, 127
        %s2768 = sadd.s32 %s2765, %s2767
        %s2769 = sld [smem:[#allocation4 + %s2768]]
        %p2770 = scmp.lt.s32.totalorder %s2769, 1
        %s2771 = scalar_select %p2770, %s2769, 1
        %s2772 = scalar_lea.vmem %s51, %s2771
        %s2773 = smul.u32 %s95, 8
        %s2774 = sadd.s32 %s2773, 5
        %s2775 = sshra.s32 %s2774, 7
        %s2776 = sand.u32 %s2774, 127
        %s2777 = sadd.s32 %s2775, %s94
        %s2778 = smul.u32 %s2777, 128
        %s2779 = sshra.s32 %s2774, 7
        %s2780 = sand.u32 %s2774, 127
        %s2781 = sadd.s32 %s2778, %s2780
        %s2782 = sld [smem:[#allocation4 + %s2781]]
        %s2783 = smul.u32 %s95, 8
        %s2784 = sadd.s32 %s2783, 6
        %s2785 = sshra.s32 %s2784, 7
        %s2786 = sand.u32 %s2784, 127
        %s2787 = sadd.s32 %s2785, %s94
        %s2788 = smul.u32 %s2787, 128
        %s2789 = sshra.s32 %s2784, 7
        %s2790 = sand.u32 %s2784, 127
        %s2791 = sadd.s32 %s2788, %s2790
        %s2792 = sld [smem:[#allocation4 + %s2791]]
        %p2793 = scmp.lt.s32.totalorder %s2792, 1
        %s2794 = scalar_select %p2793, %s2792, 1
        %s2795 = scalar_lea.vmem %s53, %s2794
        %s2796 = smul.u32 %s95, 8
        %s2797 = sadd.s32 %s2796, 6
        %s2798 = sshra.s32 %s2797, 7
        %s2799 = sand.u32 %s2797, 127
        %s2800 = sadd.s32 %s2798, %s94
        %s2801 = smul.u32 %s2800, 128
        %s2802 = sshra.s32 %s2797, 7
        %s2803 = sand.u32 %s2797, 127
        %s2804 = sadd.s32 %s2801, %s2803
        %s2805 = sld [smem:[#allocation4 + %s2804]]
        %s2806 = smul.u32 %s95, 8
        %s2807 = sadd.s32 %s2806, 7
        %s2808 = sshra.s32 %s2807, 7
        %s2809 = sand.u32 %s2807, 127
        %s2810 = sadd.s32 %s2808, %s94
        %s2811 = smul.u32 %s2810, 128
        %s2812 = sshra.s32 %s2807, 7
        %s2813 = sand.u32 %s2807, 127
        %s2814 = sadd.s32 %s2811, %s2813
        %s2815 = sld [smem:[#allocation4 + %s2814]]
        %p2816 = scmp.lt.s32.totalorder %s2815, 1
        %s2817 = scalar_select %p2816, %s2815, 1
        %s2818 = scalar_lea.vmem %s55, %s2817
        %s2819 = smul.u32 %s95, 8
        %s2820 = sadd.s32 %s2819, 7
        %s2821 = sshra.s32 %s2820, 7
        %s2822 = sand.u32 %s2820, 127
        %s2823 = sadd.s32 %s2821, %s94
        %s2824 = smul.u32 %s2823, 128
        %s2825 = sshra.s32 %s2820, 7
        %s2826 = sand.u32 %s2820, 127
        %s2827 = sadd.s32 %s2824, %s2826
        %s2828 = sld [smem:[#allocation4 + %s2827]]
        %v2829 = vld [vmem:[%s2294] sm:$0x1]
        %v2830 = vld [vmem:[%s2476] sm:$0x1]
        %v2831 = vadd.f32 %v2829, %v2830
        %v2832 = vld [vmem:[%s2658] sm:$0x1]
        %v2833 = vadd.f32 %v2831, %v2832
        %v2834 = vld [vmem:[%s2316] sm:$0x1]
        %v2835 = vld [vmem:[%s2498] sm:$0x1]
        %v2836 = vadd.f32 %v2834, %v2835
        %v2837 = vld [vmem:[%s2680] sm:$0x1]
        %v2838 = vadd.f32 %v2836, %v2837
        %v2839 = vld [vmem:[%s2339] sm:$0x1]
        %v2840 = vld [vmem:[%s2521] sm:$0x1]
        %v2841 = vadd.f32 %v2839, %v2840
        %v2842 = vld [vmem:[%s2703] sm:$0x1]
        %v2843 = vadd.f32 %v2841, %v2842
        %v2844 = vld [vmem:[%s2362] sm:$0x1]
        %v2845 = vld [vmem:[%s2544] sm:$0x1]
        %v2846 = vadd.f32 %v2844, %v2845
        %v2847 = vld [vmem:[%s2726] sm:$0x1]
        %v2848 = vadd.f32 %v2846, %v2847
        %v2849 = vld [vmem:[%s2385] sm:$0x1]
        %v2850 = vld [vmem:[%s2567] sm:$0x1]
        %v2851 = vadd.f32 %v2849, %v2850
        %v2852 = vld [vmem:[%s2749] sm:$0x1]
        %v2853 = vadd.f32 %v2851, %v2852
        %v2854 = vld [vmem:[%s2408] sm:$0x1]
        %v2855 = vld [vmem:[%s2590] sm:$0x1]
        %v2856 = vadd.f32 %v2854, %v2855
        %v2857 = vld [vmem:[%s2772] sm:$0x1]
        %v2858 = vadd.f32 %v2856, %v2857
        %v2859 = vld [vmem:[%s2431] sm:$0x1]
        %v2860 = vld [vmem:[%s2613] sm:$0x1]
        %v2861 = vadd.f32 %v2859, %v2860
        %v2862 = vld [vmem:[%s2795] sm:$0x1]
        %v2863 = vadd.f32 %v2861, %v2862
        %v2864 = vld [vmem:[%s2454] sm:$0x1]
        %v2865 = vld [vmem:[%s2636] sm:$0x1]
        %v2866 = vadd.f32 %v2864, %v2865
        %v2867 = vld [vmem:[%s2818] sm:$0x1]
        %v2868 = vadd.f32 %v2866, %v2867
        %v2870 = vlaneseq
        %v2871 = vshrl.u32 %v2870, 7
        %v2872 = vsub.s32 0, %v2871
        %v2873 = vrot.slane %v2838, %v2872
        %v2876 = vlaneseq
        %v2877 = vshrl.u32 %v2876, 7
        %v2878 = vsub.s32 0, %v2877
        %v2879 = vrot.slane %v2843, %v2878
        %v2882 = vlaneseq
        %v2883 = vshrl.u32 %v2882, 7
        %v2884 = vsub.s32 0, %v2883
        %v2885 = vrot.slane %v2848, %v2884
        %v2888 = vlaneseq
        %v2889 = vshrl.u32 %v2888, 7
        %v2890 = vsub.s32 0, %v2889
        %v2891 = vrot.slane %v2853, %v2890
        %v2894 = vlaneseq
        %v2895 = vshrl.u32 %v2894, 7
        %v2896 = vsub.s32 0, %v2895
        %v2897 = vrot.slane %v2858, %v2896
        %v2900 = vlaneseq
        %v2901 = vshrl.u32 %v2900, 7
        %v2902 = vsub.s32 0, %v2901
        %v2903 = vrot.slane %v2863, %v2902
        %v2906 = vlaneseq
        %v2907 = vshrl.u32 %v2906, 7
        %v2908 = vsub.s32 0, %v2907
        %v2909 = vrot.slane %v2868, %v2908
        %vm2911 = vcmask 1040384
        %v2912 = vsel %vm2911, %v2833, %v2873
        %vm2913 = vcmask 1041408
        %v2914 = vsel %vm2913, %v2912, %v2879
        %vm2915 = vcmask 1042432
        %v2916 = vsel %vm2915, %v2914, %v2885
        %vm2917 = vcmask 1043456
        %v2918 = vsel %vm2917, %v2916, %v2891
        %vm2919 = vcmask 1044480
        %v2920 = vsel %vm2919, %v2918, %v2897
        %vm2921 = vcmask 1045504
        %v2922 = vsel %vm2921, %v2920, %v2903
        %vm2923 = vcmask 1046528
        %v2924 = vsel %vm2923, %v2922, %v2909
        %vm2925 = vcmask 261120
        %v2926 = vsel %vm2925, %v2924, 0.0
        %2927 = vadd.xlane.f32.xlu0 %v2926
        %v2928 = vpop.xlane.xlu0 %2927
        %v2929 = vrcp.pop 32.0
        %v2930 = vmul.f32 %v2928, %v2929
        %v2931 = vsub.f32 %v2924, %v2930
        %v2932 = vmul.f32 %v2931, %v2931
        %v2933 = vsel %vm2925, %v2932, 0.0
        %2934 = vadd.xlane.f32.xlu0 %v2933
        %v2935 = vpop.xlane.xlu0 %2934
        %v2936 = vmul.f32 %v2935, %v2929
        %v2937 = vadd.f32 %v2936, 1e-12
        %v2938 = vrsqrt.pop %v2937
        %v2939 = vmul.f32 %v2931, %v2938
        %v2940 = vld [vmem:[%s57] sm:$0x1]
        %v2942 = vlaneseq
        %v2943 = vshrl.u32 %v2942, 7
        %v2944 = vsub.s32 0, %v2943
        %v2945 = vrot.slane %v2940, %v2944
        %v2947 = vmul.f32 %v2939, %v2945
        %v2948 = vld [vmem:[%s59] sm:$0x1]
        %v2950 = vlaneseq
        %v2951 = vshrl.u32 %v2950, 7
        %v2952 = vsub.s32 0, %v2951
        %v2953 = vrot.slane %v2948, %v2952
        %v2955 = vadd.f32 %v2947, %v2953
        %2956 = vst.msk [vmem:[%s2282] sm:$0xff] %vm2925, %v2955
        %s2957 = sand.u32 %s1252, 1
        %s2958 = scalar_lea.sflag [#allocation8], %s2957
        %s2959 = sand.u32 %s1252, 1
        %s2960 = smul.addr %s2959, 8
        %s2961 = scalar_lea.vmem [#allocation7], %s2960
        // Predicated region
        $region125: #{tpu_custom_call.1} parent=123 // pred_check
          %p2962 = pneg %p1262
        $region126: #{tpu_custom_call.1} parent=123 // pred_check_branch
          %2964 = sbr.rel (%p2962) target = $region128
        $region127: #{tpu_custom_call.1} parent=123 // pred_region
          %s2966 = ssub.s32 128, 128
          %2967 = vsyncadd %s2958, %s2966
          %s2968 = smul.addr %s94, 2
          %s2969 = sadd.s32 %s95, %s2968
          %s2970 = smul.addr %s2969, 128
          %s2971 = scalar_lea.hbm %s61, %s2970
          %s2973 = sshll.u32 %s2961, 4
          %s2974 = int_to_ptr.vmem [resolvable:$true] %s2973
          %2976 = dma.vmem_to_hbm [thread:$0]  %s2974, 128, %s2971, %s2958
        $region128: #{tpu_custom_call.1} parent=123 // pred_fallthru
          _
      $region124: #{tpu_custom_call.1} parent=5 // pred_fallthru
        _
      %p2977 = scmp.le.s32.totalorder 2, %s85
      // Predicated region
      $region129: #{tpu_custom_call.1} parent=5 // pred_check
        %p2978 = pneg %p2977
      $region130: #{tpu_custom_call.1} parent=5 // pred_check_branch
        %2980 = sbr.rel (%p2978) target = $region132
      $region131: #{tpu_custom_call.1} parent=5 // pred_region
        %s2981 = ssub.s32 %s85, 2
        // Predicated region
        $region133: #{tpu_custom_call.1} parent=131 // pred_check
          %p2982 = pneg %p1268
        $region134: #{tpu_custom_call.1} parent=131 // pred_check_branch
          %2984 = sbr.rel (%p2982) target = $region136
        $region135: #{tpu_custom_call.1} parent=131 // pred_region
          %s2985 = sand.u32 %s1253, 1
          %s2986 = scalar_lea.sflag [#allocation8], %s2985
          %s2987 = sand.u32 %s1253, 1
          %s2988 = smul.addr %s2987, 8
          %s2989 = scalar_lea.vmem [#allocation7], %s2988
          %2990 = dma.done %s2986, 128
        $region136: #{tpu_custom_call.1} parent=131 // pred_fallthru
          _
      $region132: #{tpu_custom_call.1} parent=5 // pred_fallthru
        _
    $region6: #{tpu_custom_call.1} parent=1 // loop_footer
      %s89 = sadd.s32 1, %s85
    $region7: #{tpu_custom_call.1} parent=1 // loop_footer_branch
      %84 = sbr.rel target = $region3
    $region8: #{tpu_custom_call.1} parent=1 // loop_exit
      _
    %2991 = vsyncpa [#allocation8], 1
    %s2992 = scalar_lea.sflag [#allocation8], 1
    %2993 = vsyncpa %s2992, 1

</llo_original>
